<compile_context>
chip_gen: v6e
topology: v6e:2x2x1
jax: 0.10.0
libtpu: 0.0.40
codegen_flags: <defaults>
</compile_context>

<pallas_src>
from functools import partial

import jax
import jax.numpy as jnp
from jax.experimental import pallas as pl
from jax.experimental.pallas import tpu as pltpu


NOISE_DIM = 100
K_PAD = 128             # noise dim padded to a full lane width
OUT_DIM = 28 * 28       # 784
OUT_PAD = 896           # 7 * 128 -> lane-dense output slab (unmasked stores)
HIDDEN = (256, 512, 1024)
LEAKY_SLOPE = 0.2       # matches nn.LeakyReLU(0.2) in the PyTorch spec
MAX_BATCH_TILE = 256


def _generator_kernel(x_ref, w1_ref, b1_ref, w2_ref, b2_ref,
                      w3_ref, b3_ref, w4_ref, b4_ref, o_ref):
    """Fully fused 4-layer MLP: bf16 weights, f32 accumulate, f32 activations."""

    def linear(h, w_ref, b_ref):
        # Cast activation to bf16 only for the MXU operand; accumulate in f32.
        return jnp.dot(h.astype(jnp.bfloat16), w_ref[...],
                       preferred_element_type=jnp.float32) + b_ref[...]

    h = x_ref[...]                                        # (TM, 128) f32
    h = linear(h, w1_ref, b1_ref)
    h = jnp.where(h >= 0.0, h, LEAKY_SLOPE * h)           # LeakyReLU(0.2)
    h = linear(h, w2_ref, b2_ref)
    h = jnp.where(h >= 0.0, h, LEAKY_SLOPE * h)
    h = linear(h, w3_ref, b3_ref)
    h = jnp.where(h >= 0.0, h, LEAKY_SLOPE * h)
    h = linear(h, w4_ref, b4_ref)
    o_ref[...] = jnp.tanh(h).astype(o_ref.dtype)          # (TM, 896)


def init_generator_params(key, noise_dim=NOISE_DIM):
    """PyTorch nn.Linear default init: U(-1/sqrt(fan_in), 1/sqrt(fan_in)).

    Weights stored as (in_features, out_features) f32 (logical params).
    """
    dims = [noise_dim, *HIDDEN, OUT_DIM]
    params = []
    keys = jax.random.split(key, 2 * (len(dims) - 1))
    for i in range(len(dims) - 1):
        fan_in, fan_out = dims[i], dims[i + 1]
        bound = 1.0 / float(fan_in) ** 0.5
        w = jax.random.uniform(keys[2 * i], (fan_in, fan_out), jnp.float32,
                               -bound, bound)
        b = jax.random.uniform(keys[2 * i + 1], (fan_out,), jnp.float32,
                               -bound, bound)
        params.append((w, b))
    return params


def pack_generator_params(params):
    """Zero-pad to lane-friendly shapes and cast weights to bf16 (one-time)."""
    padded_in = [K_PAD, *HIDDEN]
    padded_out = [*HIDDEN, OUT_PAD]
    packed = []
    for (w, b), k_pad, n_pad in zip(params, padded_in, padded_out):
        k, n = w.shape
        w_p = jnp.zeros((k_pad, n_pad), jnp.float32).at[:k, :n].set(w)
        b_p = jnp.zeros((1, n_pad), jnp.float32).at[0, :n].set(b)
        packed.append((w_p.astype(jnp.bfloat16), b_p))
    return tuple(packed)


def _round_up(x, m):
    return (x + m - 1) // m * m


@jax.jit
def generator_forward(x, packed_params):
    """x: (batch, 100) f32  ->  (batch, 1, 28, 28) f32 in [-1, 1]."""
    m, k = x.shape
    assert k == NOISE_DIM, k
    tm = min(_round_up(m, 8), MAX_BATCH_TILE)      # batch tile (>=8, <=256)
    m_pad = _round_up(m, tm)
    x_p = jnp.zeros((m_pad, K_PAD), jnp.float32).at[:m, :k].set(x)

    (w1, b1), (w2, b2), (w3, b3), (w4, b4) = packed_params

    def resident(arr):
        # Full-array block, constant index_map -> stays resident across tiles.
        return pl.BlockSpec(arr.shape, lambda i: (0, 0))

    out = pl.pallas_call(
        _generator_kernel,
        out_shape=jax.ShapeDtypeStruct((m_pad, OUT_PAD), jnp.float32),
        grid_spec=pltpu.PrefetchScalarGridSpec(
            num_scalar_prefetch=0,
            grid=(m_pad // tm,),
            in_specs=[
                pl.BlockSpec((tm, K_PAD), lambda i: (i, 0)),
                resident(w1), resident(b1),
                resident(w2), resident(b2),
                resident(w3), resident(b3),
                resident(w4), resident(b4),
            ],
            out_specs=pl.BlockSpec((tm, OUT_PAD), lambda i: (i, 0)),
        ),
        compiler_params=pltpu.CompilerParams(
            dimension_semantics=("parallel",)),
    )(x_p, w1, b1, w2, b2, w3, b3, w4, b4)

    return out[:m, :OUT_DIM].reshape(m, 1, 28, 28)


def _reference_forward(x, packed_params):
    """Pure-JAX reference using the same bf16 weights / f32 accumulation."""
    m = x.shape[0]
    h = jnp.zeros((m, K_PAD), jnp.float32).at[:, :NOISE_DIM].set(x)
    for i, (w, b) in enumerate(packed_params):
        h = jnp.dot(h.astype(jnp.bfloat16), w,
                    preferred_element_type=jnp.float32) + b
        if i < 3:
            h = jnp.where(h >= 0.0, h, LEAKY_SLOPE * h)
        else:
            h = jnp.tanh(h)
    return h[:, :OUT_DIM].reshape(m, 1, 28, 28)


if __name__ == "__main__":
    key = jax.random.PRNGKey(0)
    pkey, xkey = jax.random.split(key)

    batch = 8
    params = init_generator_params(pkey, noise_dim=NOISE_DIM)
    packed = pack_generator_params(params)
    x = jax.random.normal(xkey, (batch, NOISE_DIM), jnp.float32)

    out = generator_forward(x, packed)
    jax.block_until_ready(out)

    assert out.shape == (batch, 1, 28, 28), out.shape
    ref = _reference_forward(x, packed)
    max_err = float(jnp.max(jnp.abs(out - ref)))
    assert max_err < 1e-3, max_err

    print("KERNEL_OK")
</pallas_src>

<mosaic_0001>
module attributes {stable_mosaic.version = 11 : i64} {
  func.func @_generator_kernel(%arg0: i32, %arg1: memref<8x128xf32, #tpu.memory_space<vmem>>, %arg2: memref<128x256xbf16, #tpu.memory_space<vmem>>, %arg3: memref<1x256xf32, #tpu.memory_space<vmem>>, %arg4: memref<256x512xbf16, #tpu.memory_space<vmem>>, %arg5: memref<1x512xf32, #tpu.memory_space<vmem>>, %arg6: memref<512x1024xbf16, #tpu.memory_space<vmem>>, %arg7: memref<1x1024xf32, #tpu.memory_space<vmem>>, %arg8: memref<1024x896xbf16, #tpu.memory_space<vmem>>, %arg9: memref<1x896xf32, #tpu.memory_space<vmem>>, %arg10: memref<8x896xf32, #tpu.memory_space<vmem>>) attributes {dimension_semantics = [#tpu.dimension_semantics<parallel>], iteration_bounds = array<i64: 1>, scalar_prefetch = 0 : i64, scratch_operands = 0 : i64, tpu.core_type = #tpu.core_type<tc>, window_params = [{transform_indices = @transform_0, window_bounds = array<i64: 8, 128>}, {pipeline_mode = #tpu.pipeline_mode<synchronous>, transform_indices = @transform_1, window_bounds = array<i64: 128, 256>}, {pipeline_mode = #tpu.pipeline_mode<synchronous>, transform_indices = @transform_2, window_bounds = array<i64: 1, 256>}, {pipeline_mode = #tpu.pipeline_mode<synchronous>, transform_indices = @transform_3, window_bounds = array<i64: 256, 512>}, {pipeline_mode = #tpu.pipeline_mode<synchronous>, transform_indices = @transform_4, window_bounds = array<i64: 1, 512>}, {pipeline_mode = #tpu.pipeline_mode<synchronous>, transform_indices = @transform_5, window_bounds = array<i64: 512, 1024>}, {pipeline_mode = #tpu.pipeline_mode<synchronous>, transform_indices = @transform_6, window_bounds = array<i64: 1, 1024>}, {pipeline_mode = #tpu.pipeline_mode<synchronous>, transform_indices = @transform_7, window_bounds = array<i64: 1024, 896>}, {pipeline_mode = #tpu.pipeline_mode<synchronous>, transform_indices = @transform_8, window_bounds = array<i64: 1, 896>}, {transform_indices = @transform_9, window_bounds = array<i64: 8, 896>}]} {
    %c0 = arith.constant 0 : index
    %c0_0 = arith.constant 0 : index
    %0 = vector.load %arg1[%c0, %c0_0] : memref<8x128xf32, #tpu.memory_space<vmem>>, vector<8x128xf32>
    %1 = arith.truncf %0 : vector<8x128xf32> to vector<8x128xbf16>
    %c0_1 = arith.constant 0 : index
    %c0_2 = arith.constant 0 : index
    %2 = vector.load %arg2[%c0_1, %c0_2] : memref<128x256xbf16, #tpu.memory_space<vmem>>, vector<128x256xbf16>
    %cst = arith.constant dense<0.000000e+00> : vector<8x256xf32>
    %3 = tpu.matmul %1, %2, %cst {dimension_numbers = #tpu.dot_dimension_numbers<[1], [0], [0], [1], [0, 0, 1, 1], [], []>} : vector<8x128xbf16>, vector<128x256xbf16>, vector<8x256xf32> -> vector<8x256xf32>
    %c0_3 = arith.constant 0 : index
    %c0_4 = arith.constant 0 : index
    %4 = vector.load %arg3[%c0_3, %c0_4] : memref<1x256xf32, #tpu.memory_space<vmem>>, vector<1x256xf32>
    %5 = vector.broadcast %4 : vector<1x256xf32> to vector<8x256xf32>
    %6 = arith.addf %3, %5 : vector<8x256xf32>
    %cst_5 = arith.constant 0.000000e+00 : f32
    %7 = vector.broadcast %cst_5 : f32 to vector<8x256xf32>
    %8 = arith.cmpf oge, %6, %7 : vector<8x256xf32>
    %cst_6 = arith.constant 2.000000e-01 : f32
    %9 = vector.broadcast %cst_6 : f32 to vector<8x256xf32>
    %10 = arith.mulf %9, %6 : vector<8x256xf32>
    %11 = arith.select %8, %6, %10 : vector<8x256xi1>, vector<8x256xf32>
    %12 = arith.truncf %11 : vector<8x256xf32> to vector<8x256xbf16>
    %c0_7 = arith.constant 0 : index
    %c0_8 = arith.constant 0 : index
    %13 = vector.load %arg4[%c0_7, %c0_8] : memref<256x512xbf16, #tpu.memory_space<vmem>>, vector<256x512xbf16>
    %cst_9 = arith.constant dense<0.000000e+00> : vector<8x512xf32>
    %14 = tpu.matmul %12, %13, %cst_9 {dimension_numbers = #tpu.dot_dimension_numbers<[1], [0], [0], [1], [0, 0, 1, 1], [], []>} : vector<8x256xbf16>, vector<256x512xbf16>, vector<8x512xf32> -> vector<8x512xf32>
    %c0_10 = arith.constant 0 : index
    %c0_11 = arith.constant 0 : index
    %15 = vector.load %arg5[%c0_10, %c0_11] : memref<1x512xf32, #tpu.memory_space<vmem>>, vector<1x512xf32>
    %16 = vector.broadcast %15 : vector<1x512xf32> to vector<8x512xf32>
    %17 = arith.addf %14, %16 : vector<8x512xf32>
    %cst_12 = arith.constant 0.000000e+00 : f32
    %18 = vector.broadcast %cst_12 : f32 to vector<8x512xf32>
    %19 = arith.cmpf oge, %17, %18 : vector<8x512xf32>
    %cst_13 = arith.constant 2.000000e-01 : f32
    %20 = vector.broadcast %cst_13 : f32 to vector<8x512xf32>
    %21 = arith.mulf %20, %17 : vector<8x512xf32>
    %22 = arith.select %19, %17, %21 : vector<8x512xi1>, vector<8x512xf32>
    %23 = arith.truncf %22 : vector<8x512xf32> to vector<8x512xbf16>
    %c0_14 = arith.constant 0 : index
    %c0_15 = arith.constant 0 : index
    %24 = vector.load %arg6[%c0_14, %c0_15] : memref<512x1024xbf16, #tpu.memory_space<vmem>>, vector<512x1024xbf16>
    %cst_16 = arith.constant dense<0.000000e+00> : vector<8x1024xf32>
    %25 = tpu.matmul %23, %24, %cst_16 {dimension_numbers = #tpu.dot_dimension_numbers<[1], [0], [0], [1], [0, 0, 1, 1], [], []>} : vector<8x512xbf16>, vector<512x1024xbf16>, vector<8x1024xf32> -> vector<8x1024xf32>
    %c0_17 = arith.constant 0 : index
    %c0_18 = arith.constant 0 : index
    %26 = vector.load %arg7[%c0_17, %c0_18] : memref<1x1024xf32, #tpu.memory_space<vmem>>, vector<1x1024xf32>
    %27 = vector.broadcast %26 : vector<1x1024xf32> to vector<8x1024xf32>
    %28 = arith.addf %25, %27 : vector<8x1024xf32>
    %cst_19 = arith.constant 0.000000e+00 : f32
    %29 = vector.broadcast %cst_19 : f32 to vector<8x1024xf32>
    %30 = arith.cmpf oge, %28, %29 : vector<8x1024xf32>
    %cst_20 = arith.constant 2.000000e-01 : f32
    %31 = vector.broadcast %cst_20 : f32 to vector<8x1024xf32>
    %32 = arith.mulf %31, %28 : vector<8x1024xf32>
    %33 = arith.select %30, %28, %32 : vector<8x1024xi1>, vector<8x1024xf32>
    %34 = arith.truncf %33 : vector<8x1024xf32> to vector<8x1024xbf16>
    %c0_21 = arith.constant 0 : index
    %c0_22 = arith.constant 0 : index
    %35 = vector.load %arg8[%c0_21, %c0_22] : memref<1024x896xbf16, #tpu.memory_space<vmem>>, vector<1024x896xbf16>
    %cst_23 = arith.constant dense<0.000000e+00> : vector<8x896xf32>
    %36 = tpu.matmul %34, %35, %cst_23 {dimension_numbers = #tpu.dot_dimension_numbers<[1], [0], [0], [1], [0, 0, 1, 1], [], []>} : vector<8x1024xbf16>, vector<1024x896xbf16>, vector<8x896xf32> -> vector<8x896xf32>
    %c0_24 = arith.constant 0 : index
    %c0_25 = arith.constant 0 : index
    %37 = vector.load %arg9[%c0_24, %c0_25] : memref<1x896xf32, #tpu.memory_space<vmem>>, vector<1x896xf32>
    %38 = vector.broadcast %37 : vector<1x896xf32> to vector<8x896xf32>
    %39 = arith.addf %36, %38 : vector<8x896xf32>
    %40 = math.tanh %39 : vector<8x896xf32>
    %c0_26 = arith.constant 0 : index
    %c0_27 = arith.constant 0 : index
    %41 = vector.load %arg10[%c0_26, %c0_27] : memref<8x896xf32, #tpu.memory_space<vmem>>, vector<8x896xf32>
    tpu.vector_store %arg10[%c0_26, %c0_27], %40 {strides = array<i32>} : memref<8x896xf32, #tpu.memory_space<vmem>>, vector<8x896xf32>,
    return
  }
  func.func @transform_0(%arg0: i32) -> (i32, i32) {
    %c0_i32 = arith.constant 0 : i32
    %c0_i32_0 = arith.constant 0 : i32
    return %arg0, %c0_i32 : i32, i32
  }
  func.func @transform_1(%arg0: i32) -> (i32, i32) {
    %c0_i32 = arith.constant 0 : i32
    %c0_i32_0 = arith.constant 0 : i32
    %c0_i32_1 = arith.constant 0 : i32
    return %c0_i32, %c0_i32_0 : i32, i32
  }
  func.func @transform_2(%arg0: i32) -> (i32, i32) {
    %c0_i32 = arith.constant 0 : i32
    %c0_i32_0 = arith.constant 0 : i32
    %c0_i32_1 = arith.constant 0 : i32
    return %c0_i32, %c0_i32_0 : i32, i32
  }
  func.func @transform_3(%arg0: i32) -> (i32, i32) {
    %c0_i32 = arith.constant 0 : i32
    %c0_i32_0 = arith.constant 0 : i32
    %c0_i32_1 = arith.constant 0 : i32
    return %c0_i32, %c0_i32_0 : i32, i32
  }
  func.func @transform_4(%arg0: i32) -> (i32, i32) {
    %c0_i32 = arith.constant 0 : i32
    %c0_i32_0 = arith.constant 0 : i32
    %c0_i32_1 = arith.constant 0 : i32
    return %c0_i32, %c0_i32_0 : i32, i32
  }
  func.func @transform_5(%arg0: i32) -> (i32, i32) {
    %c0_i32 = arith.constant 0 : i32
    %c0_i32_0 = arith.constant 0 : i32
    %c0_i32_1 = arith.constant 0 : i32
    return %c0_i32, %c0_i32_0 : i32, i32
  }
  func.func @transform_6(%arg0: i32) -> (i32, i32) {
    %c0_i32 = arith.constant 0 : i32
    %c0_i32_0 = arith.constant 0 : i32
    %c0_i32_1 = arith.constant 0 : i32
    return %c0_i32, %c0_i32_0 : i32, i32
  }
  func.func @transform_7(%arg0: i32) -> (i32, i32) {
    %c0_i32 = arith.constant 0 : i32
    %c0_i32_0 = arith.constant 0 : i32
    %c0_i32_1 = arith.constant 0 : i32
    return %c0_i32, %c0_i32_0 : i32, i32
  }
  func.func @transform_8(%arg0: i32) -> (i32, i32) {
    %c0_i32 = arith.constant 0 : i32
    %c0_i32_0 = arith.constant 0 : i32
    %c0_i32_1 = arith.constant 0 : i32
    return %c0_i32, %c0_i32_0 : i32, i32
  }
  func.func @transform_9(%arg0: i32) -> (i32, i32) {
    %c0_i32 = arith.constant 0 : i32
    %c0_i32_0 = arith.constant 0 : i32
    return %arg0, %c0_i32 : i32, i32
  }
}

</mosaic_0001>

<llo_original>
// kernel: generator_forward.1
$region0: #{generator_forward.1}
  #allocation0 [shape = 'u32[]', space=smem, size = 0x4, offset = 0x4, fixed_abs, tag = 'smem constant byte address 0x4 - core index']
  #allocation1 [shape = 'u32[144,128]{1,0:T(1,128)}', space=vmem, size = 0x12000, scoped, tag = 'internal scratch']
  %s0 = inlined_call_operand.vmem [shape: f32[8,128], index: 0, kind: input, shape index: {}]
  %s1 = inlined_call_operand.hbm [shape: bf16[128,256], index: 1, kind: input, shape index: {}]
  %s2 = inlined_call_operand.hbm [shape: f32[1,256], index: 2, kind: input, shape index: {}]
  %s3 = inlined_call_operand.hbm [shape: bf16[256,512], index: 3, kind: input, shape index: {}]
  %s4 = inlined_call_operand.hbm [shape: f32[1,512], index: 4, kind: input, shape index: {}]
  %s5 = inlined_call_operand.hbm [shape: bf16[512,1024], index: 5, kind: input, shape index: {}]
  %s6 = inlined_call_operand.hbm [shape: f32[1,1024], index: 6, kind: input, shape index: {}]
  %s7 = inlined_call_operand.hbm [shape: bf16[1024,896], index: 7, kind: input, shape index: {}]
  %s8 = inlined_call_operand.hbm [shape: f32[1,896], index: 8, kind: input, shape index: {}]
  %s9 = inlined_call_operand.vmem [shape: f32[8,896], index: 9, kind: output, shape index: {}]
  %s10 = sld [smem:[#allocation0]]
  $region78: #{generator_forward.1} parent=0
    _
  %s12 = ssub.s32 1, %s10
  %s13 = scalar_select 0, %s12, %s10
  $region1: #{generator_forward.1} parent=0
    #allocation2 [shape = 'u8[65536]{0}', space=vmem, size = 0x10000, scoped, tag = 'input window, operand 1, single buffered']
    #allocation3 [shape = 's32[1]{0}', space=sflag, size = 0x4, scoped, tag = 'scoped memory for generator_forward.1']
    #allocation4 [shape = 'u8[1024]{0}', space=vmem, size = 0x400, scoped, tag = 'input window, operand 2, single buffered']
    #allocation5 [shape = 's32[1]{0}', space=sflag, size = 0x4, scoped, tag = 'scoped memory for generator_forward.1']
    #allocation6 [shape = 'u8[262144]{0}', space=vmem, size = 0x40000, scoped, tag = 'input window, operand 3, single buffered']
    #allocation7 [shape = 'u8[2048]{0}', space=vmem, size = 0x800, scoped, tag = 'input window, operand 4, single buffered']
    #allocation8 [shape = 's32[1]{0}', space=sflag, size = 0x4, scoped, tag = 'scoped memory for generator_forward.1']
    #allocation9 [shape = 'u8[1048576]{0}', space=vmem, size = 0x100000, scoped, tag = 'input window, operand 5, single buffered']
    #allocation10 [shape = 'u8[4096]{0}', space=vmem, size = 0x1000, scoped, tag = 'input window, operand 6, single buffered']
    #allocation11 [shape = 's32[1]{0}', space=sflag, size = 0x4, scoped, tag = 'scoped memory for generator_forward.1']
    #allocation12 [shape = 'u8[1835008]{0}', space=vmem, size = 0x1c0000, scoped, tag = 'input window, operand 7, single buffered']
    #allocation13 [shape = 'u8[3584]{0}', space=vmem, size = 0x1000, scoped, tag = 'input window, operand 8, single buffered']
    #allocation14 [shape = 's32[1]{0}', space=sflag, size = 0x4, scoped, tag = 'scoped memory for generator_forward.1']
    %14 = vsyncpa [#allocation3], 0
    %15 = vsyncpa [#allocation5], 0
    %16 = vsyncpa [#allocation8], 0
    %17 = vsyncpa [#allocation11], 0
    %18 = vsyncpa [#allocation14], 0
    // Predicated region
    $region2: #{generator_forward.1} parent=1 // pred_check
      _
    $region3: #{generator_forward.1} parent=1 // pred_check_branch
      %20 = sbr.rel (0) target = $region5
    $region4: #{generator_forward.1} parent=1 // pred_region
      _
    $region5: #{generator_forward.1} parent=1 // pred_fallthru
      _
    // Predicated region
    $region6: #{generator_forward.1} parent=1 // pred_check
      _
    $region7: #{generator_forward.1} parent=1 // pred_check_branch
      %22 = sbr.rel (0) target = $region9
    $region8: #{generator_forward.1} parent=1 // pred_region
      %s24 = ssub.s32 2048, 2048
      %25 = vsyncadd [#allocation3], %s24
      %s26 = sshll.u32 [#allocation2], 4
      %s27 = int_to_ptr.vmem [resolvable:$true] %s26
      %32 = dma.hbm_to_vmem [thread:$0]  %s1, 2048, %s27, [#allocation3], 128, 128, 8
    $region9: #{generator_forward.1} parent=1 // pred_fallthru
      _
    // Predicated region
    $region10: #{generator_forward.1} parent=1 // pred_check
      _
    $region11: #{generator_forward.1} parent=1 // pred_check_branch
      %34 = sbr.rel (0) target = $region13
    $region12: #{generator_forward.1} parent=1 // pred_region
      %s36 = ssub.s32 32, 32
      %37 = vsyncadd [#allocation5], %s36
      %s39 = sshll.u32 [#allocation4], 4
      %s40 = int_to_ptr.vmem [resolvable:$true] %s39
      %42 = dma.hbm_to_vmem [thread:$0]  %s2, 32, %s40, [#allocation5]
    $region13: #{generator_forward.1} parent=1 // pred_fallthru
      _
    // Predicated region
    $region14: #{generator_forward.1} parent=1 // pred_check
      _
    $region15: #{generator_forward.1} parent=1 // pred_check_branch
      %44 = sbr.rel (0) target = $region17
    $region16: #{generator_forward.1} parent=1 // pred_region
      %s46 = ssub.s32 8192, 8192
      %47 = vsyncadd [#allocation5], %s46
      %s48 = sshll.u32 [#allocation6], 4
      %s49 = int_to_ptr.vmem [resolvable:$true] %s48
      %54 = dma.hbm_to_vmem [thread:$0]  %s3, 8192, %s49, [#allocation5], 256, 256, 16
    $region17: #{generator_forward.1} parent=1 // pred_fallthru
      _
    // Predicated region
    $region18: #{generator_forward.1} parent=1 // pred_check
      _
    $region19: #{generator_forward.1} parent=1 // pred_check_branch
      %56 = sbr.rel (0) target = $region21
    $region20: #{generator_forward.1} parent=1 // pred_region
      %s58 = ssub.s32 64, 64
      %59 = vsyncadd [#allocation8], %s58
      %s61 = sshll.u32 [#allocation7], 4
      %s62 = int_to_ptr.vmem [resolvable:$true] %s61
      %64 = dma.hbm_to_vmem [thread:$0]  %s4, 64, %s62, [#allocation8]
    $region21: #{generator_forward.1} parent=1 // pred_fallthru
      _
    // Predicated region
    $region22: #{generator_forward.1} parent=1 // pred_check
      _
    $region23: #{generator_forward.1} parent=1 // pred_check_branch
      %66 = sbr.rel (0) target = $region25
    $region24: #{generator_forward.1} parent=1 // pred_region
      %s68 = ssub.s32 32768, 32768
      %69 = vsyncadd [#allocation8], %s68
      %s70 = sshll.u32 [#allocation9], 4
      %s71 = int_to_ptr.vmem [resolvable:$true] %s70
      %76 = dma.hbm_to_vmem [thread:$0]  %s5, 32768, %s71, [#allocation8], 512, 512, 32
    $region25: #{generator_forward.1} parent=1 // pred_fallthru
      _
    // Predicated region
    $region26: #{generator_forward.1} parent=1 // pred_check
      _
    $region27: #{generator_forward.1} parent=1 // pred_check_branch
      %78 = sbr.rel (0) target = $region29
    $region28: #{generator_forward.1} parent=1 // pred_region
      %s80 = ssub.s32 128, 128
      %81 = vsyncadd [#allocation11], %s80
      %s83 = sshll.u32 [#allocation10], 4
      %s84 = int_to_ptr.vmem [resolvable:$true] %s83
      %86 = dma.hbm_to_vmem [thread:$0]  %s6, 128, %s84, [#allocation11]
    $region29: #{generator_forward.1} parent=1 // pred_fallthru
      _
    // Predicated region
    $region30: #{generator_forward.1} parent=1 // pred_check
      _
    $region31: #{generator_forward.1} parent=1 // pred_check_branch
      %88 = sbr.rel (0) target = $region33
    $region32: #{generator_forward.1} parent=1 // pred_region
      %s90 = ssub.s32 57344, 57344
      %91 = vsyncadd [#allocation11], %s90
      %s92 = sshll.u32 [#allocation12], 4
      %s93 = int_to_ptr.vmem [resolvable:$true] %s92
      %98 = dma.hbm_to_vmem [thread:$0]  %s7, 57344, %s93, [#allocation11], 448, 448, 28
    $region33: #{generator_forward.1} parent=1 // pred_fallthru
      _
    // Predicated region
    $region34: #{generator_forward.1} parent=1 // pred_check
      _
    $region35: #{generator_forward.1} parent=1 // pred_check_branch
      %100 = sbr.rel (0) target = $region37
    $region36: #{generator_forward.1} parent=1 // pred_region
      %s102 = ssub.s32 112, 112
      %103 = vsyncadd [#allocation14], %s102
      %s105 = sshll.u32 [#allocation13], 4
      %s106 = int_to_ptr.vmem [resolvable:$true] %s105
      %108 = dma.hbm_to_vmem [thread:$0]  %s8, 112, %s106, [#allocation14]
    $region37: #{generator_forward.1} parent=1 // pred_fallthru
      _
    // Predicated region
    $region38: #{generator_forward.1} parent=1 // pred_check
      _
    $region39: #{generator_forward.1} parent=1 // pred_check_branch
      %110 = sbr.rel (0) target = $region41
    $region40: #{generator_forward.1} parent=1 // pred_region
      %111 = dma.done [#allocation3], 2048
    $region41: #{generator_forward.1} parent=1 // pred_fallthru
      _
    // Predicated region
    $region42: #{generator_forward.1} parent=1 // pred_check
      _
    $region43: #{generator_forward.1} parent=1 // pred_check_branch
      %113 = sbr.rel (0) target = $region45
    $region44: #{generator_forward.1} parent=1 // pred_region
      %114 = dma.done [#allocation5], 32
    $region45: #{generator_forward.1} parent=1 // pred_fallthru
      _
    // Predicated region
    $region46: #{generator_forward.1} parent=1 // pred_check
      _
    $region47: #{generator_forward.1} parent=1 // pred_check_branch
      %116 = sbr.rel (0) target = $region49
    $region48: #{generator_forward.1} parent=1 // pred_region
      %117 = dma.done [#allocation5], 8192
    $region49: #{generator_forward.1} parent=1 // pred_fallthru
      _
    // Predicated region
    $region50: #{generator_forward.1} parent=1 // pred_check
      _
    $region51: #{generator_forward.1} parent=1 // pred_check_branch
      %119 = sbr.rel (0) target = $region53
    $region52: #{generator_forward.1} parent=1 // pred_region
      %120 = dma.done [#allocation8], 64
    $region53: #{generator_forward.1} parent=1 // pred_fallthru
      _
    // Predicated region
    $region54: #{generator_forward.1} parent=1 // pred_check
      _
    $region55: #{generator_forward.1} parent=1 // pred_check_branch
      %122 = sbr.rel (0) target = $region57
    $region56: #{generator_forward.1} parent=1 // pred_region
      %123 = dma.done [#allocation8], 32768
    $region57: #{generator_forward.1} parent=1 // pred_fallthru
      _
    // Predicated region
    $region58: #{generator_forward.1} parent=1 // pred_check
      _
    $region59: #{generator_forward.1} parent=1 // pred_check_branch
      %125 = sbr.rel (0) target = $region61
    $region60: #{generator_forward.1} parent=1 // pred_region
      %126 = dma.done [#allocation11], 128
    $region61: #{generator_forward.1} parent=1 // pred_fallthru
      _
    // Predicated region
    $region62: #{generator_forward.1} parent=1 // pred_check
      _
    $region63: #{generator_forward.1} parent=1 // pred_check_branch
      %128 = sbr.rel (0) target = $region65
    $region64: #{generator_forward.1} parent=1 // pred_region
      %129 = dma.done [#allocation11], 57344
    $region65: #{generator_forward.1} parent=1 // pred_fallthru
      _
    // Predicated region
    $region66: #{generator_forward.1} parent=1 // pred_check
      _
    $region67: #{generator_forward.1} parent=1 // pred_check_branch
      %131 = sbr.rel (0) target = $region69
    $region68: #{generator_forward.1} parent=1 // pred_region
      %132 = dma.done [#allocation14], 112
    $region69: #{generator_forward.1} parent=1 // pred_fallthru
      _
    %v134 = vld [vmem:[%s0] sm:$0xff]
    %v135 = vpack.c.bf16 %v134, %v134
    %v136 = vld [vmem:[#allocation2] sm:$0xff]
    %v137 = vld [vmem:[#allocation2 + $0x8] sm:$0xff]
    %v138 = vld [vmem:[#allocation2 + $0x10] sm:$0xff]
    %v139 = vld [vmem:[#allocation2 + $0x18] sm:$0xff]
    %v140 = vld [vmem:[#allocation2 + $0x20] sm:$0xff]
    %v141 = vld [vmem:[#allocation2 + $0x28] sm:$0xff]
    %v142 = vld [vmem:[#allocation2 + $0x30] sm:$0xff]
    %v143 = vld [vmem:[#allocation2 + $0x38] sm:$0xff]
    %v144 = vld [vmem:[#allocation2 + $0x40] sm:$0xff]
    %v145 = vld [vmem:[#allocation2 + $0x48] sm:$0xff]
    %v146 = vld [vmem:[#allocation2 + $0x50] sm:$0xff]
    %v147 = vld [vmem:[#allocation2 + $0x58] sm:$0xff]
    %v148 = vld [vmem:[#allocation2 + $0x60] sm:$0xff]
    %v149 = vld [vmem:[#allocation2 + $0x68] sm:$0xff]
    %v150 = vld [vmem:[#allocation2 + $0x70] sm:$0xff]
    %v151 = vld [vmem:[#allocation2 + $0x78] sm:$0xff]
    %v152 = vld [vmem:[#allocation4] sm:$0x3]
    %v154 = vlaneseq
    %v155 = vshrl.u32 %v154, 7
    %v156 = vsub.s32 0, %v155
    %v157 = vrot.slane %v152, %v156
    %v158 = vlaneseq
    %v159 = vshrl.u32 %v158, 7
    %v160 = vsub.s32 1, %v159
    %v161 = vrot.slane %v152, %v160
    %v180 = vunpack.c.l.b16 %v136
    %v181 = vunpack.c.h.b16 %v136
    %v182 = vunpack.c.l.b16 %v137
    %v183 = vunpack.c.h.b16 %v137
    %v184 = vunpack.c.l.b16 %v138
    %v185 = vunpack.c.h.b16 %v138
    %v186 = vunpack.c.l.b16 %v139
    %v187 = vunpack.c.h.b16 %v139
    %v188 = vunpack.c.l.b16 %v140
    %v189 = vunpack.c.h.b16 %v140
    %v190 = vunpack.c.l.b16 %v141
    %v191 = vunpack.c.h.b16 %v141
    %v192 = vunpack.c.l.b16 %v142
    %v193 = vunpack.c.h.b16 %v142
    %v194 = vunpack.c.l.b16 %v143
    %v195 = vunpack.c.h.b16 %v143
    %v196 = vunpack.c.l.b16 %v144
    %v197 = vunpack.c.h.b16 %v144
    %v198 = vunpack.c.l.b16 %v145
    %v199 = vunpack.c.h.b16 %v145
    %v200 = vunpack.c.l.b16 %v146
    %v201 = vunpack.c.h.b16 %v146
    %v202 = vunpack.c.l.b16 %v147
    %v203 = vunpack.c.h.b16 %v147
    %v204 = vunpack.c.l.b16 %v148
    %v205 = vunpack.c.h.b16 %v148
    %v206 = vunpack.c.l.b16 %v149
    %v207 = vunpack.c.h.b16 %v149
    %v208 = vunpack.c.l.b16 %v150
    %v209 = vunpack.c.h.b16 %v150
    %v210 = vunpack.c.l.b16 %v151
    %v211 = vunpack.c.h.b16 %v151
    %v212 = vpack.c.b16 %v182, %v180
    %v213 = vpack.c.b16 %v183, %v181
    %v214 = vpack.c.b16 %v186, %v184
    %v215 = vpack.c.b16 %v187, %v185
    %v216 = vpack.c.b16 %v190, %v188
    %v217 = vpack.c.b16 %v191, %v189
    %v218 = vpack.c.b16 %v194, %v192
    %v219 = vpack.c.b16 %v195, %v193
    %v220 = vpack.c.b16 %v198, %v196
    %v221 = vpack.c.b16 %v199, %v197
    %v222 = vpack.c.b16 %v202, %v200
    %v223 = vpack.c.b16 %v203, %v201
    %v224 = vpack.c.b16 %v206, %v204
    %v225 = vpack.c.b16 %v207, %v205
    %v226 = vpack.c.b16 %v210, %v208
    %v227 = vpack.c.b16 %v211, %v209
    %244 = vmatprep.subr.bf16.mxu0 %v227
    %245 = vmatpush1.bf16.msra.mxu0 %v226
    %246 = vmatprep.subr.bf16.mxu0 %v225
    %247 = vmatpush1.bf16.msra.mxu0 %v224
    %248 = vmatprep.subr.bf16.mxu0 %v223
    %249 = vmatpush1.bf16.msra.mxu0 %v222
    %250 = vmatprep.subr.bf16.mxu0 %v221
    %251 = vmatpush1.bf16.msra.mxu0 %v220
    %252 = vmatprep.subr.bf16.mxu0 %v219
    %253 = vmatpush1.bf16.msra.mxu0 %v218
    %254 = vmatprep.subr.bf16.mxu0 %v217
    %255 = vmatpush1.bf16.msra.mxu0 %v216
    %256 = vmatprep.subr.bf16.mxu0 %v215
    %257 = vmatpush1.bf16.msra.mxu0 %v214
    %258 = vmatprep.subr.bf16.mxu0 %v213
    %259 = vmatpush1.bf16.msra.mxu0 %v212
    %260 = vmatprep.subr.bf16.mxu0 0
    %261 = vmatpush2.bf16.msra.mxu0 0
    %262 = vmatprep.subr.bf16.mxu0 0
    %263 = vmatpush2.bf16.msra.mxu0 0
    %264 = vmatprep.subr.bf16.mxu0 0
    %265 = vmatpush2.bf16.msra.mxu0 0
    %266 = vmatprep.subr.bf16.mxu0 0
    %267 = vmatpush2.bf16.msra.mxu0 0
    %268 = vmatprep.subr.bf16.mxu0 0
    %269 = vmatpush2.bf16.msra.mxu0 0
    %270 = vmatprep.subr.bf16.mxu0 0
    %271 = vmatpush2.bf16.msra.mxu0 0
    %272 = vmatprep.subr.bf16.mxu0 0
    %273 = vmatpush2.bf16.msra.mxu0 0
    %274 = vmatprep.subr.bf16.mxu0 0
    %275 = vmatpush2.bf16.msra.mxu0 0
    %276 = vmatprep.mubr.bf16.mxu0 0
    %277 = vmatmul.mubr.bf16.gmra.mxu0 %v135
    %v278 = vpop.f32.mrf.mxu0
    %v279 = vadd.f32 %v157, %v278
    %v280 = vpop.f32.mrf.mxu0
    %v281 = vadd.f32 %v161, %v280
    %v282 = vpop.f32.mrf.mxu0
    %v283 = vpop.f32.mrf.mxu0
    %284 = vdwg.mxu0
    %vm285 = vcmp.ge.f32.partialorder %v279, 0.0
    %vm286 = vcmp.ge.f32.partialorder %v281, 0.0
    %v287 = vmul.f32 %v279, 0.2
    %v288 = vmul.f32 %v281, 0.2
    %v289 = vsel %vm285, %v279, %v287
    %v290 = vsel %vm286, %v281, %v288
    %v291 = vpack.c.bf16 %v289, %v289
    %v292 = vpack.c.bf16 %v290, %v290
    %v293 = vld [vmem:[#allocation6] sm:$0xff]
    %v294 = vld [vmem:[#allocation6 + $0x8] sm:$0xff]
    %v295 = vld [vmem:[#allocation6 + $0x10] sm:$0xff]
    %v296 = vld [vmem:[#allocation6 + $0x18] sm:$0xff]
    %v297 = vld [vmem:[#allocation6 + $0x20] sm:$0xff]
    %v298 = vld [vmem:[#allocation6 + $0x28] sm:$0xff]
    %v299 = vld [vmem:[#allocation6 + $0x30] sm:$0xff]
    %v300 = vld [vmem:[#allocation6 + $0x38] sm:$0xff]
    %v301 = vld [vmem:[#allocation6 + $0x40] sm:$0xff]
    %v302 = vld [vmem:[#allocation6 + $0x48] sm:$0xff]
    %v303 = vld [vmem:[#allocation6 + $0x50] sm:$0xff]
    %v304 = vld [vmem:[#allocation6 + $0x58] sm:$0xff]
    %v305 = vld [vmem:[#allocation6 + $0x60] sm:$0xff]
    %v306 = vld [vmem:[#allocation6 + $0x68] sm:$0xff]
    %v307 = vld [vmem:[#allocation6 + $0x70] sm:$0xff]
    %v308 = vld [vmem:[#allocation6 + $0x78] sm:$0xff]
    %v309 = vld [vmem:[#allocation6 + $0x80] sm:$0xff]
    %v310 = vld [vmem:[#allocation6 + $0x88] sm:$0xff]
    %v311 = vld [vmem:[#allocation6 + $0x90] sm:$0xff]
    %v312 = vld [vmem:[#allocation6 + $0x98] sm:$0xff]
    %v313 = vld [vmem:[#allocation6 + $0xa0] sm:$0xff]
    %v314 = vld [vmem:[#allocation6 + $0xa8] sm:$0xff]
    %v315 = vld [vmem:[#allocation6 + $0xb0] sm:$0xff]
    %v316 = vld [vmem:[#allocation6 + $0xb8] sm:$0xff]
    %v317 = vld [vmem:[#allocation6 + $0xc0] sm:$0xff]
    %v318 = vld [vmem:[#allocation6 + $0xc8] sm:$0xff]
    %v319 = vld [vmem:[#allocation6 + $0xd0] sm:$0xff]
    %v320 = vld [vmem:[#allocation6 + $0xd8] sm:$0xff]
    %v321 = vld [vmem:[#allocation6 + $0xe0] sm:$0xff]
    %v322 = vld [vmem:[#allocation6 + $0xe8] sm:$0xff]
    %v323 = vld [vmem:[#allocation6 + $0xf0] sm:$0xff]
    %v324 = vld [vmem:[#allocation6 + $0xf8] sm:$0xff]
    %v325 = vld [vmem:[#allocation6 + $0x100] sm:$0xff]
    %v326 = vld [vmem:[#allocation6 + $0x108] sm:$0xff]
    %v327 = vld [vmem:[#allocation6 + $0x110] sm:$0xff]
    %v328 = vld [vmem:[#allocation6 + $0x118] sm:$0xff]
    %v329 = vld [vmem:[#allocation6 + $0x120] sm:$0xff]
    %v330 = vld [vmem:[#allocation6 + $0x128] sm:$0xff]
    %v331 = vld [vmem:[#allocation6 + $0x130] sm:$0xff]
    %v332 = vld [vmem:[#allocation6 + $0x138] sm:$0xff]
    %v333 = vld [vmem:[#allocation6 + $0x140] sm:$0xff]
    %v334 = vld [vmem:[#allocation6 + $0x148] sm:$0xff]
    %v335 = vld [vmem:[#allocation6 + $0x150] sm:$0xff]
    %v336 = vld [vmem:[#allocation6 + $0x158] sm:$0xff]
    %v337 = vld [vmem:[#allocation6 + $0x160] sm:$0xff]
    %v338 = vld [vmem:[#allocation6 + $0x168] sm:$0xff]
    %v339 = vld [vmem:[#allocation6 + $0x170] sm:$0xff]
    %v340 = vld [vmem:[#allocation6 + $0x178] sm:$0xff]
    %v341 = vld [vmem:[#allocation6 + $0x180] sm:$0xff]
    %v342 = vld [vmem:[#allocation6 + $0x188] sm:$0xff]
    %v343 = vld [vmem:[#allocation6 + $0x190] sm:$0xff]
    %v344 = vld [vmem:[#allocation6 + $0x198] sm:$0xff]
    %v345 = vld [vmem:[#allocation6 + $0x1a0] sm:$0xff]
    %v346 = vld [vmem:[#allocation6 + $0x1a8] sm:$0xff]
    %v347 = vld [vmem:[#allocation6 + $0x1b0] sm:$0xff]
    %v348 = vld [vmem:[#allocation6 + $0x1b8] sm:$0xff]
    %v349 = vld [vmem:[#allocation6 + $0x1c0] sm:$0xff]
    %v350 = vld [vmem:[#allocation6 + $0x1c8] sm:$0xff]
    %v351 = vld [vmem:[#allocation6 + $0x1d0] sm:$0xff]
    %v352 = vld [vmem:[#allocation6 + $0x1d8] sm:$0xff]
    %v353 = vld [vmem:[#allocation6 + $0x1e0] sm:$0xff]
    %v354 = vld [vmem:[#allocation6 + $0x1e8] sm:$0xff]
    %v355 = vld [vmem:[#allocation6 + $0x1f0] sm:$0xff]
    %v356 = vld [vmem:[#allocation6 + $0x1f8] sm:$0xff]
    %v357 = vld [vmem:[#allocation7] sm:$0xf]
    %v359 = vlaneseq
    %v360 = vshrl.u32 %v359, 7
    %v361 = vsub.s32 0, %v360
    %v362 = vrot.slane %v357, %v361
    %v363 = vlaneseq
    %v364 = vshrl.u32 %v363, 7
    %v365 = vsub.s32 1, %v364
    %v366 = vrot.slane %v357, %v365
    %v367 = vlaneseq
    %v368 = vshrl.u32 %v367, 7
    %v369 = vsub.s32 2, %v368
    %v370 = vrot.slane %v357, %v369
    %v371 = vlaneseq
    %v372 = vshrl.u32 %v371, 7
    %v373 = vsub.s32 3, %v372
    %v374 = vrot.slane %v357, %v373
    %v443 = vunpack.c.l.b16 %v293
    %v444 = vunpack.c.h.b16 %v293
    %v445 = vunpack.c.l.b16 %v294
    %v446 = vunpack.c.h.b16 %v294
    %v447 = vunpack.c.l.b16 %v295
    %v448 = vunpack.c.h.b16 %v295
    %v449 = vunpack.c.l.b16 %v296
    %v450 = vunpack.c.h.b16 %v296
    %v451 = vunpack.c.l.b16 %v297
    %v452 = vunpack.c.h.b16 %v297
    %v453 = vunpack.c.l.b16 %v298
    %v454 = vunpack.c.h.b16 %v298
    %v455 = vunpack.c.l.b16 %v299
    %v456 = vunpack.c.h.b16 %v299
    %v457 = vunpack.c.l.b16 %v300
    %v458 = vunpack.c.h.b16 %v300
    %v459 = vunpack.c.l.b16 %v301
    %v460 = vunpack.c.h.b16 %v301
    %v461 = vunpack.c.l.b16 %v302
    %v462 = vunpack.c.h.b16 %v302
    %v463 = vunpack.c.l.b16 %v303
    %v464 = vunpack.c.h.b16 %v303
    %v465 = vunpack.c.l.b16 %v304
    %v466 = vunpack.c.h.b16 %v304
    %v467 = vunpack.c.l.b16 %v305
    %v468 = vunpack.c.h.b16 %v305
    %v469 = vunpack.c.l.b16 %v306
    %v470 = vunpack.c.h.b16 %v306
    %v471 = vunpack.c.l.b16 %v307
    %v472 = vunpack.c.h.b16 %v307
    %v473 = vunpack.c.l.b16 %v308
    %v474 = vunpack.c.h.b16 %v308
    %v475 = vunpack.c.l.b16 %v309
    %v476 = vunpack.c.h.b16 %v309
    %v477 = vunpack.c.l.b16 %v310
    %v478 = vunpack.c.h.b16 %v310
    %v479 = vunpack.c.l.b16 %v311
    %v480 = vunpack.c.h.b16 %v311
    %v481 = vunpack.c.l.b16 %v312
    %v482 = vunpack.c.h.b16 %v312
    %v483 = vunpack.c.l.b16 %v313
    %v484 = vunpack.c.h.b16 %v313
    %v485 = vunpack.c.l.b16 %v314
    %v486 = vunpack.c.h.b16 %v314
    %v487 = vunpack.c.l.b16 %v315
    %v488 = vunpack.c.h.b16 %v315
    %v489 = vunpack.c.l.b16 %v316
    %v490 = vunpack.c.h.b16 %v316
    %v491 = vunpack.c.l.b16 %v317
    %v492 = vunpack.c.h.b16 %v317
    %v493 = vunpack.c.l.b16 %v318
    %v494 = vunpack.c.h.b16 %v318
    %v495 = vunpack.c.l.b16 %v319
    %v496 = vunpack.c.h.b16 %v319
    %v497 = vunpack.c.l.b16 %v320
    %v498 = vunpack.c.h.b16 %v320
    %v499 = vunpack.c.l.b16 %v321
    %v500 = vunpack.c.h.b16 %v321
    %v501 = vunpack.c.l.b16 %v322
    %v502 = vunpack.c.h.b16 %v322
    %v503 = vunpack.c.l.b16 %v323
    %v504 = vunpack.c.h.b16 %v323
    %v505 = vunpack.c.l.b16 %v324
    %v506 = vunpack.c.h.b16 %v324
    %v507 = vunpack.c.l.b16 %v325
    %v508 = vunpack.c.h.b16 %v325
    %v509 = vunpack.c.l.b16 %v326
    %v510 = vunpack.c.h.b16 %v326
    %v511 = vunpack.c.l.b16 %v327
    %v512 = vunpack.c.h.b16 %v327
    %v513 = vunpack.c.l.b16 %v328
    %v514 = vunpack.c.h.b16 %v328
    %v515 = vunpack.c.l.b16 %v329
    %v516 = vunpack.c.h.b16 %v329
    %v517 = vunpack.c.l.b16 %v330
    %v518 = vunpack.c.h.b16 %v330
    %v519 = vunpack.c.l.b16 %v331
    %v520 = vunpack.c.h.b16 %v331
    %v521 = vunpack.c.l.b16 %v332
    %v522 = vunpack.c.h.b16 %v332
    %v523 = vunpack.c.l.b16 %v333
    %v524 = vunpack.c.h.b16 %v333
    %v525 = vunpack.c.l.b16 %v334
    %v526 = vunpack.c.h.b16 %v334
    %v527 = vunpack.c.l.b16 %v335
    %v528 = vunpack.c.h.b16 %v335
    %v529 = vunpack.c.l.b16 %v336
    %v530 = vunpack.c.h.b16 %v336
    %v531 = vunpack.c.l.b16 %v337
    %v532 = vunpack.c.h.b16 %v337
    %v533 = vunpack.c.l.b16 %v338
    %v534 = vunpack.c.h.b16 %v338
    %v535 = vunpack.c.l.b16 %v339
    %v536 = vunpack.c.h.b16 %v339
    %v537 = vunpack.c.l.b16 %v340
    %v538 = vunpack.c.h.b16 %v340
    %v539 = vunpack.c.l.b16 %v341
    %v540 = vunpack.c.h.b16 %v341
    %v541 = vunpack.c.l.b16 %v342
    %v542 = vunpack.c.h.b16 %v342
    %v543 = vunpack.c.l.b16 %v343
    %v544 = vunpack.c.h.b16 %v343
    %v545 = vunpack.c.l.b16 %v344
    %v546 = vunpack.c.h.b16 %v344
    %v547 = vunpack.c.l.b16 %v345
    %v548 = vunpack.c.h.b16 %v345
    %v549 = vunpack.c.l.b16 %v346
    %v550 = vunpack.c.h.b16 %v346
    %v551 = vunpack.c.l.b16 %v347
    %v552 = vunpack.c.h.b16 %v347
    %v553 = vunpack.c.l.b16 %v348
    %v554 = vunpack.c.h.b16 %v348
    %v555 = vunpack.c.l.b16 %v349
    %v556 = vunpack.c.h.b16 %v349
    %v557 = vunpack.c.l.b16 %v350
    %v558 = vunpack.c.h.b16 %v350
    %v559 = vunpack.c.l.b16 %v351
    %v560 = vunpack.c.h.b16 %v351
    %v561 = vunpack.c.l.b16 %v352
    %v562 = vunpack.c.h.b16 %v352
    %v563 = vunpack.c.l.b16 %v353
    %v564 = vunpack.c.h.b16 %v353
    %v565 = vunpack.c.l.b16 %v354
    %v566 = vunpack.c.h.b16 %v354
    %v567 = vunpack.c.l.b16 %v355
    %v568 = vunpack.c.h.b16 %v355
    %v569 = vunpack.c.l.b16 %v356
    %v570 = vunpack.c.h.b16 %v356
    %v571 = vpack.c.b16 %v447, %v443
    %v572 = vpack.c.b16 %v448, %v444
    %v573 = vpack.c.b16 %v449, %v445
    %v574 = vpack.c.b16 %v450, %v446
    %v575 = vpack.c.b16 %v455, %v451
    %v576 = vpack.c.b16 %v456, %v452
    %v577 = vpack.c.b16 %v457, %v453
    %v578 = vpack.c.b16 %v458, %v454
    %v579 = vpack.c.b16 %v463, %v459
    %v580 = vpack.c.b16 %v464, %v460
    %v581 = vpack.c.b16 %v465, %v461
    %v582 = vpack.c.b16 %v466, %v462
    %v583 = vpack.c.b16 %v471, %v467
    %v584 = vpack.c.b16 %v472, %v468
    %v585 = vpack.c.b16 %v473, %v469
    %v586 = vpack.c.b16 %v474, %v470
    %v587 = vpack.c.b16 %v479, %v475
    %v588 = vpack.c.b16 %v480, %v476
    %v589 = vpack.c.b16 %v481, %v477
    %v590 = vpack.c.b16 %v482, %v478
    %v591 = vpack.c.b16 %v487, %v483
    %v592 = vpack.c.b16 %v488, %v484
    %v593 = vpack.c.b16 %v489, %v485
    %v594 = vpack.c.b16 %v490, %v486
    %v595 = vpack.c.b16 %v495, %v491
    %v596 = vpack.c.b16 %v496, %v492
    %v597 = vpack.c.b16 %v497, %v493
    %v598 = vpack.c.b16 %v498, %v494
    %v599 = vpack.c.b16 %v503, %v499
    %v600 = vpack.c.b16 %v504, %v500
    %v601 = vpack.c.b16 %v505, %v501
    %v602 = vpack.c.b16 %v506, %v502
    %v603 = vpack.c.b16 %v511, %v507
    %v604 = vpack.c.b16 %v512, %v508
    %v605 = vpack.c.b16 %v513, %v509
    %v606 = vpack.c.b16 %v514, %v510
    %v607 = vpack.c.b16 %v519, %v515
    %v608 = vpack.c.b16 %v520, %v516
    %v609 = vpack.c.b16 %v521, %v517
    %v610 = vpack.c.b16 %v522, %v518
    %v611 = vpack.c.b16 %v527, %v523
    %v612 = vpack.c.b16 %v528, %v524
    %v613 = vpack.c.b16 %v529, %v525
    %v614 = vpack.c.b16 %v530, %v526
    %v615 = vpack.c.b16 %v535, %v531
    %v616 = vpack.c.b16 %v536, %v532
    %v617 = vpack.c.b16 %v537, %v533
    %v618 = vpack.c.b16 %v538, %v534
    %v619 = vpack.c.b16 %v543, %v539
    %v620 = vpack.c.b16 %v544, %v540
    %v621 = vpack.c.b16 %v545, %v541
    %v622 = vpack.c.b16 %v546, %v542
    %v623 = vpack.c.b16 %v551, %v547
    %v624 = vpack.c.b16 %v552, %v548
    %v625 = vpack.c.b16 %v553, %v549
    %v626 = vpack.c.b16 %v554, %v550
    %v627 = vpack.c.b16 %v559, %v555
    %v628 = vpack.c.b16 %v560, %v556
    %v629 = vpack.c.b16 %v561, %v557
    %v630 = vpack.c.b16 %v562, %v558
    %v631 = vpack.c.b16 %v567, %v563
    %v632 = vpack.c.b16 %v568, %v564
    %v633 = vpack.c.b16 %v569, %v565
    %v634 = vpack.c.b16 %v570, %v566
    %699 = vmatprep.subr.bf16.mxu0 %v600
    %700 = vmatpush1.bf16.msra.mxu0 %v599
    %701 = vmatprep.subr.bf16.mxu0 %v596
    %702 = vmatpush1.bf16.msra.mxu0 %v595
    %703 = vmatprep.subr.bf16.mxu0 %v592
    %704 = vmatpush1.bf16.msra.mxu0 %v591
    %705 = vmatprep.subr.bf16.mxu0 %v588
    %706 = vmatpush1.bf16.msra.mxu0 %v587
    %707 = vmatprep.subr.bf16.mxu0 %v584
    %708 = vmatpush1.bf16.msra.mxu0 %v583
    %709 = vmatprep.subr.bf16.mxu0 %v580
    %710 = vmatpush1.bf16.msra.mxu0 %v579
    %711 = vmatprep.subr.bf16.mxu0 %v576
    %712 = vmatpush1.bf16.msra.mxu0 %v575
    %713 = vmatprep.subr.bf16.mxu0 %v572
    %714 = vmatpush1.bf16.msra.mxu0 %v571
    %715 = vmatprep.subr.bf16.mxu0 %v632
    %716 = vmatpush2.bf16.msra.mxu0 %v631
    %717 = vmatprep.subr.bf16.mxu0 %v628
    %718 = vmatpush2.bf16.msra.mxu0 %v627
    %719 = vmatprep.subr.bf16.mxu0 %v624
    %720 = vmatpush2.bf16.msra.mxu0 %v623
    %721 = vmatprep.subr.bf16.mxu0 %v620
    %722 = vmatpush2.bf16.msra.mxu0 %v619
    %723 = vmatprep.subr.bf16.mxu0 %v616
    %724 = vmatpush2.bf16.msra.mxu0 %v615
    %725 = vmatprep.subr.bf16.mxu0 %v612
    %726 = vmatpush2.bf16.msra.mxu0 %v611
    %727 = vmatprep.subr.bf16.mxu0 %v608
    %728 = vmatpush2.bf16.msra.mxu0 %v607
    %729 = vmatprep.subr.bf16.mxu0 %v604
    %730 = vmatpush2.bf16.msra.mxu0 %v603
    %731 = vmatprep.mubr.bf16.mxu0 %v292
    %732 = vmatmul.mubr.bf16.gmra.mxu0 %v291
    %v733 = vpop.f32.mrf.mxu0
    %v734 = vadd.f32 %v362, %v733
    %v735 = vpop.f32.mrf.mxu0
    %v736 = vadd.f32 %v366, %v735
    %v737 = vpop.f32.mrf.mxu0
    %v738 = vpop.f32.mrf.mxu0
    %739 = vdwg.mxu0
    %740 = vmatprep.subr.bf16.mxu0 %v602
    %741 = vmatpush1.bf16.msra.mxu0 %v601
    %742 = vmatprep.subr.bf16.mxu0 %v598
    %743 = vmatpush1.bf16.msra.mxu0 %v597
    %744 = vmatprep.subr.bf16.mxu0 %v594
    %745 = vmatpush1.bf16.msra.mxu0 %v593
    %746 = vmatprep.subr.bf16.mxu0 %v590
    %747 = vmatpush1.bf16.msra.mxu0 %v589
    %748 = vmatprep.subr.bf16.mxu0 %v586
    %749 = vmatpush1.bf16.msra.mxu0 %v585
    %750 = vmatprep.subr.bf16.mxu0 %v582
    %751 = vmatpush1.bf16.msra.mxu0 %v581
    %752 = vmatprep.subr.bf16.mxu0 %v578
    %753 = vmatpush1.bf16.msra.mxu0 %v577
    %754 = vmatprep.subr.bf16.mxu0 %v574
    %755 = vmatpush1.bf16.msra.mxu0 %v573
    %756 = vmatprep.subr.bf16.mxu0 %v634
    %757 = vmatpush2.bf16.msra.mxu0 %v633
    %758 = vmatprep.subr.bf16.mxu0 %v630
    %759 = vmatpush2.bf16.msra.mxu0 %v629
    %760 = vmatprep.subr.bf16.mxu0 %v626
    %761 = vmatpush2.bf16.msra.mxu0 %v625
    %762 = vmatprep.subr.bf16.mxu0 %v622
    %763 = vmatpush2.bf16.msra.mxu0 %v621
    %764 = vmatprep.subr.bf16.mxu0 %v618
    %765 = vmatpush2.bf16.msra.mxu0 %v617
    %766 = vmatprep.subr.bf16.mxu0 %v614
    %767 = vmatpush2.bf16.msra.mxu0 %v613
    %768 = vmatprep.subr.bf16.mxu0 %v610
    %769 = vmatpush2.bf16.msra.mxu0 %v609
    %770 = vmatprep.subr.bf16.mxu0 %v606
    %771 = vmatpush2.bf16.msra.mxu0 %v605
    %772 = vmatprep.mubr.bf16.mxu0 %v292
    %773 = vmatmul.mubr.bf16.gmra.mxu0 %v291
    %v774 = vpop.f32.mrf.mxu0
    %v775 = vadd.f32 %v370, %v774
    %v776 = vpop.f32.mrf.mxu0
    %v777 = vadd.f32 %v374, %v776
    %v778 = vpop.f32.mrf.mxu0
    %v779 = vpop.f32.mrf.mxu0
    %780 = vdwg.mxu0
    %vm781 = vcmp.ge.f32.partialorder %v734, 0.0
    %vm782 = vcmp.ge.f32.partialorder %v736, 0.0
    %vm783 = vcmp.ge.f32.partialorder %v775, 0.0
    %vm784 = vcmp.ge.f32.partialorder %v777, 0.0
    %v785 = vmul.f32 %v734, 0.2
    %v786 = vmul.f32 %v736, 0.2
    %v787 = vmul.f32 %v775, 0.2
    %v788 = vmul.f32 %v777, 0.2
    %v789 = vsel %vm781, %v734, %v785
    %v790 = vsel %vm782, %v736, %v786
    %v791 = vsel %vm783, %v775, %v787
    %v792 = vsel %vm784, %v777, %v788
    %v793 = vpack.c.bf16 %v789, %v789
    %v794 = vpack.c.bf16 %v790, %v790
    %v795 = vpack.c.bf16 %v791, %v791
    %v796 = vpack.c.bf16 %v792, %v792
    %v797 = vld [vmem:[#allocation9] sm:$0xff]
    %v798 = vld [vmem:[#allocation9 + $0x8] sm:$0xff]
    %v799 = vld [vmem:[#allocation9 + $0x10] sm:$0xff]
    %v800 = vld [vmem:[#allocation9 + $0x18] sm:$0xff]
    %v801 = vld [vmem:[#allocation9 + $0x20] sm:$0xff]
    %v802 = vld [vmem:[#allocation9 + $0x28] sm:$0xff]
    %v803 = vld [vmem:[#allocation9 + $0x30] sm:$0xff]
    %v804 = vld [vmem:[#allocation9 + $0x38] sm:$0xff]
    %v805 = vld [vmem:[#allocation9 + $0x40] sm:$0xff]
    %v806 = vld [vmem:[#allocation9 + $0x48] sm:$0xff]
    %v807 = vld [vmem:[#allocation9 + $0x50] sm:$0xff]
    %v808 = vld [vmem:[#allocation9 + $0x58] sm:$0xff]
    %v809 = vld [vmem:[#allocation9 + $0x60] sm:$0xff]
    %v810 = vld [vmem:[#allocation9 + $0x68] sm:$0xff]
    %v811 = vld [vmem:[#allocation9 + $0x70] sm:$0xff]
    %v812 = vld [vmem:[#allocation9 + $0x78] sm:$0xff]
    %v813 = vld [vmem:[#allocation9 + $0x80] sm:$0xff]
    %v814 = vld [vmem:[#allocation9 + $0x88] sm:$0xff]
    %v815 = vld [vmem:[#allocation9 + $0x90] sm:$0xff]
    %v816 = vld [vmem:[#allocation9 + $0x98] sm:$0xff]
    %v817 = vld [vmem:[#allocation9 + $0xa0] sm:$0xff]
    %v818 = vld [vmem:[#allocation9 + $0xa8] sm:$0xff]
    %v819 = vld [vmem:[#allocation9 + $0xb0] sm:$0xff]
    %v820 = vld [vmem:[#allocation9 + $0xb8] sm:$0xff]
    %v821 = vld [vmem:[#allocation9 + $0xc0] sm:$0xff]
    %v822 = vld [vmem:[#allocation9 + $0xc8] sm:$0xff]
    %v823 = vld [vmem:[#allocation9 + $0xd0] sm:$0xff]
    %v824 = vld [vmem:[#allocation9 + $0xd8] sm:$0xff]
    %v825 = vld [vmem:[#allocation9 + $0xe0] sm:$0xff]
    %v826 = vld [vmem:[#allocation9 + $0xe8] sm:$0xff]
    %v827 = vld [vmem:[#allocation9 + $0xf0] sm:$0xff]
    %v828 = vld [vmem:[#allocation9 + $0xf8] sm:$0xff]
    %v829 = vld [vmem:[#allocation9 + $0x100] sm:$0xff]
    %v830 = vld [vmem:[#allocation9 + $0x108] sm:$0xff]
    %v831 = vld [vmem:[#allocation9 + $0x110] sm:$0xff]
    %v832 = vld [vmem:[#allocation9 + $0x118] sm:$0xff]
    %v833 = vld [vmem:[#allocation9 + $0x120] sm:$0xff]
    %v834 = vld [vmem:[#allocation9 + $0x128] sm:$0xff]
    %v835 = vld [vmem:[#allocation9 + $0x130] sm:$0xff]
    %v836 = vld [vmem:[#allocation9 + $0x138] sm:$0xff]
    %v837 = vld [vmem:[#allocation9 + $0x140] sm:$0xff]
    %v838 = vld [vmem:[#allocation9 + $0x148] sm:$0xff]
    %v839 = vld [vmem:[#allocation9 + $0x150] sm:$0xff]
    %v840 = vld [vmem:[#allocation9 + $0x158] sm:$0xff]
    %v841 = vld [vmem:[#allocation9 + $0x160] sm:$0xff]
    %v842 = vld [vmem:[#allocation9 + $0x168] sm:$0xff]
    %v843 = vld [vmem:[#allocation9 + $0x170] sm:$0xff]
    %v844 = vld [vmem:[#allocation9 + $0x178] sm:$0xff]
    %v845 = vld [vmem:[#allocation9 + $0x180] sm:$0xff]
    %v846 = vld [vmem:[#allocation9 + $0x188] sm:$0xff]
    %v847 = vld [vmem:[#allocation9 + $0x190] sm:$0xff]
    %v848 = vld [vmem:[#allocation9 + $0x198] sm:$0xff]
    %v849 = vld [vmem:[#allocation9 + $0x1a0] sm:$0xff]
    %v850 = vld [vmem:[#allocation9 + $0x1a8] sm:$0xff]
    %v851 = vld [vmem:[#allocation9 + $0x1b0] sm:$0xff]
    %v852 = vld [vmem:[#allocation9 + $0x1b8] sm:$0xff]
    %v853 = vld [vmem:[#allocation9 + $0x1c0] sm:$0xff]
    %v854 = vld [vmem:[#allocation9 + $0x1c8] sm:$0xff]
    %v855 = vld [vmem:[#allocation9 + $0x1d0] sm:$0xff]
    %v856 = vld [vmem:[#allocation9 + $0x1d8] sm:$0xff]
    %v857 = vld [vmem:[#allocation9 + $0x1e0] sm:$0xff]
    %v858 = vld [vmem:[#allocation9 + $0x1e8] sm:$0xff]
    %v859 = vld [vmem:[#allocation9 + $0x1f0] sm:$0xff]
    %v860 = vld [vmem:[#allocation9 + $0x1f8] sm:$0xff]
    %v861 = vld [vmem:[#allocation9 + $0x200] sm:$0xff]
    %v862 = vld [vmem:[#allocation9 + $0x208] sm:$0xff]
    %v863 = vld [vmem:[#allocation9 + $0x210] sm:$0xff]
    %v864 = vld [vmem:[#allocation9 + $0x218] sm:$0xff]
    %v865 = vld [vmem:[#allocation9 + $0x220] sm:$0xff]
    %v866 = vld [vmem:[#allocation9 + $0x228] sm:$0xff]
    %v867 = vld [vmem:[#allocation9 + $0x230] sm:$0xff]
    %v868 = vld [vmem:[#allocation9 + $0x238] sm:$0xff]
    %v869 = vld [vmem:[#allocation9 + $0x240] sm:$0xff]
    %v870 = vld [vmem:[#allocation9 + $0x248] sm:$0xff]
    %v871 = vld [vmem:[#allocation9 + $0x250] sm:$0xff]
    %v872 = vld [vmem:[#allocation9 + $0x258] sm:$0xff]
    %v873 = vld [vmem:[#allocation9 + $0x260] sm:$0xff]
    %v874 = vld [vmem:[#allocation9 + $0x268] sm:$0xff]
    %v875 = vld [vmem:[#allocation9 + $0x270] sm:$0xff]
    %v876 = vld [vmem:[#allocation9 + $0x278] sm:$0xff]
    %v877 = vld [vmem:[#allocation9 + $0x280] sm:$0xff]
    %v878 = vld [vmem:[#allocation9 + $0x288] sm:$0xff]
    %v879 = vld [vmem:[#allocation9 + $0x290] sm:$0xff]
    %v880 = vld [vmem:[#allocation9 + $0x298] sm:$0xff]
    %v881 = vld [vmem:[#allocation9 + $0x2a0] sm:$0xff]
    %v882 = vld [vmem:[#allocation9 + $0x2a8] sm:$0xff]
    %v883 = vld [vmem:[#allocation9 + $0x2b0] sm:$0xff]
    %v884 = vld [vmem:[#allocation9 + $0x2b8] sm:$0xff]
    %v885 = vld [vmem:[#allocation9 + $0x2c0] sm:$0xff]
    %v886 = vld [vmem:[#allocation9 + $0x2c8] sm:$0xff]
    %v887 = vld [vmem:[#allocation9 + $0x2d0] sm:$0xff]
    %v888 = vld [vmem:[#allocation9 + $0x2d8] sm:$0xff]
    %v889 = vld [vmem:[#allocation9 + $0x2e0] sm:$0xff]
    %v890 = vld [vmem:[#allocation9 + $0x2e8] sm:$0xff]
    %v891 = vld [vmem:[#allocation9 + $0x2f0] sm:$0xff]
    %v892 = vld [vmem:[#allocation9 + $0x2f8] sm:$0xff]
    %v893 = vld [vmem:[#allocation9 + $0x300] sm:$0xff]
    %v894 = vld [vmem:[#allocation9 + $0x308] sm:$0xff]
    %v895 = vld [vmem:[#allocation9 + $0x310] sm:$0xff]
    %v896 = vld [vmem:[#allocation9 + $0x318] sm:$0xff]
    %v897 = vld [vmem:[#allocation9 + $0x320] sm:$0xff]
    %v898 = vld [vmem:[#allocation9 + $0x328] sm:$0xff]
    %v899 = vld [vmem:[#allocation9 + $0x330] sm:$0xff]
    %v900 = vld [vmem:[#allocation9 + $0x338] sm:$0xff]
    %v901 = vld [vmem:[#allocation9 + $0x340] sm:$0xff]
    %v902 = vld [vmem:[#allocation9 + $0x348] sm:$0xff]
    %v903 = vld [vmem:[#allocation9 + $0x350] sm:$0xff]
    %v904 = vld [vmem:[#allocation9 + $0x358] sm:$0xff]
    %v905 = vld [vmem:[#allocation9 + $0x360] sm:$0xff]
    %v906 = vld [vmem:[#allocation9 + $0x368] sm:$0xff]
    %v907 = vld [vmem:[#allocation9 + $0x370] sm:$0xff]
    %v908 = vld [vmem:[#allocation9 + $0x378] sm:$0xff]
    %v909 = vld [vmem:[#allocation9 + $0x380] sm:$0xff]
    %v910 = vld [vmem:[#allocation9 + $0x388] sm:$0xff]
    %v911 = vld [vmem:[#allocation9 + $0x390] sm:$0xff]
    %v912 = vld [vmem:[#allocation9 + $0x398] sm:$0xff]
    %v913 = vld [vmem:[#allocation9 + $0x3a0] sm:$0xff]
    %v914 = vld [vmem:[#allocation9 + $0x3a8] sm:$0xff]
    %v915 = vld [vmem:[#allocation9 + $0x3b0] sm:$0xff]
    %v916 = vld [vmem:[#allocation9 + $0x3b8] sm:$0xff]
    %v917 = vld [vmem:[#allocation9 + $0x3c0] sm:$0xff]
    %v918 = vld [vmem:[#allocation9 + $0x3c8] sm:$0xff]
    %v919 = vld [vmem:[#allocation9 + $0x3d0] sm:$0xff]
    %v920 = vld [vmem:[#allocation9 + $0x3d8] sm:$0xff]
    %v921 = vld [vmem:[#allocation9 + $0x3e0] sm:$0xff]
    %v922 = vld [vmem:[#allocation9 + $0x3e8] sm:$0xff]
    %v923 = vld [vmem:[#allocation9 + $0x3f0] sm:$0xff]
    %v924 = vld [vmem:[#allocation9 + $0x3f8] sm:$0xff]
    %v925 = vld [vmem:[#allocation9 + $0x400] sm:$0xff]
    %v926 = vld [vmem:[#allocation9 + $0x408] sm:$0xff]
    %v927 = vld [vmem:[#allocation9 + $0x410] sm:$0xff]
    %v928 = vld [vmem:[#allocation9 + $0x418] sm:$0xff]
    %v929 = vld [vmem:[#allocation9 + $0x420] sm:$0xff]
    %v930 = vld [vmem:[#allocation9 + $0x428] sm:$0xff]
    %v931 = vld [vmem:[#allocation9 + $0x430] sm:$0xff]
    %v932 = vld [vmem:[#allocation9 + $0x438] sm:$0xff]
    %v933 = vld [vmem:[#allocation9 + $0x440] sm:$0xff]
    %v934 = vld [vmem:[#allocation9 + $0x448] sm:$0xff]
    %v935 = vld [vmem:[#allocation9 + $0x450] sm:$0xff]
    %v936 = vld [vmem:[#allocation9 + $0x458] sm:$0xff]
    %v937 = vld [vmem:[#allocation9 + $0x460] sm:$0xff]
    %v938 = vld [vmem:[#allocation9 + $0x468] sm:$0xff]
    %v939 = vld [vmem:[#allocation9 + $0x470] sm:$0xff]
    %v940 = vld [vmem:[#allocation9 + $0x478] sm:$0xff]
    %v941 = vld [vmem:[#allocation9 + $0x480] sm:$0xff]
    %v942 = vld [vmem:[#allocation9 + $0x488] sm:$0xff]
    %v943 = vld [vmem:[#allocation9 + $0x490] sm:$0xff]
    %v944 = vld [vmem:[#allocation9 + $0x498] sm:$0xff]
    %v945 = vld [vmem:[#allocation9 + $0x4a0] sm:$0xff]
    %v946 = vld [vmem:[#allocation9 + $0x4a8] sm:$0xff]
    %v947 = vld [vmem:[#allocation9 + $0x4b0] sm:$0xff]
    %v948 = vld [vmem:[#allocation9 + $0x4b8] sm:$0xff]
    %v949 = vld [vmem:[#allocation9 + $0x4c0] sm:$0xff]
    %v950 = vld [vmem:[#allocation9 + $0x4c8] sm:$0xff]
    %v951 = vld [vmem:[#allocation9 + $0x4d0] sm:$0xff]
    %v952 = vld [vmem:[#allocation9 + $0x4d8] sm:$0xff]
    %v953 = vld [vmem:[#allocation9 + $0x4e0] sm:$0xff]
    %v954 = vld [vmem:[#allocation9 + $0x4e8] sm:$0xff]
    %v955 = vld [vmem:[#allocation9 + $0x4f0] sm:$0xff]
    %v956 = vld [vmem:[#allocation9 + $0x4f8] sm:$0xff]
    %v957 = vld [vmem:[#allocation9 + $0x500] sm:$0xff]
    %v958 = vld [vmem:[#allocation9 + $0x508] sm:$0xff]
    %v959 = vld [vmem:[#allocation9 + $0x510] sm:$0xff]
    %v960 = vld [vmem:[#allocation9 + $0x518] sm:$0xff]
    %v961 = vld [vmem:[#allocation9 + $0x520] sm:$0xff]
    %v962 = vld [vmem:[#allocation9 + $0x528] sm:$0xff]
    %v963 = vld [vmem:[#allocation9 + $0x530] sm:$0xff]
    %v964 = vld [vmem:[#allocation9 + $0x538] sm:$0xff]
    %v965 = vld [vmem:[#allocation9 + $0x540] sm:$0xff]
    %v966 = vld [vmem:[#allocation9 + $0x548] sm:$0xff]
    %v967 = vld [vmem:[#allocation9 + $0x550] sm:$0xff]
    %v968 = vld [vmem:[#allocation9 + $0x558] sm:$0xff]
    %v969 = vld [vmem:[#allocation9 + $0x560] sm:$0xff]
    %v970 = vld [vmem:[#allocation9 + $0x568] sm:$0xff]
    %v971 = vld [vmem:[#allocation9 + $0x570] sm:$0xff]
    %v972 = vld [vmem:[#allocation9 + $0x578] sm:$0xff]
    %v973 = vld [vmem:[#allocation9 + $0x580] sm:$0xff]
    %v974 = vld [vmem:[#allocation9 + $0x588] sm:$0xff]
    %v975 = vld [vmem:[#allocation9 + $0x590] sm:$0xff]
    %v976 = vld [vmem:[#allocation9 + $0x598] sm:$0xff]
    %v977 = vld [vmem:[#allocation9 + $0x5a0] sm:$0xff]
    %v978 = vld [vmem:[#allocation9 + $0x5a8] sm:$0xff]
    %v979 = vld [vmem:[#allocation9 + $0x5b0] sm:$0xff]
    %v980 = vld [vmem:[#allocation9 + $0x5b8] sm:$0xff]
    %v981 = vld [vmem:[#allocation9 + $0x5c0] sm:$0xff]
    %v982 = vld [vmem:[#allocation9 + $0x5c8] sm:$0xff]
    %v983 = vld [vmem:[#allocation9 + $0x5d0] sm:$0xff]
    %v984 = vld [vmem:[#allocation9 + $0x5d8] sm:$0xff]
    %v985 = vld [vmem:[#allocation9 + $0x5e0] sm:$0xff]
    %v986 = vld [vmem:[#allocation9 + $0x5e8] sm:$0xff]
    %v987 = vld [vmem:[#allocation9 + $0x5f0] sm:$0xff]
    %v988 = vld [vmem:[#allocation9 + $0x5f8] sm:$0xff]
    %v989 = vld [vmem:[#allocation9 + $0x600] sm:$0xff]
    %v990 = vld [vmem:[#allocation9 + $0x608] sm:$0xff]
    %v991 = vld [vmem:[#allocation9 + $0x610] sm:$0xff]
    %v992 = vld [vmem:[#allocation9 + $0x618] sm:$0xff]
    %v993 = vld [vmem:[#allocation9 + $0x620] sm:$0xff]
    %v994 = vld [vmem:[#allocation9 + $0x628] sm:$0xff]
    %v995 = vld [vmem:[#allocation9 + $0x630] sm:$0xff]
    %v996 = vld [vmem:[#allocation9 + $0x638] sm:$0xff]
    %v997 = vld [vmem:[#allocation9 + $0x640] sm:$0xff]
    %v998 = vld [vmem:[#allocation9 + $0x648] sm:$0xff]
    %v999 = vld [vmem:[#allocation9 + $0x650] sm:$0xff]
    %v1000 = vld [vmem:[#allocation9 + $0x658] sm:$0xff]
    %v1001 = vld [vmem:[#allocation9 + $0x660] sm:$0xff]
    %v1002 = vld [vmem:[#allocation9 + $0x668] sm:$0xff]
    %v1003 = vld [vmem:[#allocation9 + $0x670] sm:$0xff]
    %v1004 = vld [vmem:[#allocation9 + $0x678] sm:$0xff]
    %v1005 = vld [vmem:[#allocation9 + $0x680] sm:$0xff]
    %v1006 = vld [vmem:[#allocation9 + $0x688] sm:$0xff]
    %v1007 = vld [vmem:[#allocation9 + $0x690] sm:$0xff]
    %v1008 = vld [vmem:[#allocation9 + $0x698] sm:$0xff]
    %v1009 = vld [vmem:[#allocation9 + $0x6a0] sm:$0xff]
    %v1010 = vld [vmem:[#allocation9 + $0x6a8] sm:$0xff]
    %v1011 = vld [vmem:[#allocation9 + $0x6b0] sm:$0xff]
    %v1012 = vld [vmem:[#allocation9 + $0x6b8] sm:$0xff]
    %v1013 = vld [vmem:[#allocation9 + $0x6c0] sm:$0xff]
    %v1014 = vld [vmem:[#allocation9 + $0x6c8] sm:$0xff]
    %v1015 = vld [vmem:[#allocation9 + $0x6d0] sm:$0xff]
    %v1016 = vld [vmem:[#allocation9 + $0x6d8] sm:$0xff]
    %v1017 = vld [vmem:[#allocation9 + $0x6e0] sm:$0xff]
    %v1018 = vld [vmem:[#allocation9 + $0x6e8] sm:$0xff]
    %v1019 = vld [vmem:[#allocation9 + $0x6f0] sm:$0xff]
    %v1020 = vld [vmem:[#allocation9 + $0x6f8] sm:$0xff]
    %v1021 = vld [vmem:[#allocation9 + $0x700] sm:$0xff]
    %v1022 = vld [vmem:[#allocation9 + $0x708] sm:$0xff]
    %v1023 = vld [vmem:[#allocation9 + $0x710] sm:$0xff]
    %v1024 = vld [vmem:[#allocation9 + $0x718] sm:$0xff]
    %v1025 = vld [vmem:[#allocation9 + $0x720] sm:$0xff]
    %v1026 = vld [vmem:[#allocation9 + $0x728] sm:$0xff]
    %v1027 = vld [vmem:[#allocation9 + $0x730] sm:$0xff]
    %v1028 = vld [vmem:[#allocation9 + $0x738] sm:$0xff]
    %v1029 = vld [vmem:[#allocation9 + $0x740] sm:$0xff]
    %v1030 = vld [vmem:[#allocation9 + $0x748] sm:$0xff]
    %v1031 = vld [vmem:[#allocation9 + $0x750] sm:$0xff]
    %v1032 = vld [vmem:[#allocation9 + $0x758] sm:$0xff]
    %v1033 = vld [vmem:[#allocation9 + $0x760] sm:$0xff]
    %v1034 = vld [vmem:[#allocation9 + $0x768] sm:$0xff]
    %v1035 = vld [vmem:[#allocation9 + $0x770] sm:$0xff]
    %v1036 = vld [vmem:[#allocation9 + $0x778] sm:$0xff]
    %v1037 = vld [vmem:[#allocation9 + $0x780] sm:$0xff]
    %v1038 = vld [vmem:[#allocation9 + $0x788] sm:$0xff]
    %v1039 = vld [vmem:[#allocation9 + $0x790] sm:$0xff]
    %v1040 = vld [vmem:[#allocation9 + $0x798] sm:$0xff]
    %v1041 = vld [vmem:[#allocation9 + $0x7a0] sm:$0xff]
    %v1042 = vld [vmem:[#allocation9 + $0x7a8] sm:$0xff]
    %v1043 = vld [vmem:[#allocation9 + $0x7b0] sm:$0xff]
    %v1044 = vld [vmem:[#allocation9 + $0x7b8] sm:$0xff]
    %v1045 = vld [vmem:[#allocation9 + $0x7c0] sm:$0xff]
    %v1046 = vld [vmem:[#allocation9 + $0x7c8] sm:$0xff]
    %v1047 = vld [vmem:[#allocation9 + $0x7d0] sm:$0xff]
    %v1048 = vld [vmem:[#allocation9 + $0x7d8] sm:$0xff]
    %v1049 = vld [vmem:[#allocation9 + $0x7e0] sm:$0xff]
    %v1050 = vld [vmem:[#allocation9 + $0x7e8] sm:$0xff]
    %v1051 = vld [vmem:[#allocation9 + $0x7f0] sm:$0xff]
    %v1052 = vld [vmem:[#allocation9 + $0x7f8] sm:$0xff]
    %v1053 = vld [vmem:[#allocation10] sm:$0xff]
    %v1055 = vlaneseq
    %v1056 = vshrl.u32 %v1055, 7
    %v1057 = vsub.s32 0, %v1056
    %v1058 = vrot.slane %v1053, %v1057
    %v1059 = vlaneseq
    %v1060 = vshrl.u32 %v1059, 7
    %v1061 = vsub.s32 1, %v1060
    %v1062 = vrot.slane %v1053, %v1061
    %v1063 = vlaneseq
    %v1064 = vshrl.u32 %v1063, 7
    %v1065 = vsub.s32 2, %v1064
    %v1066 = vrot.slane %v1053, %v1065
    %v1067 = vlaneseq
    %v1068 = vshrl.u32 %v1067, 7
    %v1069 = vsub.s32 3, %v1068
    %v1070 = vrot.slane %v1053, %v1069
    %v1071 = vlaneseq
    %v1072 = vshrl.u32 %v1071, 7
    %v1073 = vsub.s32 4, %v1072
    %v1074 = vrot.slane %v1053, %v1073
    %v1075 = vlaneseq
    %v1076 = vshrl.u32 %v1075, 7
    %v1077 = vsub.s32 5, %v1076
    %v1078 = vrot.slane %v1053, %v1077
    %v1079 = vlaneseq
    %v1080 = vshrl.u32 %v1079, 7
    %v1081 = vsub.s32 6, %v1080
    %v1082 = vrot.slane %v1053, %v1081
    %v1083 = vlaneseq
    %v1084 = vshrl.u32 %v1083, 7
    %v1085 = vsub.s32 7, %v1084
    %v1086 = vrot.slane %v1053, %v1085
    %v1351 = vunpack.c.l.b16 %v797
    %v1352 = vunpack.c.h.b16 %v797
    %v1353 = vunpack.c.l.b16 %v798
    %v1354 = vunpack.c.h.b16 %v798
    %v1355 = vunpack.c.l.b16 %v799
    %v1356 = vunpack.c.h.b16 %v799
    %v1357 = vunpack.c.l.b16 %v800
    %v1358 = vunpack.c.h.b16 %v800
    %v1359 = vunpack.c.l.b16 %v801
    %v1360 = vunpack.c.h.b16 %v801
    %v1361 = vunpack.c.l.b16 %v802
    %v1362 = vunpack.c.h.b16 %v802
    %v1363 = vunpack.c.l.b16 %v803
    %v1364 = vunpack.c.h.b16 %v803
    %v1365 = vunpack.c.l.b16 %v804
    %v1366 = vunpack.c.h.b16 %v804
    %v1367 = vunpack.c.l.b16 %v805
    %v1368 = vunpack.c.h.b16 %v805
    %v1369 = vunpack.c.l.b16 %v806
    %v1370 = vunpack.c.h.b16 %v806
    %v1371 = vunpack.c.l.b16 %v807
    %v1372 = vunpack.c.h.b16 %v807
    %v1373 = vunpack.c.l.b16 %v808
    %v1374 = vunpack.c.h.b16 %v808
    %v1375 = vunpack.c.l.b16 %v809
    %v1376 = vunpack.c.h.b16 %v809
    %v1377 = vunpack.c.l.b16 %v810
    %v1378 = vunpack.c.h.b16 %v810
    %v1379 = vunpack.c.l.b16 %v811
    %v1380 = vunpack.c.h.b16 %v811
    %v1381 = vunpack.c.l.b16 %v812
    %v1382 = vunpack.c.h.b16 %v812
    %v1383 = vunpack.c.l.b16 %v813
    %v1384 = vunpack.c.h.b16 %v813
    %v1385 = vunpack.c.l.b16 %v814
    %v1386 = vunpack.c.h.b16 %v814
    %v1387 = vunpack.c.l.b16 %v815
    %v1388 = vunpack.c.h.b16 %v815
    %v1389 = vunpack.c.l.b16 %v816
    %v1390 = vunpack.c.h.b16 %v816
    %v1391 = vunpack.c.l.b16 %v817
    %v1392 = vunpack.c.h.b16 %v817
    %v1393 = vunpack.c.l.b16 %v818
    %v1394 = vunpack.c.h.b16 %v818
    %v1395 = vunpack.c.l.b16 %v819
    %v1396 = vunpack.c.h.b16 %v819
    %v1397 = vunpack.c.l.b16 %v820
    %v1398 = vunpack.c.h.b16 %v820
    %v1399 = vunpack.c.l.b16 %v821
    %v1400 = vunpack.c.h.b16 %v821
    %v1401 = vunpack.c.l.b16 %v822
    %v1402 = vunpack.c.h.b16 %v822
    %v1403 = vunpack.c.l.b16 %v823
    %v1404 = vunpack.c.h.b16 %v823
    %v1405 = vunpack.c.l.b16 %v824
    %v1406 = vunpack.c.h.b16 %v824
    %v1407 = vunpack.c.l.b16 %v825
    %v1408 = vunpack.c.h.b16 %v825
    %v1409 = vunpack.c.l.b16 %v826
    %v1410 = vunpack.c.h.b16 %v826
    %v1411 = vunpack.c.l.b16 %v827
    %v1412 = vunpack.c.h.b16 %v827
    %v1413 = vunpack.c.l.b16 %v828
    %v1414 = vunpack.c.h.b16 %v828
    %v1415 = vunpack.c.l.b16 %v829
    %v1416 = vunpack.c.h.b16 %v829
    %v1417 = vunpack.c.l.b16 %v830
    %v1418 = vunpack.c.h.b16 %v830
    %v1419 = vunpack.c.l.b16 %v831
    %v1420 = vunpack.c.h.b16 %v831
    %v1421 = vunpack.c.l.b16 %v832
    %v1422 = vunpack.c.h.b16 %v832
    %v1423 = vunpack.c.l.b16 %v833
    %v1424 = vunpack.c.h.b16 %v833
    %v1425 = vunpack.c.l.b16 %v834
    %v1426 = vunpack.c.h.b16 %v834
    %v1427 = vunpack.c.l.b16 %v835
    %v1428 = vunpack.c.h.b16 %v835
    %v1429 = vunpack.c.l.b16 %v836
    %v1430 = vunpack.c.h.b16 %v836
    %v1431 = vunpack.c.l.b16 %v837
    %v1432 = vunpack.c.h.b16 %v837
    %v1433 = vunpack.c.l.b16 %v838
    %v1434 = vunpack.c.h.b16 %v838
    %v1435 = vunpack.c.l.b16 %v839
    %v1436 = vunpack.c.h.b16 %v839
    %v1437 = vunpack.c.l.b16 %v840
    %v1438 = vunpack.c.h.b16 %v840
    %v1439 = vunpack.c.l.b16 %v841
    %v1440 = vunpack.c.h.b16 %v841
    %v1441 = vunpack.c.l.b16 %v842
    %v1442 = vunpack.c.h.b16 %v842
    %v1443 = vunpack.c.l.b16 %v843
    %v1444 = vunpack.c.h.b16 %v843
    %v1445 = vunpack.c.l.b16 %v844
    %v1446 = vunpack.c.h.b16 %v844
    %v1447 = vunpack.c.l.b16 %v845
    %v1448 = vunpack.c.h.b16 %v845
    %v1449 = vunpack.c.l.b16 %v846
    %v1450 = vunpack.c.h.b16 %v846
    %v1451 = vunpack.c.l.b16 %v847
    %v1452 = vunpack.c.h.b16 %v847
    %v1453 = vunpack.c.l.b16 %v848
    %v1454 = vunpack.c.h.b16 %v848
    %v1455 = vunpack.c.l.b16 %v849
    %v1456 = vunpack.c.h.b16 %v849
    %v1457 = vunpack.c.l.b16 %v850
    %v1458 = vunpack.c.h.b16 %v850
    %v1459 = vunpack.c.l.b16 %v851
    %v1460 = vunpack.c.h.b16 %v851
    %v1461 = vunpack.c.l.b16 %v852
    %v1462 = vunpack.c.h.b16 %v852
    %v1463 = vunpack.c.l.b16 %v853
    %v1464 = vunpack.c.h.b16 %v853
    %v1465 = vunpack.c.l.b16 %v854
    %v1466 = vunpack.c.h.b16 %v854
    %v1467 = vunpack.c.l.b16 %v855
    %v1468 = vunpack.c.h.b16 %v855
    %v1469 = vunpack.c.l.b16 %v856
    %v1470 = vunpack.c.h.b16 %v856
    %v1471 = vunpack.c.l.b16 %v857
    %v1472 = vunpack.c.h.b16 %v857
    %v1473 = vunpack.c.l.b16 %v858
    %v1474 = vunpack.c.h.b16 %v858
    %v1475 = vunpack.c.l.b16 %v859
    %v1476 = vunpack.c.h.b16 %v859
    %v1477 = vunpack.c.l.b16 %v860
    %v1478 = vunpack.c.h.b16 %v860
    %v1479 = vunpack.c.l.b16 %v861
    %v1480 = vunpack.c.h.b16 %v861
    %v1481 = vunpack.c.l.b16 %v862
    %v1482 = vunpack.c.h.b16 %v862
    %v1483 = vunpack.c.l.b16 %v863
    %v1484 = vunpack.c.h.b16 %v863
    %v1485 = vunpack.c.l.b16 %v864
    %v1486 = vunpack.c.h.b16 %v864
    %v1487 = vunpack.c.l.b16 %v865
    %v1488 = vunpack.c.h.b16 %v865
    %v1489 = vunpack.c.l.b16 %v866
    %v1490 = vunpack.c.h.b16 %v866
    %v1491 = vunpack.c.l.b16 %v867
    %v1492 = vunpack.c.h.b16 %v867
    %v1493 = vunpack.c.l.b16 %v868
    %v1494 = vunpack.c.h.b16 %v868
    %v1495 = vunpack.c.l.b16 %v869
    %v1496 = vunpack.c.h.b16 %v869
    %v1497 = vunpack.c.l.b16 %v870
    %v1498 = vunpack.c.h.b16 %v870
    %v1499 = vunpack.c.l.b16 %v871
    %v1500 = vunpack.c.h.b16 %v871
    %v1501 = vunpack.c.l.b16 %v872
    %v1502 = vunpack.c.h.b16 %v872
    %v1503 = vunpack.c.l.b16 %v873
    %v1504 = vunpack.c.h.b16 %v873
    %v1505 = vunpack.c.l.b16 %v874
    %v1506 = vunpack.c.h.b16 %v874
    %v1507 = vunpack.c.l.b16 %v875
    %v1508 = vunpack.c.h.b16 %v875
    %v1509 = vunpack.c.l.b16 %v876
    %v1510 = vunpack.c.h.b16 %v876
    %v1511 = vunpack.c.l.b16 %v877
    %v1512 = vunpack.c.h.b16 %v877
    %v1513 = vunpack.c.l.b16 %v878
    %v1514 = vunpack.c.h.b16 %v878
    %v1515 = vunpack.c.l.b16 %v879
    %v1516 = vunpack.c.h.b16 %v879
    %v1517 = vunpack.c.l.b16 %v880
    %v1518 = vunpack.c.h.b16 %v880
    %v1519 = vunpack.c.l.b16 %v881
    %v1520 = vunpack.c.h.b16 %v881
    %v1521 = vunpack.c.l.b16 %v882
    %v1522 = vunpack.c.h.b16 %v882
    %v1523 = vunpack.c.l.b16 %v883
    %v1524 = vunpack.c.h.b16 %v883
    %v1525 = vunpack.c.l.b16 %v884
    %v1526 = vunpack.c.h.b16 %v884
    %v1527 = vunpack.c.l.b16 %v885
    %v1528 = vunpack.c.h.b16 %v885
    %v1529 = vunpack.c.l.b16 %v886
    %v1530 = vunpack.c.h.b16 %v886
    %v1531 = vunpack.c.l.b16 %v887
    %v1532 = vunpack.c.h.b16 %v887
    %v1533 = vunpack.c.l.b16 %v888
    %v1534 = vunpack.c.h.b16 %v888
    %v1535 = vunpack.c.l.b16 %v889
    %v1536 = vunpack.c.h.b16 %v889
    %v1537 = vunpack.c.l.b16 %v890
    %v1538 = vunpack.c.h.b16 %v890
    %v1539 = vunpack.c.l.b16 %v891
    %v1540 = vunpack.c.h.b16 %v891
    %v1541 = vunpack.c.l.b16 %v892
    %v1542 = vunpack.c.h.b16 %v892
    %v1543 = vunpack.c.l.b16 %v893
    %v1544 = vunpack.c.h.b16 %v893
    %v1545 = vunpack.c.l.b16 %v894
    %v1546 = vunpack.c.h.b16 %v894
    %v1547 = vunpack.c.l.b16 %v895
    %v1548 = vunpack.c.h.b16 %v895
    %v1549 = vunpack.c.l.b16 %v896
    %v1550 = vunpack.c.h.b16 %v896
    %v1551 = vunpack.c.l.b16 %v897
    %v1552 = vunpack.c.h.b16 %v897
    %v1553 = vunpack.c.l.b16 %v898
    %v1554 = vunpack.c.h.b16 %v898
    %v1555 = vunpack.c.l.b16 %v899
    %v1556 = vunpack.c.h.b16 %v899
    %v1557 = vunpack.c.l.b16 %v900
    %v1558 = vunpack.c.h.b16 %v900
    %v1559 = vunpack.c.l.b16 %v901
    %v1560 = vunpack.c.h.b16 %v901
    %v1561 = vunpack.c.l.b16 %v902
    %v1562 = vunpack.c.h.b16 %v902
    %v1563 = vunpack.c.l.b16 %v903
    %v1564 = vunpack.c.h.b16 %v903
    %v1565 = vunpack.c.l.b16 %v904
    %v1566 = vunpack.c.h.b16 %v904
    %v1567 = vunpack.c.l.b16 %v905
    %v1568 = vunpack.c.h.b16 %v905
    %v1569 = vunpack.c.l.b16 %v906
    %v1570 = vunpack.c.h.b16 %v906
    %v1571 = vunpack.c.l.b16 %v907
    %v1572 = vunpack.c.h.b16 %v907
    %v1573 = vunpack.c.l.b16 %v908
    %v1574 = vunpack.c.h.b16 %v908
    %v1575 = vunpack.c.l.b16 %v909
    %v1576 = vunpack.c.h.b16 %v909
    %v1577 = vunpack.c.l.b16 %v910
    %v1578 = vunpack.c.h.b16 %v910
    %v1579 = vunpack.c.l.b16 %v911
    %v1580 = vunpack.c.h.b16 %v911
    %v1581 = vunpack.c.l.b16 %v912
    %v1582 = vunpack.c.h.b16 %v912
    %v1583 = vunpack.c.l.b16 %v913
    %v1584 = vunpack.c.h.b16 %v913
    %v1585 = vunpack.c.l.b16 %v914
    %v1586 = vunpack.c.h.b16 %v914
    %v1587 = vunpack.c.l.b16 %v915
    %v1588 = vunpack.c.h.b16 %v915
    %v1589 = vunpack.c.l.b16 %v916
    %v1590 = vunpack.c.h.b16 %v916
    %v1591 = vunpack.c.l.b16 %v917
    %v1592 = vunpack.c.h.b16 %v917
    %v1593 = vunpack.c.l.b16 %v918
    %v1594 = vunpack.c.h.b16 %v918
    %v1595 = vunpack.c.l.b16 %v919
    %v1596 = vunpack.c.h.b16 %v919
    %v1597 = vunpack.c.l.b16 %v920
    %v1598 = vunpack.c.h.b16 %v920
    %v1599 = vunpack.c.l.b16 %v921
    %v1600 = vunpack.c.h.b16 %v921
    %v1601 = vunpack.c.l.b16 %v922
    %v1602 = vunpack.c.h.b16 %v922
    %v1603 = vunpack.c.l.b16 %v923
    %v1604 = vunpack.c.h.b16 %v923
    %v1605 = vunpack.c.l.b16 %v924
    %v1606 = vunpack.c.h.b16 %v924
    %v1607 = vunpack.c.l.b16 %v925
    %v1608 = vunpack.c.h.b16 %v925
    %v1609 = vunpack.c.l.b16 %v926
    %v1610 = vunpack.c.h.b16 %v926
    %v1611 = vunpack.c.l.b16 %v927
    %v1612 = vunpack.c.h.b16 %v927
    %v1613 = vunpack.c.l.b16 %v928
    %v1614 = vunpack.c.h.b16 %v928
    %v1615 = vunpack.c.l.b16 %v929
    %v1616 = vunpack.c.h.b16 %v929
    %v1617 = vunpack.c.l.b16 %v930
    %v1618 = vunpack.c.h.b16 %v930
    %v1619 = vunpack.c.l.b16 %v931
    %v1620 = vunpack.c.h.b16 %v931
    %v1621 = vunpack.c.l.b16 %v932
    %v1622 = vunpack.c.h.b16 %v932
    %v1623 = vunpack.c.l.b16 %v933
    %v1624 = vunpack.c.h.b16 %v933
    %v1625 = vunpack.c.l.b16 %v934
    %v1626 = vunpack.c.h.b16 %v934
    %v1627 = vunpack.c.l.b16 %v935
    %v1628 = vunpack.c.h.b16 %v935
    %v1629 = vunpack.c.l.b16 %v936
    %v1630 = vunpack.c.h.b16 %v936
    %v1631 = vunpack.c.l.b16 %v937
    %v1632 = vunpack.c.h.b16 %v937
    %v1633 = vunpack.c.l.b16 %v938
    %v1634 = vunpack.c.h.b16 %v938
    %v1635 = vunpack.c.l.b16 %v939
    %v1636 = vunpack.c.h.b16 %v939
    %v1637 = vunpack.c.l.b16 %v940
    %v1638 = vunpack.c.h.b16 %v940
    %v1639 = vunpack.c.l.b16 %v941
    %v1640 = vunpack.c.h.b16 %v941
    %v1641 = vunpack.c.l.b16 %v942
    %v1642 = vunpack.c.h.b16 %v942
    %v1643 = vunpack.c.l.b16 %v943
    %v1644 = vunpack.c.h.b16 %v943
    %v1645 = vunpack.c.l.b16 %v944
    %v1646 = vunpack.c.h.b16 %v944
    %v1647 = vunpack.c.l.b16 %v945
    %v1648 = vunpack.c.h.b16 %v945
    %v1649 = vunpack.c.l.b16 %v946
    %v1650 = vunpack.c.h.b16 %v946
    %v1651 = vunpack.c.l.b16 %v947
    %v1652 = vunpack.c.h.b16 %v947
    %v1653 = vunpack.c.l.b16 %v948
    %v1654 = vunpack.c.h.b16 %v948
    %v1655 = vunpack.c.l.b16 %v949
    %v1656 = vunpack.c.h.b16 %v949
    %v1657 = vunpack.c.l.b16 %v950
    %v1658 = vunpack.c.h.b16 %v950
    %v1659 = vunpack.c.l.b16 %v951
    %v1660 = vunpack.c.h.b16 %v951
    %v1661 = vunpack.c.l.b16 %v952
    %v1662 = vunpack.c.h.b16 %v952
    %v1663 = vunpack.c.l.b16 %v953
    %v1664 = vunpack.c.h.b16 %v953
    %v1665 = vunpack.c.l.b16 %v954
    %v1666 = vunpack.c.h.b16 %v954
    %v1667 = vunpack.c.l.b16 %v955
    %v1668 = vunpack.c.h.b16 %v955
    %v1669 = vunpack.c.l.b16 %v956
    %v1670 = vunpack.c.h.b16 %v956
    %v1671 = vunpack.c.l.b16 %v957
    %v1672 = vunpack.c.h.b16 %v957
    %v1673 = vunpack.c.l.b16 %v958
    %v1674 = vunpack.c.h.b16 %v958
    %v1675 = vunpack.c.l.b16 %v959
    %v1676 = vunpack.c.h.b16 %v959
    %v1677 = vunpack.c.l.b16 %v960
    %v1678 = vunpack.c.h.b16 %v960
    %v1679 = vunpack.c.l.b16 %v961
    %v1680 = vunpack.c.h.b16 %v961
    %v1681 = vunpack.c.l.b16 %v962
    %v1682 = vunpack.c.h.b16 %v962
    %v1683 = vunpack.c.l.b16 %v963
    %v1684 = vunpack.c.h.b16 %v963
    %v1685 = vunpack.c.l.b16 %v964
    %v1686 = vunpack.c.h.b16 %v964
    %v1687 = vunpack.c.l.b16 %v965
    %v1688 = vunpack.c.h.b16 %v965
    %v1689 = vunpack.c.l.b16 %v966
    %v1690 = vunpack.c.h.b16 %v966
    %v1691 = vunpack.c.l.b16 %v967
    %v1692 = vunpack.c.h.b16 %v967
    %v1693 = vunpack.c.l.b16 %v968
    %v1694 = vunpack.c.h.b16 %v968
    %v1695 = vunpack.c.l.b16 %v969
    %v1696 = vunpack.c.h.b16 %v969
    %v1697 = vunpack.c.l.b16 %v970
    %v1698 = vunpack.c.h.b16 %v970
    %v1699 = vunpack.c.l.b16 %v971
    %v1700 = vunpack.c.h.b16 %v971
    %v1701 = vunpack.c.l.b16 %v972
    %v1702 = vunpack.c.h.b16 %v972
    %v1703 = vunpack.c.l.b16 %v973
    %v1704 = vunpack.c.h.b16 %v973
    %v1705 = vunpack.c.l.b16 %v974
    %v1706 = vunpack.c.h.b16 %v974
    %v1707 = vunpack.c.l.b16 %v975
    %v1708 = vunpack.c.h.b16 %v975
    %v1709 = vunpack.c.l.b16 %v976
    %v1710 = vunpack.c.h.b16 %v976
    %v1711 = vunpack.c.l.b16 %v977
    %v1712 = vunpack.c.h.b16 %v977
    %v1713 = vunpack.c.l.b16 %v978
    %v1714 = vunpack.c.h.b16 %v978
    %v1715 = vunpack.c.l.b16 %v979
    %v1716 = vunpack.c.h.b16 %v979
    %v1717 = vunpack.c.l.b16 %v980
    %v1718 = vunpack.c.h.b16 %v980
    %v1719 = vunpack.c.l.b16 %v981
    %v1720 = vunpack.c.h.b16 %v981
    %v1721 = vunpack.c.l.b16 %v982
    %v1722 = vunpack.c.h.b16 %v982
    %v1723 = vunpack.c.l.b16 %v983
    %v1724 = vunpack.c.h.b16 %v983
    %v1725 = vunpack.c.l.b16 %v984
    %v1726 = vunpack.c.h.b16 %v984
    %v1727 = vunpack.c.l.b16 %v985
    %v1728 = vunpack.c.h.b16 %v985
    %v1729 = vunpack.c.l.b16 %v986
    %v1730 = vunpack.c.h.b16 %v986
    %v1731 = vunpack.c.l.b16 %v987
    %v1732 = vunpack.c.h.b16 %v987
    %v1733 = vunpack.c.l.b16 %v988
    %v1734 = vunpack.c.h.b16 %v988
    %v1735 = vunpack.c.l.b16 %v989
    %v1736 = vunpack.c.h.b16 %v989
    %v1737 = vunpack.c.l.b16 %v990
    %v1738 = vunpack.c.h.b16 %v990
    %v1739 = vunpack.c.l.b16 %v991
    %v1740 = vunpack.c.h.b16 %v991
    %v1741 = vunpack.c.l.b16 %v992
    %v1742 = vunpack.c.h.b16 %v992
    %v1743 = vunpack.c.l.b16 %v993
    %v1744 = vunpack.c.h.b16 %v993
    %v1745 = vunpack.c.l.b16 %v994
    %v1746 = vunpack.c.h.b16 %v994
    %v1747 = vunpack.c.l.b16 %v995
    %v1748 = vunpack.c.h.b16 %v995
    %v1749 = vunpack.c.l.b16 %v996
    %v1750 = vunpack.c.h.b16 %v996
    %v1751 = vunpack.c.l.b16 %v997
    %v1752 = vunpack.c.h.b16 %v997
    %v1753 = vunpack.c.l.b16 %v998
    %v1754 = vunpack.c.h.b16 %v998
    %v1755 = vunpack.c.l.b16 %v999
    %v1756 = vunpack.c.h.b16 %v999
    %v1757 = vunpack.c.l.b16 %v1000
    %v1758 = vunpack.c.h.b16 %v1000
    %v1759 = vunpack.c.l.b16 %v1001
    %v1760 = vunpack.c.h.b16 %v1001
    %v1761 = vunpack.c.l.b16 %v1002
    %v1762 = vunpack.c.h.b16 %v1002
    %v1763 = vunpack.c.l.b16 %v1003
    %v1764 = vunpack.c.h.b16 %v1003
    %v1765 = vunpack.c.l.b16 %v1004
    %v1766 = vunpack.c.h.b16 %v1004
    %v1767 = vunpack.c.l.b16 %v1005
    %v1768 = vunpack.c.h.b16 %v1005
    %v1769 = vunpack.c.l.b16 %v1006
    %v1770 = vunpack.c.h.b16 %v1006
    %v1771 = vunpack.c.l.b16 %v1007
    %v1772 = vunpack.c.h.b16 %v1007
    %v1773 = vunpack.c.l.b16 %v1008
    %v1774 = vunpack.c.h.b16 %v1008
    %v1775 = vunpack.c.l.b16 %v1009
    %v1776 = vunpack.c.h.b16 %v1009
    %v1777 = vunpack.c.l.b16 %v1010
    %v1778 = vunpack.c.h.b16 %v1010
    %v1779 = vunpack.c.l.b16 %v1011
    %v1780 = vunpack.c.h.b16 %v1011
    %v1781 = vunpack.c.l.b16 %v1012
    %v1782 = vunpack.c.h.b16 %v1012
    %v1783 = vunpack.c.l.b16 %v1013
    %v1784 = vunpack.c.h.b16 %v1013
    %v1785 = vunpack.c.l.b16 %v1014
    %v1786 = vunpack.c.h.b16 %v1014
    %v1787 = vunpack.c.l.b16 %v1015
    %v1788 = vunpack.c.h.b16 %v1015
    %v1789 = vunpack.c.l.b16 %v1016
    %v1790 = vunpack.c.h.b16 %v1016
    %v1791 = vunpack.c.l.b16 %v1017
    %v1792 = vunpack.c.h.b16 %v1017
    %v1793 = vunpack.c.l.b16 %v1018
    %v1794 = vunpack.c.h.b16 %v1018
    %v1795 = vunpack.c.l.b16 %v1019
    %v1796 = vunpack.c.h.b16 %v1019
    %v1797 = vunpack.c.l.b16 %v1020
    %v1798 = vunpack.c.h.b16 %v1020
    %v1799 = vunpack.c.l.b16 %v1021
    %v1800 = vunpack.c.h.b16 %v1021
    %v1801 = vunpack.c.l.b16 %v1022
    %v1802 = vunpack.c.h.b16 %v1022
    %v1803 = vunpack.c.l.b16 %v1023
    %v1804 = vunpack.c.h.b16 %v1023
    %v1805 = vunpack.c.l.b16 %v1024
    %v1806 = vunpack.c.h.b16 %v1024
    %v1807 = vunpack.c.l.b16 %v1025
    %v1808 = vunpack.c.h.b16 %v1025
    %v1809 = vunpack.c.l.b16 %v1026
    %v1810 = vunpack.c.h.b16 %v1026
    %v1811 = vunpack.c.l.b16 %v1027
    %v1812 = vunpack.c.h.b16 %v1027
    %v1813 = vunpack.c.l.b16 %v1028
    %v1814 = vunpack.c.h.b16 %v1028
    %v1815 = vunpack.c.l.b16 %v1029
    %v1816 = vunpack.c.h.b16 %v1029
    %v1817 = vunpack.c.l.b16 %v1030
    %v1818 = vunpack.c.h.b16 %v1030
    %v1819 = vunpack.c.l.b16 %v1031
    %v1820 = vunpack.c.h.b16 %v1031
    %v1821 = vunpack.c.l.b16 %v1032
    %v1822 = vunpack.c.h.b16 %v1032
    %v1823 = vunpack.c.l.b16 %v1033
    %v1824 = vunpack.c.h.b16 %v1033
    %v1825 = vunpack.c.l.b16 %v1034
    %v1826 = vunpack.c.h.b16 %v1034
    %v1827 = vunpack.c.l.b16 %v1035
    %v1828 = vunpack.c.h.b16 %v1035
    %v1829 = vunpack.c.l.b16 %v1036
    %v1830 = vunpack.c.h.b16 %v1036
    %v1831 = vunpack.c.l.b16 %v1037
    %v1832 = vunpack.c.h.b16 %v1037
    %v1833 = vunpack.c.l.b16 %v1038
    %v1834 = vunpack.c.h.b16 %v1038
    %v1835 = vunpack.c.l.b16 %v1039
    %v1836 = vunpack.c.h.b16 %v1039
    %v1837 = vunpack.c.l.b16 %v1040
    %v1838 = vunpack.c.h.b16 %v1040
    %v1839 = vunpack.c.l.b16 %v1041
    %v1840 = vunpack.c.h.b16 %v1041
    %v1841 = vunpack.c.l.b16 %v1042
    %v1842 = vunpack.c.h.b16 %v1042
    %v1843 = vunpack.c.l.b16 %v1043
    %v1844 = vunpack.c.h.b16 %v1043
    %v1845 = vunpack.c.l.b16 %v1044
    %v1846 = vunpack.c.h.b16 %v1044
    %v1847 = vunpack.c.l.b16 %v1045
    %v1848 = vunpack.c.h.b16 %v1045
    %v1849 = vunpack.c.l.b16 %v1046
    %v1850 = vunpack.c.h.b16 %v1046
    %v1851 = vunpack.c.l.b16 %v1047
    %v1852 = vunpack.c.h.b16 %v1047
    %v1853 = vunpack.c.l.b16 %v1048
    %v1854 = vunpack.c.h.b16 %v1048
    %v1855 = vunpack.c.l.b16 %v1049
    %v1856 = vunpack.c.h.b16 %v1049
    %v1857 = vunpack.c.l.b16 %v1050
    %v1858 = vunpack.c.h.b16 %v1050
    %v1859 = vunpack.c.l.b16 %v1051
    %v1860 = vunpack.c.h.b16 %v1051
    %v1861 = vunpack.c.l.b16 %v1052
    %v1862 = vunpack.c.h.b16 %v1052
    %v1863 = vpack.c.b16 %v1359, %v1351
    %v1864 = vpack.c.b16 %v1360, %v1352
    %v1865 = vpack.c.b16 %v1361, %v1353
    %v1866 = vpack.c.b16 %v1362, %v1354
    %v1867 = vpack.c.b16 %v1363, %v1355
    %v1868 = vpack.c.b16 %v1364, %v1356
    %v1869 = vpack.c.b16 %v1365, %v1357
    %v1870 = vpack.c.b16 %v1366, %v1358
    %v1871 = vpack.c.b16 %v1375, %v1367
    %v1872 = vpack.c.b16 %v1376, %v1368
    %v1873 = vpack.c.b16 %v1377, %v1369
    %v1874 = vpack.c.b16 %v1378, %v1370
    %v1875 = vpack.c.b16 %v1379, %v1371
    %v1876 = vpack.c.b16 %v1380, %v1372
    %v1877 = vpack.c.b16 %v1381, %v1373
    %v1878 = vpack.c.b16 %v1382, %v1374
    %v1879 = vpack.c.b16 %v1391, %v1383
    %v1880 = vpack.c.b16 %v1392, %v1384
    %v1881 = vpack.c.b16 %v1393, %v1385
    %v1882 = vpack.c.b16 %v1394, %v1386
    %v1883 = vpack.c.b16 %v1395, %v1387
    %v1884 = vpack.c.b16 %v1396, %v1388
    %v1885 = vpack.c.b16 %v1397, %v1389
    %v1886 = vpack.c.b16 %v1398, %v1390
    %v1887 = vpack.c.b16 %v1407, %v1399
    %v1888 = vpack.c.b16 %v1408, %v1400
    %v1889 = vpack.c.b16 %v1409, %v1401
    %v1890 = vpack.c.b16 %v1410, %v1402
    %v1891 = vpack.c.b16 %v1411, %v1403
    %v1892 = vpack.c.b16 %v1412, %v1404
    %v1893 = vpack.c.b16 %v1413, %v1405
    %v1894 = vpack.c.b16 %v1414, %v1406
    %v1895 = vpack.c.b16 %v1423, %v1415
    %v1896 = vpack.c.b16 %v1424, %v1416
    %v1897 = vpack.c.b16 %v1425, %v1417
    %v1898 = vpack.c.b16 %v1426, %v1418
    %v1899 = vpack.c.b16 %v1427, %v1419
    %v1900 = vpack.c.b16 %v1428, %v1420
    %v1901 = vpack.c.b16 %v1429, %v1421
    %v1902 = vpack.c.b16 %v1430, %v1422
    %v1903 = vpack.c.b16 %v1439, %v1431
    %v1904 = vpack.c.b16 %v1440, %v1432
    %v1905 = vpack.c.b16 %v1441, %v1433
    %v1906 = vpack.c.b16 %v1442, %v1434
    %v1907 = vpack.c.b16 %v1443, %v1435
    %v1908 = vpack.c.b16 %v1444, %v1436
    %v1909 = vpack.c.b16 %v1445, %v1437
    %v1910 = vpack.c.b16 %v1446, %v1438
    %v1911 = vpack.c.b16 %v1455, %v1447
    %v1912 = vpack.c.b16 %v1456, %v1448
    %v1913 = vpack.c.b16 %v1457, %v1449
    %v1914 = vpack.c.b16 %v1458, %v1450
    %v1915 = vpack.c.b16 %v1459, %v1451
    %v1916 = vpack.c.b16 %v1460, %v1452
    %v1917 = vpack.c.b16 %v1461, %v1453
    %v1918 = vpack.c.b16 %v1462, %v1454
    %v1919 = vpack.c.b16 %v1471, %v1463
    %v1920 = vpack.c.b16 %v1472, %v1464
    %v1921 = vpack.c.b16 %v1473, %v1465
    %v1922 = vpack.c.b16 %v1474, %v1466
    %v1923 = vpack.c.b16 %v1475, %v1467
    %v1924 = vpack.c.b16 %v1476, %v1468
    %v1925 = vpack.c.b16 %v1477, %v1469
    %v1926 = vpack.c.b16 %v1478, %v1470
    %v1927 = vpack.c.b16 %v1487, %v1479
    %v1928 = vpack.c.b16 %v1488, %v1480
    %v1929 = vpack.c.b16 %v1489, %v1481
    %v1930 = vpack.c.b16 %v1490, %v1482
    %v1931 = vpack.c.b16 %v1491, %v1483
    %v1932 = vpack.c.b16 %v1492, %v1484
    %v1933 = vpack.c.b16 %v1493, %v1485
    %v1934 = vpack.c.b16 %v1494, %v1486
    %v1935 = vpack.c.b16 %v1503, %v1495
    %v1936 = vpack.c.b16 %v1504, %v1496
    %v1937 = vpack.c.b16 %v1505, %v1497
    %v1938 = vpack.c.b16 %v1506, %v1498
    %v1939 = vpack.c.b16 %v1507, %v1499
    %v1940 = vpack.c.b16 %v1508, %v1500
    %v1941 = vpack.c.b16 %v1509, %v1501
    %v1942 = vpack.c.b16 %v1510, %v1502
    %v1943 = vpack.c.b16 %v1519, %v1511
    %v1944 = vpack.c.b16 %v1520, %v1512
    %v1945 = vpack.c.b16 %v1521, %v1513
    %v1946 = vpack.c.b16 %v1522, %v1514
    %v1947 = vpack.c.b16 %v1523, %v1515
    %v1948 = vpack.c.b16 %v1524, %v1516
    %v1949 = vpack.c.b16 %v1525, %v1517
    %v1950 = vpack.c.b16 %v1526, %v1518
    %v1951 = vpack.c.b16 %v1535, %v1527
    %v1952 = vpack.c.b16 %v1536, %v1528
    %v1953 = vpack.c.b16 %v1537, %v1529
    %v1954 = vpack.c.b16 %v1538, %v1530
    %v1955 = vpack.c.b16 %v1539, %v1531
    %v1956 = vpack.c.b16 %v1540, %v1532
    %v1957 = vpack.c.b16 %v1541, %v1533
    %v1958 = vpack.c.b16 %v1542, %v1534
    %v1959 = vpack.c.b16 %v1551, %v1543
    %v1960 = vpack.c.b16 %v1552, %v1544
    %v1961 = vpack.c.b16 %v1553, %v1545
    %v1962 = vpack.c.b16 %v1554, %v1546
    %v1963 = vpack.c.b16 %v1555, %v1547
    %v1964 = vpack.c.b16 %v1556, %v1548
    %v1965 = vpack.c.b16 %v1557, %v1549
    %v1966 = vpack.c.b16 %v1558, %v1550
    %v1967 = vpack.c.b16 %v1567, %v1559
    %v1968 = vpack.c.b16 %v1568, %v1560
    %v1969 = vpack.c.b16 %v1569, %v1561
    %v1970 = vpack.c.b16 %v1570, %v1562
    %v1971 = vpack.c.b16 %v1571, %v1563
    %v1972 = vpack.c.b16 %v1572, %v1564
    %v1973 = vpack.c.b16 %v1573, %v1565
    %v1974 = vpack.c.b16 %v1574, %v1566
    %v1975 = vpack.c.b16 %v1583, %v1575
    %v1976 = vpack.c.b16 %v1584, %v1576
    %v1977 = vpack.c.b16 %v1585, %v1577
    %v1978 = vpack.c.b16 %v1586, %v1578
    %v1979 = vpack.c.b16 %v1587, %v1579
    %v1980 = vpack.c.b16 %v1588, %v1580
    %v1981 = vpack.c.b16 %v1589, %v1581
    %v1982 = vpack.c.b16 %v1590, %v1582
    %v1983 = vpack.c.b16 %v1599, %v1591
    %v1984 = vpack.c.b16 %v1600, %v1592
    %v1985 = vpack.c.b16 %v1601, %v1593
    %v1986 = vpack.c.b16 %v1602, %v1594
    %v1987 = vpack.c.b16 %v1603, %v1595
    %v1988 = vpack.c.b16 %v1604, %v1596
    %v1989 = vpack.c.b16 %v1605, %v1597
    %v1990 = vpack.c.b16 %v1606, %v1598
    %v1991 = vpack.c.b16 %v1615, %v1607
    %v1992 = vpack.c.b16 %v1616, %v1608
    %v1993 = vpack.c.b16 %v1617, %v1609
    %v1994 = vpack.c.b16 %v1618, %v1610
    %v1995 = vpack.c.b16 %v1619, %v1611
    %v1996 = vpack.c.b16 %v1620, %v1612
    %v1997 = vpack.c.b16 %v1621, %v1613
    %v1998 = vpack.c.b16 %v1622, %v1614
    %v1999 = vpack.c.b16 %v1631, %v1623
    %v2000 = vpack.c.b16 %v1632, %v1624
    %v2001 = vpack.c.b16 %v1633, %v1625
    %v2002 = vpack.c.b16 %v1634, %v1626
    %v2003 = vpack.c.b16 %v1635, %v1627
    %v2004 = vpack.c.b16 %v1636, %v1628
    %v2005 = vpack.c.b16 %v1637, %v1629
    %v2006 = vpack.c.b16 %v1638, %v1630
    %v2007 = vpack.c.b16 %v1647, %v1639
    %v2008 = vpack.c.b16 %v1648, %v1640
    %v2009 = vpack.c.b16 %v1649, %v1641
    %v2010 = vpack.c.b16 %v1650, %v1642
    %v2011 = vpack.c.b16 %v1651, %v1643
    %v2012 = vpack.c.b16 %v1652, %v1644
    %v2013 = vpack.c.b16 %v1653, %v1645
    %v2014 = vpack.c.b16 %v1654, %v1646
    %v2015 = vpack.c.b16 %v1663, %v1655
    %v2016 = vpack.c.b16 %v1664, %v1656
    %v2017 = vpack.c.b16 %v1665, %v1657
    %v2018 = vpack.c.b16 %v1666, %v1658
    %v2019 = vpack.c.b16 %v1667, %v1659
    %v2020 = vpack.c.b16 %v1668, %v1660
    %v2021 = vpack.c.b16 %v1669, %v1661
    %v2022 = vpack.c.b16 %v1670, %v1662
    %v2023 = vpack.c.b16 %v1679, %v1671
    %v2024 = vpack.c.b16 %v1680, %v1672
    %v2025 = vpack.c.b16 %v1681, %v1673
    %v2026 = vpack.c.b16 %v1682, %v1674
    %v2027 = vpack.c.b16 %v1683, %v1675
    %v2028 = vpack.c.b16 %v1684, %v1676
    %v2029 = vpack.c.b16 %v1685, %v1677
    %v2030 = vpack.c.b16 %v1686, %v1678
    %v2031 = vpack.c.b16 %v1695, %v1687
    %v2032 = vpack.c.b16 %v1696, %v1688
    %v2033 = vpack.c.b16 %v1697, %v1689
    %v2034 = vpack.c.b16 %v1698, %v1690
    %v2035 = vpack.c.b16 %v1699, %v1691
    %v2036 = vpack.c.b16 %v1700, %v1692
    %v2037 = vpack.c.b16 %v1701, %v1693
    %v2038 = vpack.c.b16 %v1702, %v1694
    %v2039 = vpack.c.b16 %v1711, %v1703
    %v2040 = vpack.c.b16 %v1712, %v1704
    %v2041 = vpack.c.b16 %v1713, %v1705
    %v2042 = vpack.c.b16 %v1714, %v1706
    %v2043 = vpack.c.b16 %v1715, %v1707
    %v2044 = vpack.c.b16 %v1716, %v1708
    %v2045 = vpack.c.b16 %v1717, %v1709
    %v2046 = vpack.c.b16 %v1718, %v1710
    %v2047 = vpack.c.b16 %v1727, %v1719
    %v2048 = vpack.c.b16 %v1728, %v1720
    %v2049 = vpack.c.b16 %v1729, %v1721
    %v2050 = vpack.c.b16 %v1730, %v1722
    %v2051 = vpack.c.b16 %v1731, %v1723
    %v2052 = vpack.c.b16 %v1732, %v1724
    %v2053 = vpack.c.b16 %v1733, %v1725
    %v2054 = vpack.c.b16 %v1734, %v1726
    %v2055 = vpack.c.b16 %v1743, %v1735
    %v2056 = vpack.c.b16 %v1744, %v1736
    %v2057 = vpack.c.b16 %v1745, %v1737
    %v2058 = vpack.c.b16 %v1746, %v1738
    %v2059 = vpack.c.b16 %v1747, %v1739
    %v2060 = vpack.c.b16 %v1748, %v1740
    %v2061 = vpack.c.b16 %v1749, %v1741
    %v2062 = vpack.c.b16 %v1750, %v1742
    %v2063 = vpack.c.b16 %v1759, %v1751
    %v2064 = vpack.c.b16 %v1760, %v1752
    %v2065 = vpack.c.b16 %v1761, %v1753
    %v2066 = vpack.c.b16 %v1762, %v1754
    %v2067 = vpack.c.b16 %v1763, %v1755
    %v2068 = vpack.c.b16 %v1764, %v1756
    %v2069 = vpack.c.b16 %v1765, %v1757
    %v2070 = vpack.c.b16 %v1766, %v1758
    %v2071 = vpack.c.b16 %v1775, %v1767
    %v2072 = vpack.c.b16 %v1776, %v1768
    %v2073 = vpack.c.b16 %v1777, %v1769
    %v2074 = vpack.c.b16 %v1778, %v1770
    %v2075 = vpack.c.b16 %v1779, %v1771
    %v2076 = vpack.c.b16 %v1780, %v1772
    %v2077 = vpack.c.b16 %v1781, %v1773
    %v2078 = vpack.c.b16 %v1782, %v1774
    %v2079 = vpack.c.b16 %v1791, %v1783
    %v2080 = vpack.c.b16 %v1792, %v1784
    %v2081 = vpack.c.b16 %v1793, %v1785
    %v2082 = vpack.c.b16 %v1794, %v1786
    %v2083 = vpack.c.b16 %v1795, %v1787
    %v2084 = vpack.c.b16 %v1796, %v1788
    %v2085 = vpack.c.b16 %v1797, %v1789
    %v2086 = vpack.c.b16 %v1798, %v1790
    %v2087 = vpack.c.b16 %v1807, %v1799
    %v2088 = vpack.c.b16 %v1808, %v1800
    %v2089 = vpack.c.b16 %v1809, %v1801
    %v2090 = vpack.c.b16 %v1810, %v1802
    %v2091 = vpack.c.b16 %v1811, %v1803
    %v2092 = vpack.c.b16 %v1812, %v1804
    %v2093 = vpack.c.b16 %v1813, %v1805
    %v2094 = vpack.c.b16 %v1814, %v1806
    %v2095 = vpack.c.b16 %v1823, %v1815
    %v2096 = vpack.c.b16 %v1824, %v1816
    %v2097 = vpack.c.b16 %v1825, %v1817
    %v2098 = vpack.c.b16 %v1826, %v1818
    %v2099 = vpack.c.b16 %v1827, %v1819
    %v2100 = vpack.c.b16 %v1828, %v1820
    %v2101 = vpack.c.b16 %v1829, %v1821
    %v2102 = vpack.c.b16 %v1830, %v1822
    %v2103 = vpack.c.b16 %v1839, %v1831
    %v2104 = vpack.c.b16 %v1840, %v1832
    %v2105 = vpack.c.b16 %v1841, %v1833
    %v2106 = vpack.c.b16 %v1842, %v1834
    %v2107 = vpack.c.b16 %v1843, %v1835
    %v2108 = vpack.c.b16 %v1844, %v1836
    %v2109 = vpack.c.b16 %v1845, %v1837
    %v2110 = vpack.c.b16 %v1846, %v1838
    %v2111 = vpack.c.b16 %v1855, %v1847
    %v2112 = vpack.c.b16 %v1856, %v1848
    %v2113 = vpack.c.b16 %v1857, %v1849
    %v2114 = vpack.c.b16 %v1858, %v1850
    %v2115 = vpack.c.b16 %v1859, %v1851
    %v2116 = vpack.c.b16 %v1860, %v1852
    %v2117 = vpack.c.b16 %v1861, %v1853
    %v2118 = vpack.c.b16 %v1862, %v1854
    %2375 = vmatprep.subr.bf16.mxu0 %v1920
    %2376 = vmatpush1.bf16.msra.mxu0 %v1919
    %2377 = vmatprep.subr.bf16.mxu0 %v1912
    %2378 = vmatpush1.bf16.msra.mxu0 %v1911
    %2379 = vmatprep.subr.bf16.mxu0 %v1904
    %2380 = vmatpush1.bf16.msra.mxu0 %v1903
    %2381 = vmatprep.subr.bf16.mxu0 %v1896
    %2382 = vmatpush1.bf16.msra.mxu0 %v1895
    %2383 = vmatprep.subr.bf16.mxu0 %v1888
    %2384 = vmatpush1.bf16.msra.mxu0 %v1887
    %2385 = vmatprep.subr.bf16.mxu0 %v1880
    %2386 = vmatpush1.bf16.msra.mxu0 %v1879
    %2387 = vmatprep.subr.bf16.mxu0 %v1872
    %2388 = vmatpush1.bf16.msra.mxu0 %v1871
    %2389 = vmatprep.subr.bf16.mxu0 %v1864
    %2390 = vmatpush1.bf16.msra.mxu0 %v1863
    %2391 = vmatprep.subr.bf16.mxu0 %v1984
    %2392 = vmatpush2.bf16.msra.mxu0 %v1983
    %2393 = vmatprep.subr.bf16.mxu0 %v1976
    %2394 = vmatpush2.bf16.msra.mxu0 %v1975
    %2395 = vmatprep.subr.bf16.mxu0 %v1968
    %2396 = vmatpush2.bf16.msra.mxu0 %v1967
    %2397 = vmatprep.subr.bf16.mxu0 %v1960
    %2398 = vmatpush2.bf16.msra.mxu0 %v1959
    %2399 = vmatprep.subr.bf16.mxu0 %v1952
    %2400 = vmatpush2.bf16.msra.mxu0 %v1951
    %2401 = vmatprep.subr.bf16.mxu0 %v1944
    %2402 = vmatpush2.bf16.msra.mxu0 %v1943
    %2403 = vmatprep.subr.bf16.mxu0 %v1936
    %2404 = vmatpush2.bf16.msra.mxu0 %v1935
    %2405 = vmatprep.subr.bf16.mxu0 %v1928
    %2406 = vmatpush2.bf16.msra.mxu0 %v1927
    %2407 = vmatprep.mubr.bf16.mxu0 %v794
    %2408 = vmatmul.mubr.bf16.gmra.mxu0 %v793
    %v2409 = vpop.f32.mrf.mxu0
    %v2410 = vadd.f32 %v1058, %v2409
    %v2411 = vpop.f32.mrf.mxu0
    %v2412 = vadd.f32 %v1062, %v2411
    %v2413 = vpop.f32.mrf.mxu0
    %v2414 = vpop.f32.mrf.mxu0
    %2415 = vdwg.mxu0
    %2416 = vmatprep.subr.bf16.mxu0 %v2048
    %2417 = vmatpush1.bf16.msra.mxu0 %v2047
    %2418 = vmatprep.subr.bf16.mxu0 %v2040
    %2419 = vmatpush1.bf16.msra.mxu0 %v2039
    %2420 = vmatprep.subr.bf16.mxu0 %v2032
    %2421 = vmatpush1.bf16.msra.mxu0 %v2031
    %2422 = vmatprep.subr.bf16.mxu0 %v2024
    %2423 = vmatpush1.bf16.msra.mxu0 %v2023
    %2424 = vmatprep.subr.bf16.mxu0 %v2016
    %2425 = vmatpush1.bf16.msra.mxu0 %v2015
    %2426 = vmatprep.subr.bf16.mxu0 %v2008
    %2427 = vmatpush1.bf16.msra.mxu0 %v2007
    %2428 = vmatprep.subr.bf16.mxu0 %v2000
    %2429 = vmatpush1.bf16.msra.mxu0 %v1999
    %2430 = vmatprep.subr.bf16.mxu0 %v1992
    %2431 = vmatpush1.bf16.msra.mxu0 %v1991
    %2432 = vmatprep.subr.bf16.mxu0 %v2112
    %2433 = vmatpush2.bf16.msra.mxu0 %v2111
    %2434 = vmatprep.subr.bf16.mxu0 %v2104
    %2435 = vmatpush2.bf16.msra.mxu0 %v2103
    %2436 = vmatprep.subr.bf16.mxu0 %v2096
    %2437 = vmatpush2.bf16.msra.mxu0 %v2095
    %2438 = vmatprep.subr.bf16.mxu0 %v2088
    %2439 = vmatpush2.bf16.msra.mxu0 %v2087
    %2440 = vmatprep.subr.bf16.mxu0 %v2080
    %2441 = vmatpush2.bf16.msra.mxu0 %v2079
    %2442 = vmatprep.subr.bf16.mxu0 %v2072
    %2443 = vmatpush2.bf16.msra.mxu0 %v2071
    %2444 = vmatprep.subr.bf16.mxu0 %v2064
    %2445 = vmatpush2.bf16.msra.mxu0 %v2063
    %2446 = vmatprep.subr.bf16.mxu0 %v2056
    %2447 = vmatpush2.bf16.msra.mxu0 %v2055
    %2448 = vmatprep.mubr.bf16.mxu0 %v796
    %2449 = vmatmul.mubr.bf16.gmra.mxu0 %v795
    %v2450 = vpop.f32.mrf.mxu0
    %v2451 = vadd.f32 %v2410, %v2450
    %v2452 = vpop.f32.mrf.mxu0
    %v2453 = vadd.f32 %v2412, %v2452
    %v2454 = vpop.f32.mrf.mxu0
    %v2455 = vpop.f32.mrf.mxu0
    %2456 = vdwg.mxu0
    %2457 = vmatprep.subr.bf16.mxu0 %v1922
    %2458 = vmatpush1.bf16.msra.mxu0 %v1921
    %2459 = vmatprep.subr.bf16.mxu0 %v1914
    %2460 = vmatpush1.bf16.msra.mxu0 %v1913
    %2461 = vmatprep.subr.bf16.mxu0 %v1906
    %2462 = vmatpush1.bf16.msra.mxu0 %v1905
    %2463 = vmatprep.subr.bf16.mxu0 %v1898
    %2464 = vmatpush1.bf16.msra.mxu0 %v1897
    %2465 = vmatprep.subr.bf16.mxu0 %v1890
    %2466 = vmatpush1.bf16.msra.mxu0 %v1889
    %2467 = vmatprep.subr.bf16.mxu0 %v1882
    %2468 = vmatpush1.bf16.msra.mxu0 %v1881
    %2469 = vmatprep.subr.bf16.mxu0 %v1874
    %2470 = vmatpush1.bf16.msra.mxu0 %v1873
    %2471 = vmatprep.subr.bf16.mxu0 %v1866
    %2472 = vmatpush1.bf16.msra.mxu0 %v1865
    %2473 = vmatprep.subr.bf16.mxu0 %v1986
    %2474 = vmatpush2.bf16.msra.mxu0 %v1985
    %2475 = vmatprep.subr.bf16.mxu0 %v1978
    %2476 = vmatpush2.bf16.msra.mxu0 %v1977
    %2477 = vmatprep.subr.bf16.mxu0 %v1970
    %2478 = vmatpush2.bf16.msra.mxu0 %v1969
    %2479 = vmatprep.subr.bf16.mxu0 %v1962
    %2480 = vmatpush2.bf16.msra.mxu0 %v1961
    %2481 = vmatprep.subr.bf16.mxu0 %v1954
    %2482 = vmatpush2.bf16.msra.mxu0 %v1953
    %2483 = vmatprep.subr.bf16.mxu0 %v1946
    %2484 = vmatpush2.bf16.msra.mxu0 %v1945
    %2485 = vmatprep.subr.bf16.mxu0 %v1938
    %2486 = vmatpush2.bf16.msra.mxu0 %v1937
    %2487 = vmatprep.subr.bf16.mxu0 %v1930
    %2488 = vmatpush2.bf16.msra.mxu0 %v1929
    %2489 = vmatprep.mubr.bf16.mxu0 %v794
    %2490 = vmatmul.mubr.bf16.gmra.mxu0 %v793
    %v2491 = vpop.f32.mrf.mxu0
    %v2492 = vadd.f32 %v1066, %v2491
    %v2493 = vpop.f32.mrf.mxu0
    %v2494 = vadd.f32 %v1070, %v2493
    %v2495 = vpop.f32.mrf.mxu0
    %v2496 = vpop.f32.mrf.mxu0
    %2497 = vdwg.mxu0
    %2498 = vmatprep.subr.bf16.mxu0 %v2050
    %2499 = vmatpush1.bf16.msra.mxu0 %v2049
    %2500 = vmatprep.subr.bf16.mxu0 %v2042
    %2501 = vmatpush1.bf16.msra.mxu0 %v2041
    %2502 = vmatprep.subr.bf16.mxu0 %v2034
    %2503 = vmatpush1.bf16.msra.mxu0 %v2033
    %2504 = vmatprep.subr.bf16.mxu0 %v2026
    %2505 = vmatpush1.bf16.msra.mxu0 %v2025
    %2506 = vmatprep.subr.bf16.mxu0 %v2018
    %2507 = vmatpush1.bf16.msra.mxu0 %v2017
    %2508 = vmatprep.subr.bf16.mxu0 %v2010
    %2509 = vmatpush1.bf16.msra.mxu0 %v2009
    %2510 = vmatprep.subr.bf16.mxu0 %v2002
    %2511 = vmatpush1.bf16.msra.mxu0 %v2001
    %2512 = vmatprep.subr.bf16.mxu0 %v1994
    %2513 = vmatpush1.bf16.msra.mxu0 %v1993
    %2514 = vmatprep.subr.bf16.mxu0 %v2114
    %2515 = vmatpush2.bf16.msra.mxu0 %v2113
    %2516 = vmatprep.subr.bf16.mxu0 %v2106
    %2517 = vmatpush2.bf16.msra.mxu0 %v2105
    %2518 = vmatprep.subr.bf16.mxu0 %v2098
    %2519 = vmatpush2.bf16.msra.mxu0 %v2097
    %2520 = vmatprep.subr.bf16.mxu0 %v2090
    %2521 = vmatpush2.bf16.msra.mxu0 %v2089
    %2522 = vmatprep.subr.bf16.mxu0 %v2082
    %2523 = vmatpush2.bf16.msra.mxu0 %v2081
    %2524 = vmatprep.subr.bf16.mxu0 %v2074
    %2525 = vmatpush2.bf16.msra.mxu0 %v2073
    %2526 = vmatprep.subr.bf16.mxu0 %v2066
    %2527 = vmatpush2.bf16.msra.mxu0 %v2065
    %2528 = vmatprep.subr.bf16.mxu0 %v2058
    %2529 = vmatpush2.bf16.msra.mxu0 %v2057
    %2530 = vmatprep.mubr.bf16.mxu0 %v796
    %2531 = vmatmul.mubr.bf16.gmra.mxu0 %v795
    %v2532 = vpop.f32.mrf.mxu0
    %v2533 = vadd.f32 %v2492, %v2532
    %v2534 = vpop.f32.mrf.mxu0
    %v2535 = vadd.f32 %v2494, %v2534
    %v2536 = vpop.f32.mrf.mxu0
    %v2537 = vpop.f32.mrf.mxu0
    %2538 = vdwg.mxu0
    %2539 = vmatprep.subr.bf16.mxu0 %v1924
    %2540 = vmatpush1.bf16.msra.mxu0 %v1923
    %2541 = vmatprep.subr.bf16.mxu0 %v1916
    %2542 = vmatpush1.bf16.msra.mxu0 %v1915
    %2543 = vmatprep.subr.bf16.mxu0 %v1908
    %2544 = vmatpush1.bf16.msra.mxu0 %v1907
    %2545 = vmatprep.subr.bf16.mxu0 %v1900
    %2546 = vmatpush1.bf16.msra.mxu0 %v1899
    %2547 = vmatprep.subr.bf16.mxu0 %v1892
    %2548 = vmatpush1.bf16.msra.mxu0 %v1891
    %2549 = vmatprep.subr.bf16.mxu0 %v1884
    %2550 = vmatpush1.bf16.msra.mxu0 %v1883
    %2551 = vmatprep.subr.bf16.mxu0 %v1876
    %2552 = vmatpush1.bf16.msra.mxu0 %v1875
    %2553 = vmatprep.subr.bf16.mxu0 %v1868
    %2554 = vmatpush1.bf16.msra.mxu0 %v1867
    %2555 = vmatprep.subr.bf16.mxu0 %v1988
    %2556 = vmatpush2.bf16.msra.mxu0 %v1987
    %2557 = vmatprep.subr.bf16.mxu0 %v1980
    %2558 = vmatpush2.bf16.msra.mxu0 %v1979
    %2559 = vmatprep.subr.bf16.mxu0 %v1972
    %2560 = vmatpush2.bf16.msra.mxu0 %v1971
    %2561 = vmatprep.subr.bf16.mxu0 %v1964
    %2562 = vmatpush2.bf16.msra.mxu0 %v1963
    %2563 = vmatprep.subr.bf16.mxu0 %v1956
    %2564 = vmatpush2.bf16.msra.mxu0 %v1955
    %2565 = vmatprep.subr.bf16.mxu0 %v1948
    %2566 = vmatpush2.bf16.msra.mxu0 %v1947
    %2567 = vmatprep.subr.bf16.mxu0 %v1940
    %2568 = vmatpush2.bf16.msra.mxu0 %v1939
    %2569 = vmatprep.subr.bf16.mxu0 %v1932
    %2570 = vmatpush2.bf16.msra.mxu0 %v1931
    %2571 = vmatprep.mubr.bf16.mxu0 %v794
    %2572 = vmatmul.mubr.bf16.gmra.mxu0 %v793
    %v2573 = vpop.f32.mrf.mxu0
    %v2574 = vadd.f32 %v1074, %v2573
    %v2575 = vpop.f32.mrf.mxu0
    %v2576 = vadd.f32 %v1078, %v2575
    %v2577 = vpop.f32.mrf.mxu0
    %v2578 = vpop.f32.mrf.mxu0
    %2579 = vdwg.mxu0
    %2580 = vmatprep.subr.bf16.mxu0 %v2052
    %2581 = vmatpush1.bf16.msra.mxu0 %v2051
    %2582 = vmatprep.subr.bf16.mxu0 %v2044
    %2583 = vmatpush1.bf16.msra.mxu0 %v2043
    %2584 = vmatprep.subr.bf16.mxu0 %v2036
    %2585 = vmatpush1.bf16.msra.mxu0 %v2035
    %2586 = vmatprep.subr.bf16.mxu0 %v2028
    %2587 = vmatpush1.bf16.msra.mxu0 %v2027
    %2588 = vmatprep.subr.bf16.mxu0 %v2020
    %2589 = vmatpush1.bf16.msra.mxu0 %v2019
    %2590 = vmatprep.subr.bf16.mxu0 %v2012
    %2591 = vmatpush1.bf16.msra.mxu0 %v2011
    %2592 = vmatprep.subr.bf16.mxu0 %v2004
    %2593 = vmatpush1.bf16.msra.mxu0 %v2003
    %2594 = vmatprep.subr.bf16.mxu0 %v1996
    %2595 = vmatpush1.bf16.msra.mxu0 %v1995
    %2596 = vmatprep.subr.bf16.mxu0 %v2116
    %2597 = vmatpush2.bf16.msra.mxu0 %v2115
    %2598 = vmatprep.subr.bf16.mxu0 %v2108
    %2599 = vmatpush2.bf16.msra.mxu0 %v2107
    %2600 = vmatprep.subr.bf16.mxu0 %v2100
    %2601 = vmatpush2.bf16.msra.mxu0 %v2099
    %2602 = vmatprep.subr.bf16.mxu0 %v2092
    %2603 = vmatpush2.bf16.msra.mxu0 %v2091
    %2604 = vmatprep.subr.bf16.mxu0 %v2084
    %2605 = vmatpush2.bf16.msra.mxu0 %v2083
    %2606 = vmatprep.subr.bf16.mxu0 %v2076
    %2607 = vmatpush2.bf16.msra.mxu0 %v2075
    %2608 = vmatprep.subr.bf16.mxu0 %v2068
    %2609 = vmatpush2.bf16.msra.mxu0 %v2067
    %2610 = vmatprep.subr.bf16.mxu0 %v2060
    %2611 = vmatpush2.bf16.msra.mxu0 %v2059
    %2612 = vmatprep.mubr.bf16.mxu0 %v796
    %2613 = vmatmul.mubr.bf16.gmra.mxu0 %v795
    %v2614 = vpop.f32.mrf.mxu0
    %v2615 = vadd.f32 %v2574, %v2614
    %v2616 = vpop.f32.mrf.mxu0
    %v2617 = vadd.f32 %v2576, %v2616
    %v2618 = vpop.f32.mrf.mxu0
    %v2619 = vpop.f32.mrf.mxu0
    %2620 = vdwg.mxu0
    %2621 = vmatprep.subr.bf16.mxu0 %v1926
    %2622 = vmatpush1.bf16.msra.mxu0 %v1925
    %2623 = vmatprep.subr.bf16.mxu0 %v1918
    %2624 = vmatpush1.bf16.msra.mxu0 %v1917
    %2625 = vmatprep.subr.bf16.mxu0 %v1910
    %2626 = vmatpush1.bf16.msra.mxu0 %v1909
    %2627 = vmatprep.subr.bf16.mxu0 %v1902
    %2628 = vmatpush1.bf16.msra.mxu0 %v1901
    %2629 = vmatprep.subr.bf16.mxu0 %v1894
    %2630 = vmatpush1.bf16.msra.mxu0 %v1893
    %2631 = vmatprep.subr.bf16.mxu0 %v1886
    %2632 = vmatpush1.bf16.msra.mxu0 %v1885
    %2633 = vmatprep.subr.bf16.mxu0 %v1878
    %2634 = vmatpush1.bf16.msra.mxu0 %v1877
    %2635 = vmatprep.subr.bf16.mxu0 %v1870
    %2636 = vmatpush1.bf16.msra.mxu0 %v1869
    %2637 = vmatprep.subr.bf16.mxu0 %v1990
    %2638 = vmatpush2.bf16.msra.mxu0 %v1989
    %2639 = vmatprep.subr.bf16.mxu0 %v1982
    %2640 = vmatpush2.bf16.msra.mxu0 %v1981
    %2641 = vmatprep.subr.bf16.mxu0 %v1974
    %2642 = vmatpush2.bf16.msra.mxu0 %v1973
    %2643 = vmatprep.subr.bf16.mxu0 %v1966
    %2644 = vmatpush2.bf16.msra.mxu0 %v1965
    %2645 = vmatprep.subr.bf16.mxu0 %v1958
    %2646 = vmatpush2.bf16.msra.mxu0 %v1957
    %2647 = vmatprep.subr.bf16.mxu0 %v1950
    %2648 = vmatpush2.bf16.msra.mxu0 %v1949
    %2649 = vmatprep.subr.bf16.mxu0 %v1942
    %2650 = vmatpush2.bf16.msra.mxu0 %v1941
    %2651 = vmatprep.subr.bf16.mxu0 %v1934
    %2652 = vmatpush2.bf16.msra.mxu0 %v1933
    %2653 = vmatprep.mubr.bf16.mxu0 %v794
    %2654 = vmatmul.mubr.bf16.gmra.mxu0 %v793
    %v2655 = vpop.f32.mrf.mxu0
    %v2656 = vadd.f32 %v1082, %v2655
    %v2657 = vpop.f32.mrf.mxu0
    %v2658 = vadd.f32 %v1086, %v2657
    %v2659 = vpop.f32.mrf.mxu0
    %v2660 = vpop.f32.mrf.mxu0
    %2661 = vdwg.mxu0
    %2662 = vmatprep.subr.bf16.mxu0 %v2054
    %2663 = vmatpush1.bf16.msra.mxu0 %v2053
    %2664 = vmatprep.subr.bf16.mxu0 %v2046
    %2665 = vmatpush1.bf16.msra.mxu0 %v2045
    %2666 = vmatprep.subr.bf16.mxu0 %v2038
    %2667 = vmatpush1.bf16.msra.mxu0 %v2037
    %2668 = vmatprep.subr.bf16.mxu0 %v2030
    %2669 = vmatpush1.bf16.msra.mxu0 %v2029
    %2670 = vmatprep.subr.bf16.mxu0 %v2022
    %2671 = vmatpush1.bf16.msra.mxu0 %v2021
    %2672 = vmatprep.subr.bf16.mxu0 %v2014
    %2673 = vmatpush1.bf16.msra.mxu0 %v2013
    %2674 = vmatprep.subr.bf16.mxu0 %v2006
    %2675 = vmatpush1.bf16.msra.mxu0 %v2005
    %2676 = vmatprep.subr.bf16.mxu0 %v1998
    %2677 = vmatpush1.bf16.msra.mxu0 %v1997
    %2678 = vmatprep.subr.bf16.mxu0 %v2118
    %2679 = vmatpush2.bf16.msra.mxu0 %v2117
    %2680 = vmatprep.subr.bf16.mxu0 %v2110
    %2681 = vmatpush2.bf16.msra.mxu0 %v2109
    %2682 = vmatprep.subr.bf16.mxu0 %v2102
    %2683 = vmatpush2.bf16.msra.mxu0 %v2101
    %2684 = vmatprep.subr.bf16.mxu0 %v2094
    %2685 = vmatpush2.bf16.msra.mxu0 %v2093
    %2686 = vmatprep.subr.bf16.mxu0 %v2086
    %2687 = vmatpush2.bf16.msra.mxu0 %v2085
    %2688 = vmatprep.subr.bf16.mxu0 %v2078
    %2689 = vmatpush2.bf16.msra.mxu0 %v2077
    %2690 = vmatprep.subr.bf16.mxu0 %v2070
    %2691 = vmatpush2.bf16.msra.mxu0 %v2069
    %2692 = vmatprep.subr.bf16.mxu0 %v2062
    %2693 = vmatpush2.bf16.msra.mxu0 %v2061
    %2694 = vmatprep.mubr.bf16.mxu0 %v796
    %2695 = vmatmul.mubr.bf16.gmra.mxu0 %v795
    %v2696 = vpop.f32.mrf.mxu0
    %v2697 = vadd.f32 %v2656, %v2696
    %v2698 = vpop.f32.mrf.mxu0
    %v2699 = vadd.f32 %v2658, %v2698
    %v2700 = vpop.f32.mrf.mxu0
    %v2701 = vpop.f32.mrf.mxu0
    %2702 = vdwg.mxu0
    %vm2703 = vcmp.ge.f32.partialorder %v2451, 0.0
    %vm2704 = vcmp.ge.f32.partialorder %v2453, 0.0
    %vm2705 = vcmp.ge.f32.partialorder %v2533, 0.0
    %vm2706 = vcmp.ge.f32.partialorder %v2535, 0.0
    %vm2707 = vcmp.ge.f32.partialorder %v2615, 0.0
    %vm2708 = vcmp.ge.f32.partialorder %v2617, 0.0
    %vm2709 = vcmp.ge.f32.partialorder %v2697, 0.0
    %vm2710 = vcmp.ge.f32.partialorder %v2699, 0.0
    %v2711 = vmul.f32 %v2451, 0.2
    %v2712 = vmul.f32 %v2453, 0.2
    %v2713 = vmul.f32 %v2533, 0.2
    %v2714 = vmul.f32 %v2535, 0.2
    %v2715 = vmul.f32 %v2615, 0.2
    %v2716 = vmul.f32 %v2617, 0.2
    %v2717 = vmul.f32 %v2697, 0.2
    %v2718 = vmul.f32 %v2699, 0.2
    %v2719 = vsel %vm2703, %v2451, %v2711
    %v2720 = vsel %vm2704, %v2453, %v2712
    %v2721 = vsel %vm2705, %v2533, %v2713
    %v2722 = vsel %vm2706, %v2535, %v2714
    %v2723 = vsel %vm2707, %v2615, %v2715
    %v2724 = vsel %vm2708, %v2617, %v2716
    %v2725 = vsel %vm2709, %v2697, %v2717
    %v2726 = vsel %vm2710, %v2699, %v2718
    %v2727 = vpack.c.bf16 %v2719, %v2719
    %v2728 = vpack.c.bf16 %v2720, %v2720
    %v2729 = vpack.c.bf16 %v2721, %v2721
    %v2730 = vpack.c.bf16 %v2722, %v2722
    %v2731 = vpack.c.bf16 %v2723, %v2723
    %v2732 = vpack.c.bf16 %v2724, %v2724
    %v2733 = vpack.c.bf16 %v2725, %v2725
    %v2734 = vpack.c.bf16 %v2726, %v2726
    %v2735 = vld [vmem:[#allocation12] sm:$0xff]
    %v2736 = vld [vmem:[#allocation12 + $0x8] sm:$0xff]
    %v2737 = vld [vmem:[#allocation12 + $0x10] sm:$0xff]
    %v2738 = vld [vmem:[#allocation12 + $0x18] sm:$0xf]
    %v2739 = vld [vmem:[#allocation12 + $0x1c] sm:$0xff]
    %v2740 = vld [vmem:[#allocation12 + $0x24] sm:$0xff]
    %v2741 = vld [vmem:[#allocation12 + $0x2c] sm:$0xff]
    %v2742 = vld [vmem:[#allocation12 + $0x34] sm:$0xf]
    %v2743 = vld [vmem:[#allocation12 + $0x38] sm:$0xff]
    %v2744 = vld [vmem:[#allocation12 + $0x40] sm:$0xff]
    %v2745 = vld [vmem:[#allocation12 + $0x48] sm:$0xff]
    %v2746 = vld [vmem:[#allocation12 + $0x50] sm:$0xf]
    %v2747 = vld [vmem:[#allocation12 + $0x54] sm:$0xff]
    %v2748 = vld [vmem:[#allocation12 + $0x5c] sm:$0xff]
    %v2749 = vld [vmem:[#allocation12 + $0x64] sm:$0xff]
    %v2750 = vld [vmem:[#allocation12 + $0x6c] sm:$0xf]
    %v2751 = vld [vmem:[#allocation12 + $0x70] sm:$0xff]
    %v2752 = vld [vmem:[#allocation12 + $0x78] sm:$0xff]
    %v2753 = vld [vmem:[#allocation12 + $0x80] sm:$0xff]
    %v2754 = vld [vmem:[#allocation12 + $0x88] sm:$0xf]
    %v2755 = vld [vmem:[#allocation12 + $0x8c] sm:$0xff]
    %v2756 = vld [vmem:[#allocation12 + $0x94] sm:$0xff]
    %v2757 = vld [vmem:[#allocation12 + $0x9c] sm:$0xff]
    %v2758 = vld [vmem:[#allocation12 + $0xa4] sm:$0xf]
    %v2759 = vld [vmem:[#allocation12 + $0xa8] sm:$0xff]
    %v2760 = vld [vmem:[#allocation12 + $0xb0] sm:$0xff]
    %v2761 = vld [vmem:[#allocation12 + $0xb8] sm:$0xff]
    %v2762 = vld [vmem:[#allocation12 + $0xc0] sm:$0xf]
    %v2763 = vld [vmem:[#allocation12 + $0xc4] sm:$0xff]
    %v2764 = vld [vmem:[#allocation12 + $0xcc] sm:$0xff]
    %v2765 = vld [vmem:[#allocation12 + $0xd4] sm:$0xff]
    %v2766 = vld [vmem:[#allocation12 + $0xdc] sm:$0xf]
    %v2767 = vld [vmem:[#allocation12 + $0xe0] sm:$0xff]
    %v2768 = vld [vmem:[#allocation12 + $0xe8] sm:$0xff]
    %v2769 = vld [vmem:[#allocation12 + $0xf0] sm:$0xff]
    %v2770 = vld [vmem:[#allocation12 + $0xf8] sm:$0xf]
    %v2771 = vld [vmem:[#allocation12 + $0xfc] sm:$0xff]
    %v2772 = vld [vmem:[#allocation12 + $0x104] sm:$0xff]
    %v2773 = vld [vmem:[#allocation12 + $0x10c] sm:$0xff]
    %v2774 = vld [vmem:[#allocation12 + $0x114] sm:$0xf]
    %v2775 = vld [vmem:[#allocation12 + $0x118] sm:$0xff]
    %v2776 = vld [vmem:[#allocation12 + $0x120] sm:$0xff]
    %v2777 = vld [vmem:[#allocation12 + $0x128] sm:$0xff]
    %v2778 = vld [vmem:[#allocation12 + $0x130] sm:$0xf]
    %v2779 = vld [vmem:[#allocation12 + $0x134] sm:$0xff]
    %v2780 = vld [vmem:[#allocation12 + $0x13c] sm:$0xff]
    %v2781 = vld [vmem:[#allocation12 + $0x144] sm:$0xff]
    %v2782 = vld [vmem:[#allocation12 + $0x14c] sm:$0xf]
    %v2783 = vld [vmem:[#allocation12 + $0x150] sm:$0xff]
    %v2784 = vld [vmem:[#allocation12 + $0x158] sm:$0xff]
    %v2785 = vld [vmem:[#allocation12 + $0x160] sm:$0xff]
    %v2786 = vld [vmem:[#allocation12 + $0x168] sm:$0xf]
    %v2787 = vld [vmem:[#allocation12 + $0x16c] sm:$0xff]
    %v2788 = vld [vmem:[#allocation12 + $0x174] sm:$0xff]
    %v2789 = vld [vmem:[#allocation12 + $0x17c] sm:$0xff]
    %v2790 = vld [vmem:[#allocation12 + $0x184] sm:$0xf]
    %v2791 = vld [vmem:[#allocation12 + $0x188] sm:$0xff]
    %v2792 = vld [vmem:[#allocation12 + $0x190] sm:$0xff]
    %v2793 = vld [vmem:[#allocation12 + $0x198] sm:$0xff]
    %v2794 = vld [vmem:[#allocation12 + $0x1a0] sm:$0xf]
    %v2795 = vld [vmem:[#allocation12 + $0x1a4] sm:$0xff]
    %v2796 = vld [vmem:[#allocation12 + $0x1ac] sm:$0xff]
    %v2797 = vld [vmem:[#allocation12 + $0x1b4] sm:$0xff]
    %v2798 = vld [vmem:[#allocation12 + $0x1bc] sm:$0xf]
    %v2799 = vld [vmem:[#allocation12 + $0x1c0] sm:$0xff]
    %v2800 = vld [vmem:[#allocation12 + $0x1c8] sm:$0xff]
    %v2801 = vld [vmem:[#allocation12 + $0x1d0] sm:$0xff]
    %v2802 = vld [vmem:[#allocation12 + $0x1d8] sm:$0xf]
    %v2803 = vld [vmem:[#allocation12 + $0x1dc] sm:$0xff]
    %v2804 = vld [vmem:[#allocation12 + $0x1e4] sm:$0xff]
    %v2805 = vld [vmem:[#allocation12 + $0x1ec] sm:$0xff]
    %v2806 = vld [vmem:[#allocation12 + $0x1f4] sm:$0xf]
    %v2807 = vld [vmem:[#allocation12 + $0x1f8] sm:$0xff]
    %v2808 = vld [vmem:[#allocation12 + $0x200] sm:$0xff]
    %v2809 = vld [vmem:[#allocation12 + $0x208] sm:$0xff]
    %v2810 = vld [vmem:[#allocation12 + $0x210] sm:$0xf]
    %v2811 = vld [vmem:[#allocation12 + $0x214] sm:$0xff]
    %v2812 = vld [vmem:[#allocation12 + $0x21c] sm:$0xff]
    %v2813 = vld [vmem:[#allocation12 + $0x224] sm:$0xff]
    %v2814 = vld [vmem:[#allocation12 + $0x22c] sm:$0xf]
    %v2815 = vld [vmem:[#allocation12 + $0x230] sm:$0xff]
    %v2816 = vld [vmem:[#allocation12 + $0x238] sm:$0xff]
    %v2817 = vld [vmem:[#allocation12 + $0x240] sm:$0xff]
    %v2818 = vld [vmem:[#allocation12 + $0x248] sm:$0xf]
    %v2819 = vld [vmem:[#allocation12 + $0x24c] sm:$0xff]
    %v2820 = vld [vmem:[#allocation12 + $0x254] sm:$0xff]
    %v2821 = vld [vmem:[#allocation12 + $0x25c] sm:$0xff]
    %v2822 = vld [vmem:[#allocation12 + $0x264] sm:$0xf]
    %v2823 = vld [vmem:[#allocation12 + $0x268] sm:$0xff]
    %v2824 = vld [vmem:[#allocation12 + $0x270] sm:$0xff]
    %v2825 = vld [vmem:[#allocation12 + $0x278] sm:$0xff]
    %v2826 = vld [vmem:[#allocation12 + $0x280] sm:$0xf]
    %v2827 = vld [vmem:[#allocation12 + $0x284] sm:$0xff]
    %v2828 = vld [vmem:[#allocation12 + $0x28c] sm:$0xff]
    %v2829 = vld [vmem:[#allocation12 + $0x294] sm:$0xff]
    %v2830 = vld [vmem:[#allocation12 + $0x29c] sm:$0xf]
    %v2831 = vld [vmem:[#allocation12 + $0x2a0] sm:$0xff]
    %v2832 = vld [vmem:[#allocation12 + $0x2a8] sm:$0xff]
    %v2833 = vld [vmem:[#allocation12 + $0x2b0] sm:$0xff]
    %v2834 = vld [vmem:[#allocation12 + $0x2b8] sm:$0xf]
    %v2835 = vld [vmem:[#allocation12 + $0x2bc] sm:$0xff]
    %v2836 = vld [vmem:[#allocation12 + $0x2c4] sm:$0xff]
    %v2837 = vld [vmem:[#allocation12 + $0x2cc] sm:$0xff]
    %v2838 = vld [vmem:[#allocation12 + $0x2d4] sm:$0xf]
    %v2839 = vld [vmem:[#allocation12 + $0x2d8] sm:$0xff]
    %v2840 = vld [vmem:[#allocation12 + $0x2e0] sm:$0xff]
    %v2841 = vld [vmem:[#allocation12 + $0x2e8] sm:$0xff]
    %v2842 = vld [vmem:[#allocation12 + $0x2f0] sm:$0xf]
    %v2843 = vld [vmem:[#allocation12 + $0x2f4] sm:$0xff]
    %v2844 = vld [vmem:[#allocation12 + $0x2fc] sm:$0xff]
    %v2845 = vld [vmem:[#allocation12 + $0x304] sm:$0xff]
    %v2846 = vld [vmem:[#allocation12 + $0x30c] sm:$0xf]
    %v2847 = vld [vmem:[#allocation12 + $0x310] sm:$0xff]
    %v2848 = vld [vmem:[#allocation12 + $0x318] sm:$0xff]
    %v2849 = vld [vmem:[#allocation12 + $0x320] sm:$0xff]
    %v2850 = vld [vmem:[#allocation12 + $0x328] sm:$0xf]
    %v2851 = vld [vmem:[#allocation12 + $0x32c] sm:$0xff]
    %v2852 = vld [vmem:[#allocation12 + $0x334] sm:$0xff]
    %v2853 = vld [vmem:[#allocation12 + $0x33c] sm:$0xff]
    %v2854 = vld [vmem:[#allocation12 + $0x344] sm:$0xf]
    %v2855 = vld [vmem:[#allocation12 + $0x348] sm:$0xff]
    %v2856 = vld [vmem:[#allocation12 + $0x350] sm:$0xff]
    %v2857 = vld [vmem:[#allocation12 + $0x358] sm:$0xff]
    %v2858 = vld [vmem:[#allocation12 + $0x360] sm:$0xf]
    %v2859 = vld [vmem:[#allocation12 + $0x364] sm:$0xff]
    %v2860 = vld [vmem:[#allocation12 + $0x36c] sm:$0xff]
    %v2861 = vld [vmem:[#allocation12 + $0x374] sm:$0xff]
    %v2862 = vld [vmem:[#allocation12 + $0x37c] sm:$0xf]
    %v2863 = vld [vmem:[#allocation12 + $0x380] sm:$0xff]
    %v2864 = vld [vmem:[#allocation12 + $0x388] sm:$0xff]
    %v2865 = vld [vmem:[#allocation12 + $0x390] sm:$0xff]
    %v2866 = vld [vmem:[#allocation12 + $0x398] sm:$0xf]
    %v2867 = vld [vmem:[#allocation12 + $0x39c] sm:$0xff]
    %v2868 = vld [vmem:[#allocation12 + $0x3a4] sm:$0xff]
    %v2869 = vld [vmem:[#allocation12 + $0x3ac] sm:$0xff]
    %v2870 = vld [vmem:[#allocation12 + $0x3b4] sm:$0xf]
    %v2871 = vld [vmem:[#allocation12 + $0x3b8] sm:$0xff]
    %v2872 = vld [vmem:[#allocation12 + $0x3c0] sm:$0xff]
    %v2873 = vld [vmem:[#allocation12 + $0x3c8] sm:$0xff]
    %v2874 = vld [vmem:[#allocation12 + $0x3d0] sm:$0xf]
    %v2875 = vld [vmem:[#allocation12 + $0x3d4] sm:$0xff]
    %v2876 = vld [vmem:[#allocation12 + $0x3dc] sm:$0xff]
    %v2877 = vld [vmem:[#allocation12 + $0x3e4] sm:$0xff]
    %v2878 = vld [vmem:[#allocation12 + $0x3ec] sm:$0xf]
    %v2879 = vld [vmem:[#allocation12 + $0x3f0] sm:$0xff]
    %v2880 = vld [vmem:[#allocation12 + $0x3f8] sm:$0xff]
    %v2881 = vld [vmem:[#allocation12 + $0x400] sm:$0xff]
    %v2882 = vld [vmem:[#allocation12 + $0x408] sm:$0xf]
    %v2883 = vld [vmem:[#allocation12 + $0x40c] sm:$0xff]
    %v2884 = vld [vmem:[#allocation12 + $0x414] sm:$0xff]
    %v2885 = vld [vmem:[#allocation12 + $0x41c] sm:$0xff]
    %v2886 = vld [vmem:[#allocation12 + $0x424] sm:$0xf]
    %v2887 = vld [vmem:[#allocation12 + $0x428] sm:$0xff]
    %v2888 = vld [vmem:[#allocation12 + $0x430] sm:$0xff]
    %v2889 = vld [vmem:[#allocation12 + $0x438] sm:$0xff]
    %v2890 = vld [vmem:[#allocation12 + $0x440] sm:$0xf]
    %v2891 = vld [vmem:[#allocation12 + $0x444] sm:$0xff]
    %v2892 = vld [vmem:[#allocation12 + $0x44c] sm:$0xff]
    %v2893 = vld [vmem:[#allocation12 + $0x454] sm:$0xff]
    %v2894 = vld [vmem:[#allocation12 + $0x45c] sm:$0xf]
    %v2895 = vld [vmem:[#allocation12 + $0x460] sm:$0xff]
    %v2896 = vld [vmem:[#allocation12 + $0x468] sm:$0xff]
    %v2897 = vld [vmem:[#allocation12 + $0x470] sm:$0xff]
    %v2898 = vld [vmem:[#allocation12 + $0x478] sm:$0xf]
    %v2899 = vld [vmem:[#allocation12 + $0x47c] sm:$0xff]
    %v2900 = vld [vmem:[#allocation12 + $0x484] sm:$0xff]
    %v2901 = vld [vmem:[#allocation12 + $0x48c] sm:$0xff]
    %v2902 = vld [vmem:[#allocation12 + $0x494] sm:$0xf]
    %v2903 = vld [vmem:[#allocation12 + $0x498] sm:$0xff]
    %v2904 = vld [vmem:[#allocation12 + $0x4a0] sm:$0xff]
    %v2905 = vld [vmem:[#allocation12 + $0x4a8] sm:$0xff]
    %v2906 = vld [vmem:[#allocation12 + $0x4b0] sm:$0xf]
    %v2907 = vld [vmem:[#allocation12 + $0x4b4] sm:$0xff]
    %v2908 = vld [vmem:[#allocation12 + $0x4bc] sm:$0xff]
    %v2909 = vld [vmem:[#allocation12 + $0x4c4] sm:$0xff]
    %v2910 = vld [vmem:[#allocation12 + $0x4cc] sm:$0xf]
    %v2911 = vld [vmem:[#allocation12 + $0x4d0] sm:$0xff]
    %v2912 = vld [vmem:[#allocation12 + $0x4d8] sm:$0xff]
    %v2913 = vld [vmem:[#allocation12 + $0x4e0] sm:$0xff]
    %v2914 = vld [vmem:[#allocation12 + $0x4e8] sm:$0xf]
    %v2915 = vld [vmem:[#allocation12 + $0x4ec] sm:$0xff]
    %v2916 = vld [vmem:[#allocation12 + $0x4f4] sm:$0xff]
    %v2917 = vld [vmem:[#allocation12 + $0x4fc] sm:$0xff]
    %v2918 = vld [vmem:[#allocation12 + $0x504] sm:$0xf]
    %v2919 = vld [vmem:[#allocation12 + $0x508] sm:$0xff]
    %v2920 = vld [vmem:[#allocation12 + $0x510] sm:$0xff]
    %v2921 = vld [vmem:[#allocation12 + $0x518] sm:$0xff]
    %v2922 = vld [vmem:[#allocation12 + $0x520] sm:$0xf]
    %v2923 = vld [vmem:[#allocation12 + $0x524] sm:$0xff]
    %v2924 = vld [vmem:[#allocation12 + $0x52c] sm:$0xff]
    %v2925 = vld [vmem:[#allocation12 + $0x534] sm:$0xff]
    %v2926 = vld [vmem:[#allocation12 + $0x53c] sm:$0xf]
    %v2927 = vld [vmem:[#allocation12 + $0x540] sm:$0xff]
    %v2928 = vld [vmem:[#allocation12 + $0x548] sm:$0xff]
    %v2929 = vld [vmem:[#allocation12 + $0x550] sm:$0xff]
    %v2930 = vld [vmem:[#allocation12 + $0x558] sm:$0xf]
    %v2931 = vld [vmem:[#allocation12 + $0x55c] sm:$0xff]
    %v2932 = vld [vmem:[#allocation12 + $0x564] sm:$0xff]
    %v2933 = vld [vmem:[#allocation12 + $0x56c] sm:$0xff]
    %v2934 = vld [vmem:[#allocation12 + $0x574] sm:$0xf]
    %v2935 = vld [vmem:[#allocation12 + $0x578] sm:$0xff]
    %v2936 = vld [vmem:[#allocation12 + $0x580] sm:$0xff]
    %v2937 = vld [vmem:[#allocation12 + $0x588] sm:$0xff]
    %v2938 = vld [vmem:[#allocation12 + $0x590] sm:$0xf]
    %v2939 = vld [vmem:[#allocation12 + $0x594] sm:$0xff]
    %v2940 = vld [vmem:[#allocation12 + $0x59c] sm:$0xff]
    %v2941 = vld [vmem:[#allocation12 + $0x5a4] sm:$0xff]
    %v2942 = vld [vmem:[#allocation12 + $0x5ac] sm:$0xf]
    %v2943 = vld [vmem:[#allocation12 + $0x5b0] sm:$0xff]
    %v2944 = vld [vmem:[#allocation12 + $0x5b8] sm:$0xff]
    %v2945 = vld [vmem:[#allocation12 + $0x5c0] sm:$0xff]
    %v2946 = vld [vmem:[#allocation12 + $0x5c8] sm:$0xf]
    %v2947 = vld [vmem:[#allocation12 + $0x5cc] sm:$0xff]
    %v2948 = vld [vmem:[#allocation12 + $0x5d4] sm:$0xff]
    %v2949 = vld [vmem:[#allocation12 + $0x5dc] sm:$0xff]
    %v2950 = vld [vmem:[#allocation12 + $0x5e4] sm:$0xf]
    %v2951 = vld [vmem:[#allocation12 + $0x5e8] sm:$0xff]
    %v2952 = vld [vmem:[#allocation12 + $0x5f0] sm:$0xff]
    %v2953 = vld [vmem:[#allocation12 + $0x5f8] sm:$0xff]
    %v2954 = vld [vmem:[#allocation12 + $0x600] sm:$0xf]
    %v2955 = vld [vmem:[#allocation12 + $0x604] sm:$0xff]
    %v2956 = vld [vmem:[#allocation12 + $0x60c] sm:$0xff]
    %v2957 = vld [vmem:[#allocation12 + $0x614] sm:$0xff]
    %v2958 = vld [vmem:[#allocation12 + $0x61c] sm:$0xf]
    %v2959 = vld [vmem:[#allocation12 + $0x620] sm:$0xff]
    %v2960 = vld [vmem:[#allocation12 + $0x628] sm:$0xff]
    %v2961 = vld [vmem:[#allocation12 + $0x630] sm:$0xff]
    %v2962 = vld [vmem:[#allocation12 + $0x638] sm:$0xf]
    %v2963 = vld [vmem:[#allocation12 + $0x63c] sm:$0xff]
    %v2964 = vld [vmem:[#allocation12 + $0x644] sm:$0xff]
    %v2965 = vld [vmem:[#allocation12 + $0x64c] sm:$0xff]
    %v2966 = vld [vmem:[#allocation12 + $0x654] sm:$0xf]
    %v2967 = vld [vmem:[#allocation12 + $0x658] sm:$0xff]
    %v2968 = vld [vmem:[#allocation12 + $0x660] sm:$0xff]
    %v2969 = vld [vmem:[#allocation12 + $0x668] sm:$0xff]
    %v2970 = vld [vmem:[#allocation12 + $0x670] sm:$0xf]
    %v2971 = vld [vmem:[#allocation12 + $0x674] sm:$0xff]
    %v2972 = vld [vmem:[#allocation12 + $0x67c] sm:$0xff]
    %v2973 = vld [vmem:[#allocation12 + $0x684] sm:$0xff]
    %v2974 = vld [vmem:[#allocation12 + $0x68c] sm:$0xf]
    %v2975 = vld [vmem:[#allocation12 + $0x690] sm:$0xff]
    %v2976 = vld [vmem:[#allocation12 + $0x698] sm:$0xff]
    %v2977 = vld [vmem:[#allocation12 + $0x6a0] sm:$0xff]
    %v2978 = vld [vmem:[#allocation12 + $0x6a8] sm:$0xf]
    %v2979 = vld [vmem:[#allocation12 + $0x6ac] sm:$0xff]
    %v2980 = vld [vmem:[#allocation12 + $0x6b4] sm:$0xff]
    %v2981 = vld [vmem:[#allocation12 + $0x6bc] sm:$0xff]
    %v2982 = vld [vmem:[#allocation12 + $0x6c4] sm:$0xf]
    %v2983 = vld [vmem:[#allocation12 + $0x6c8] sm:$0xff]
    %v2984 = vld [vmem:[#allocation12 + $0x6d0] sm:$0xff]
    %v2985 = vld [vmem:[#allocation12 + $0x6d8] sm:$0xff]
    %v2986 = vld [vmem:[#allocation12 + $0x6e0] sm:$0xf]
    %v2987 = vld [vmem:[#allocation12 + $0x6e4] sm:$0xff]
    %v2988 = vld [vmem:[#allocation12 + $0x6ec] sm:$0xff]
    %v2989 = vld [vmem:[#allocation12 + $0x6f4] sm:$0xff]
    %v2990 = vld [vmem:[#allocation12 + $0x6fc] sm:$0xf]
    %v2991 = vld [vmem:[#allocation12 + $0x700] sm:$0xff]
    %v2992 = vld [vmem:[#allocation12 + $0x708] sm:$0xff]
    %v2993 = vld [vmem:[#allocation12 + $0x710] sm:$0xff]
    %v2994 = vld [vmem:[#allocation12 + $0x718] sm:$0xf]
    %v2995 = vld [vmem:[#allocation12 + $0x71c] sm:$0xff]
    %v2996 = vld [vmem:[#allocation12 + $0x724] sm:$0xff]
    %v2997 = vld [vmem:[#allocation12 + $0x72c] sm:$0xff]
    %v2998 = vld [vmem:[#allocation12 + $0x734] sm:$0xf]
    %v2999 = vld [vmem:[#allocation12 + $0x738] sm:$0xff]
    %v3000 = vld [vmem:[#allocation12 + $0x740] sm:$0xff]
    %v3001 = vld [vmem:[#allocation12 + $0x748] sm:$0xff]
    %v3002 = vld [vmem:[#allocation12 + $0x750] sm:$0xf]
    %v3003 = vld [vmem:[#allocation12 + $0x754] sm:$0xff]
    %v3004 = vld [vmem:[#allocation12 + $0x75c] sm:$0xff]
    %v3005 = vld [vmem:[#allocation12 + $0x764] sm:$0xff]
    %v3006 = vld [vmem:[#allocation12 + $0x76c] sm:$0xf]
    %v3007 = vld [vmem:[#allocation12 + $0x770] sm:$0xff]
    %v3008 = vld [vmem:[#allocation12 + $0x778] sm:$0xff]
    %v3009 = vld [vmem:[#allocation12 + $0x780] sm:$0xff]
    %v3010 = vld [vmem:[#allocation12 + $0x788] sm:$0xf]
    %v3011 = vld [vmem:[#allocation12 + $0x78c] sm:$0xff]
    %v3012 = vld [vmem:[#allocation12 + $0x794] sm:$0xff]
    %v3013 = vld [vmem:[#allocation12 + $0x79c] sm:$0xff]
    %v3014 = vld [vmem:[#allocation12 + $0x7a4] sm:$0xf]
    %v3015 = vld [vmem:[#allocation12 + $0x7a8] sm:$0xff]
    %v3016 = vld [vmem:[#allocation12 + $0x7b0] sm:$0xff]
    %v3017 = vld [vmem:[#allocation12 + $0x7b8] sm:$0xff]
    %v3018 = vld [vmem:[#allocation12 + $0x7c0] sm:$0xf]
    %v3019 = vld [vmem:[#allocation12 + $0x7c4] sm:$0xff]
    %v3020 = vld [vmem:[#allocation12 + $0x7cc] sm:$0xff]
    %v3021 = vld [vmem:[#allocation12 + $0x7d4] sm:$0xff]
    %v3022 = vld [vmem:[#allocation12 + $0x7dc] sm:$0xf]
    %v3023 = vld [vmem:[#allocation12 + $0x7e0] sm:$0xff]
    %v3024 = vld [vmem:[#allocation12 + $0x7e8] sm:$0xff]
    %v3025 = vld [vmem:[#allocation12 + $0x7f0] sm:$0xff]
    %v3026 = vld [vmem:[#allocation12 + $0x7f8] sm:$0xf]
    %v3027 = vld [vmem:[#allocation12 + $0x7fc] sm:$0xff]
    %v3028 = vld [vmem:[#allocation12 + $0x804] sm:$0xff]
    %v3029 = vld [vmem:[#allocation12 + $0x80c] sm:$0xff]
    %v3030 = vld [vmem:[#allocation12 + $0x814] sm:$0xf]
    %v3031 = vld [vmem:[#allocation12 + $0x818] sm:$0xff]
    %v3032 = vld [vmem:[#allocation12 + $0x820] sm:$0xff]
    %v3033 = vld [vmem:[#allocation12 + $0x828] sm:$0xff]
    %v3034 = vld [vmem:[#allocation12 + $0x830] sm:$0xf]
    %v3035 = vld [vmem:[#allocation12 + $0x834] sm:$0xff]
    %v3036 = vld [vmem:[#allocation12 + $0x83c] sm:$0xff]
    %v3037 = vld [vmem:[#allocation12 + $0x844] sm:$0xff]
    %v3038 = vld [vmem:[#allocation12 + $0x84c] sm:$0xf]
    %v3039 = vld [vmem:[#allocation12 + $0x850] sm:$0xff]
    %v3040 = vld [vmem:[#allocation12 + $0x858] sm:$0xff]
    %v3041 = vld [vmem:[#allocation12 + $0x860] sm:$0xff]
    %v3042 = vld [vmem:[#allocation12 + $0x868] sm:$0xf]
    %v3043 = vld [vmem:[#allocation12 + $0x86c] sm:$0xff]
    %v3044 = vld [vmem:[#allocation12 + $0x874] sm:$0xff]
    %v3045 = vld [vmem:[#allocation12 + $0x87c] sm:$0xff]
    %v3046 = vld [vmem:[#allocation12 + $0x884] sm:$0xf]
    %v3047 = vld [vmem:[#allocation12 + $0x888] sm:$0xff]
    %v3048 = vld [vmem:[#allocation12 + $0x890] sm:$0xff]
    %v3049 = vld [vmem:[#allocation12 + $0x898] sm:$0xff]
    %v3050 = vld [vmem:[#allocation12 + $0x8a0] sm:$0xf]
    %v3051 = vld [vmem:[#allocation12 + $0x8a4] sm:$0xff]
    %v3052 = vld [vmem:[#allocation12 + $0x8ac] sm:$0xff]
    %v3053 = vld [vmem:[#allocation12 + $0x8b4] sm:$0xff]
    %v3054 = vld [vmem:[#allocation12 + $0x8bc] sm:$0xf]
    %v3055 = vld [vmem:[#allocation12 + $0x8c0] sm:$0xff]
    %v3056 = vld [vmem:[#allocation12 + $0x8c8] sm:$0xff]
    %v3057 = vld [vmem:[#allocation12 + $0x8d0] sm:$0xff]
    %v3058 = vld [vmem:[#allocation12 + $0x8d8] sm:$0xf]
    %v3059 = vld [vmem:[#allocation12 + $0x8dc] sm:$0xff]
    %v3060 = vld [vmem:[#allocation12 + $0x8e4] sm:$0xff]
    %v3061 = vld [vmem:[#allocation12 + $0x8ec] sm:$0xff]
    %v3062 = vld [vmem:[#allocation12 + $0x8f4] sm:$0xf]
    %v3063 = vld [vmem:[#allocation12 + $0x8f8] sm:$0xff]
    %v3064 = vld [vmem:[#allocation12 + $0x900] sm:$0xff]
    %v3065 = vld [vmem:[#allocation12 + $0x908] sm:$0xff]
    %v3066 = vld [vmem:[#allocation12 + $0x910] sm:$0xf]
    %v3067 = vld [vmem:[#allocation12 + $0x914] sm:$0xff]
    %v3068 = vld [vmem:[#allocation12 + $0x91c] sm:$0xff]
    %v3069 = vld [vmem:[#allocation12 + $0x924] sm:$0xff]
    %v3070 = vld [vmem:[#allocation12 + $0x92c] sm:$0xf]
    %v3071 = vld [vmem:[#allocation12 + $0x930] sm:$0xff]
    %v3072 = vld [vmem:[#allocation12 + $0x938] sm:$0xff]
    %v3073 = vld [vmem:[#allocation12 + $0x940] sm:$0xff]
    %v3074 = vld [vmem:[#allocation12 + $0x948] sm:$0xf]
    %v3075 = vld [vmem:[#allocation12 + $0x94c] sm:$0xff]
    %v3076 = vld [vmem:[#allocation12 + $0x954] sm:$0xff]
    %v3077 = vld [vmem:[#allocation12 + $0x95c] sm:$0xff]
    %v3078 = vld [vmem:[#allocation12 + $0x964] sm:$0xf]
    %v3079 = vld [vmem:[#allocation12 + $0x968] sm:$0xff]
    %v3080 = vld [vmem:[#allocation12 + $0x970] sm:$0xff]
    %v3081 = vld [vmem:[#allocation12 + $0x978] sm:$0xff]
    %v3082 = vld [vmem:[#allocation12 + $0x980] sm:$0xf]
    %v3083 = vld [vmem:[#allocation12 + $0x984] sm:$0xff]
    %v3084 = vld [vmem:[#allocation12 + $0x98c] sm:$0xff]
    %v3085 = vld [vmem:[#allocation12 + $0x994] sm:$0xff]
    %v3086 = vld [vmem:[#allocation12 + $0x99c] sm:$0xf]
    %v3087 = vld [vmem:[#allocation12 + $0x9a0] sm:$0xff]
    %v3088 = vld [vmem:[#allocation12 + $0x9a8] sm:$0xff]
    %v3089 = vld [vmem:[#allocation12 + $0x9b0] sm:$0xff]
    %v3090 = vld [vmem:[#allocation12 + $0x9b8] sm:$0xf]
    %v3091 = vld [vmem:[#allocation12 + $0x9bc] sm:$0xff]
    %v3092 = vld [vmem:[#allocation12 + $0x9c4] sm:$0xff]
    %v3093 = vld [vmem:[#allocation12 + $0x9cc] sm:$0xff]
    %v3094 = vld [vmem:[#allocation12 + $0x9d4] sm:$0xf]
    %v3095 = vld [vmem:[#allocation12 + $0x9d8] sm:$0xff]
    %v3096 = vld [vmem:[#allocation12 + $0x9e0] sm:$0xff]
    %v3097 = vld [vmem:[#allocation12 + $0x9e8] sm:$0xff]
    %v3098 = vld [vmem:[#allocation12 + $0x9f0] sm:$0xf]
    %v3099 = vld [vmem:[#allocation12 + $0x9f4] sm:$0xff]
    %v3100 = vld [vmem:[#allocation12 + $0x9fc] sm:$0xff]
    %v3101 = vld [vmem:[#allocation12 + $0xa04] sm:$0xff]
    %v3102 = vld [vmem:[#allocation12 + $0xa0c] sm:$0xf]
    %v3103 = vld [vmem:[#allocation12 + $0xa10] sm:$0xff]
    %v3104 = vld [vmem:[#allocation12 + $0xa18] sm:$0xff]
    %v3105 = vld [vmem:[#allocation12 + $0xa20] sm:$0xff]
    %v3106 = vld [vmem:[#allocation12 + $0xa28] sm:$0xf]
    %v3107 = vld [vmem:[#allocation12 + $0xa2c] sm:$0xff]
    %v3108 = vld [vmem:[#allocation12 + $0xa34] sm:$0xff]
    %v3109 = vld [vmem:[#allocation12 + $0xa3c] sm:$0xff]
    %v3110 = vld [vmem:[#allocation12 + $0xa44] sm:$0xf]
    %v3111 = vld [vmem:[#allocation12 + $0xa48] sm:$0xff]
    %v3112 = vld [vmem:[#allocation12 + $0xa50] sm:$0xff]
    %v3113 = vld [vmem:[#allocation12 + $0xa58] sm:$0xff]
    %v3114 = vld [vmem:[#allocation12 + $0xa60] sm:$0xf]
    %v3115 = vld [vmem:[#allocation12 + $0xa64] sm:$0xff]
    %v3116 = vld [vmem:[#allocation12 + $0xa6c] sm:$0xff]
    %v3117 = vld [vmem:[#allocation12 + $0xa74] sm:$0xff]
    %v3118 = vld [vmem:[#allocation12 + $0xa7c] sm:$0xf]
    %v3119 = vld [vmem:[#allocation12 + $0xa80] sm:$0xff]
    %v3120 = vld [vmem:[#allocation12 + $0xa88] sm:$0xff]
    %v3121 = vld [vmem:[#allocation12 + $0xa90] sm:$0xff]
    %v3122 = vld [vmem:[#allocation12 + $0xa98] sm:$0xf]
    %v3123 = vld [vmem:[#allocation12 + $0xa9c] sm:$0xff]
    %v3124 = vld [vmem:[#allocation12 + $0xaa4] sm:$0xff]
    %v3125 = vld [vmem:[#allocation12 + $0xaac] sm:$0xff]
    %v3126 = vld [vmem:[#allocation12 + $0xab4] sm:$0xf]
    %v3127 = vld [vmem:[#allocation12 + $0xab8] sm:$0xff]
    %v3128 = vld [vmem:[#allocation12 + $0xac0] sm:$0xff]
    %v3129 = vld [vmem:[#allocation12 + $0xac8] sm:$0xff]
    %v3130 = vld [vmem:[#allocation12 + $0xad0] sm:$0xf]
    %v3131 = vld [vmem:[#allocation12 + $0xad4] sm:$0xff]
    %v3132 = vld [vmem:[#allocation12 + $0xadc] sm:$0xff]
    %v3133 = vld [vmem:[#allocation12 + $0xae4] sm:$0xff]
    %v3134 = vld [vmem:[#allocation12 + $0xaec] sm:$0xf]
    %v3135 = vld [vmem:[#allocation12 + $0xaf0] sm:$0xff]
    %v3136 = vld [vmem:[#allocation12 + $0xaf8] sm:$0xff]
    %v3137 = vld [vmem:[#allocation12 + $0xb00] sm:$0xff]
    %v3138 = vld [vmem:[#allocation12 + $0xb08] sm:$0xf]
    %v3139 = vld [vmem:[#allocation12 + $0xb0c] sm:$0xff]
    %v3140 = vld [vmem:[#allocation12 + $0xb14] sm:$0xff]
    %v3141 = vld [vmem:[#allocation12 + $0xb1c] sm:$0xff]
    %v3142 = vld [vmem:[#allocation12 + $0xb24] sm:$0xf]
    %v3143 = vld [vmem:[#allocation12 + $0xb28] sm:$0xff]
    %v3144 = vld [vmem:[#allocation12 + $0xb30] sm:$0xff]
    %v3145 = vld [vmem:[#allocation12 + $0xb38] sm:$0xff]
    %v3146 = vld [vmem:[#allocation12 + $0xb40] sm:$0xf]
    %v3147 = vld [vmem:[#allocation12 + $0xb44] sm:$0xff]
    %v3148 = vld [vmem:[#allocation12 + $0xb4c] sm:$0xff]
    %v3149 = vld [vmem:[#allocation12 + $0xb54] sm:$0xff]
    %v3150 = vld [vmem:[#allocation12 + $0xb5c] sm:$0xf]
    %v3151 = vld [vmem:[#allocation12 + $0xb60] sm:$0xff]
    %v3152 = vld [vmem:[#allocation12 + $0xb68] sm:$0xff]
    %v3153 = vld [vmem:[#allocation12 + $0xb70] sm:$0xff]
    %v3154 = vld [vmem:[#allocation12 + $0xb78] sm:$0xf]
    %v3155 = vld [vmem:[#allocation12 + $0xb7c] sm:$0xff]
    %v3156 = vld [vmem:[#allocation12 + $0xb84] sm:$0xff]
    %v3157 = vld [vmem:[#allocation12 + $0xb8c] sm:$0xff]
    %v3158 = vld [vmem:[#allocation12 + $0xb94] sm:$0xf]
    %v3159 = vld [vmem:[#allocation12 + $0xb98] sm:$0xff]
    %v3160 = vld [vmem:[#allocation12 + $0xba0] sm:$0xff]
    %v3161 = vld [vmem:[#allocation12 + $0xba8] sm:$0xff]
    %v3162 = vld [vmem:[#allocation12 + $0xbb0] sm:$0xf]
    %v3163 = vld [vmem:[#allocation12 + $0xbb4] sm:$0xff]
    %v3164 = vld [vmem:[#allocation12 + $0xbbc] sm:$0xff]
    %v3165 = vld [vmem:[#allocation12 + $0xbc4] sm:$0xff]
    %v3166 = vld [vmem:[#allocation12 + $0xbcc] sm:$0xf]
    %v3167 = vld [vmem:[#allocation12 + $0xbd0] sm:$0xff]
    %v3168 = vld [vmem:[#allocation12 + $0xbd8] sm:$0xff]
    %v3169 = vld [vmem:[#allocation12 + $0xbe0] sm:$0xff]
    %v3170 = vld [vmem:[#allocation12 + $0xbe8] sm:$0xf]
    %v3171 = vld [vmem:[#allocation12 + $0xbec] sm:$0xff]
    %v3172 = vld [vmem:[#allocation12 + $0xbf4] sm:$0xff]
    %v3173 = vld [vmem:[#allocation12 + $0xbfc] sm:$0xff]
    %v3174 = vld [vmem:[#allocation12 + $0xc04] sm:$0xf]
    %v3175 = vld [vmem:[#allocation12 + $0xc08] sm:$0xff]
    %v3176 = vld [vmem:[#allocation12 + $0xc10] sm:$0xff]
    %v3177 = vld [vmem:[#allocation12 + $0xc18] sm:$0xff]
    %v3178 = vld [vmem:[#allocation12 + $0xc20] sm:$0xf]
    %v3179 = vld [vmem:[#allocation12 + $0xc24] sm:$0xff]
    %v3180 = vld [vmem:[#allocation12 + $0xc2c] sm:$0xff]
    %v3181 = vld [vmem:[#allocation12 + $0xc34] sm:$0xff]
    %v3182 = vld [vmem:[#allocation12 + $0xc3c] sm:$0xf]
    %v3183 = vld [vmem:[#allocation12 + $0xc40] sm:$0xff]
    %v3184 = vld [vmem:[#allocation12 + $0xc48] sm:$0xff]
    %v3185 = vld [vmem:[#allocation12 + $0xc50] sm:$0xff]
    %v3186 = vld [vmem:[#allocation12 + $0xc58] sm:$0xf]
    %v3187 = vld [vmem:[#allocation12 + $0xc5c] sm:$0xff]
    %v3188 = vld [vmem:[#allocation12 + $0xc64] sm:$0xff]
    %v3189 = vld [vmem:[#allocation12 + $0xc6c] sm:$0xff]
    %v3190 = vld [vmem:[#allocation12 + $0xc74] sm:$0xf]
    %v3191 = vld [vmem:[#allocation12 + $0xc78] sm:$0xff]
    %v3192 = vld [vmem:[#allocation12 + $0xc80] sm:$0xff]
    %v3193 = vld [vmem:[#allocation12 + $0xc88] sm:$0xff]
    %v3194 = vld [vmem:[#allocation12 + $0xc90] sm:$0xf]
    %v3195 = vld [vmem:[#allocation12 + $0xc94] sm:$0xff]
    %v3196 = vld [vmem:[#allocation12 + $0xc9c] sm:$0xff]
    %v3197 = vld [vmem:[#allocation12 + $0xca4] sm:$0xff]
    %v3198 = vld [vmem:[#allocation12 + $0xcac] sm:$0xf]
    %v3199 = vld [vmem:[#allocation12 + $0xcb0] sm:$0xff]
    %v3200 = vld [vmem:[#allocation12 + $0xcb8] sm:$0xff]
    %v3201 = vld [vmem:[#allocation12 + $0xcc0] sm:$0xff]
    %v3202 = vld [vmem:[#allocation12 + $0xcc8] sm:$0xf]
    %v3203 = vld [vmem:[#allocation12 + $0xccc] sm:$0xff]
    %v3204 = vld [vmem:[#allocation12 + $0xcd4] sm:$0xff]
    %v3205 = vld [vmem:[#allocation12 + $0xcdc] sm:$0xff]
    %v3206 = vld [vmem:[#allocation12 + $0xce4] sm:$0xf]
    %v3207 = vld [vmem:[#allocation12 + $0xce8] sm:$0xff]
    %v3208 = vld [vmem:[#allocation12 + $0xcf0] sm:$0xff]
    %v3209 = vld [vmem:[#allocation12 + $0xcf8] sm:$0xff]
    %v3210 = vld [vmem:[#allocation12 + $0xd00] sm:$0xf]
    %v3211 = vld [vmem:[#allocation12 + $0xd04] sm:$0xff]
    %v3212 = vld [vmem:[#allocation12 + $0xd0c] sm:$0xff]
    %v3213 = vld [vmem:[#allocation12 + $0xd14] sm:$0xff]
    %v3214 = vld [vmem:[#allocation12 + $0xd1c] sm:$0xf]
    %v3215 = vld [vmem:[#allocation12 + $0xd20] sm:$0xff]
    %v3216 = vld [vmem:[#allocation12 + $0xd28] sm:$0xff]
    %v3217 = vld [vmem:[#allocation12 + $0xd30] sm:$0xff]
    %v3218 = vld [vmem:[#allocation12 + $0xd38] sm:$0xf]
    %v3219 = vld [vmem:[#allocation12 + $0xd3c] sm:$0xff]
    %v3220 = vld [vmem:[#allocation12 + $0xd44] sm:$0xff]
    %v3221 = vld [vmem:[#allocation12 + $0xd4c] sm:$0xff]
    %v3222 = vld [vmem:[#allocation12 + $0xd54] sm:$0xf]
    %v3223 = vld [vmem:[#allocation12 + $0xd58] sm:$0xff]
    %v3224 = vld [vmem:[#allocation12 + $0xd60] sm:$0xff]
    %v3225 = vld [vmem:[#allocation12 + $0xd68] sm:$0xff]
    %v3226 = vld [vmem:[#allocation12 + $0xd70] sm:$0xf]
    %v3227 = vld [vmem:[#allocation12 + $0xd74] sm:$0xff]
    %v3228 = vld [vmem:[#allocation12 + $0xd7c] sm:$0xff]
    %v3229 = vld [vmem:[#allocation12 + $0xd84] sm:$0xff]
    %v3230 = vld [vmem:[#allocation12 + $0xd8c] sm:$0xf]
    %v3231 = vld [vmem:[#allocation12 + $0xd90] sm:$0xff]
    %v3232 = vld [vmem:[#allocation12 + $0xd98] sm:$0xff]
    %v3233 = vld [vmem:[#allocation12 + $0xda0] sm:$0xff]
    %v3234 = vld [vmem:[#allocation12 + $0xda8] sm:$0xf]
    %v3235 = vld [vmem:[#allocation12 + $0xdac] sm:$0xff]
    %v3236 = vld [vmem:[#allocation12 + $0xdb4] sm:$0xff]
    %v3237 = vld [vmem:[#allocation12 + $0xdbc] sm:$0xff]
    %v3238 = vld [vmem:[#allocation12 + $0xdc4] sm:$0xf]
    %v3239 = vld [vmem:[#allocation12 + $0xdc8] sm:$0xff]
    %v3240 = vld [vmem:[#allocation12 + $0xdd0] sm:$0xff]
    %v3241 = vld [vmem:[#allocation12 + $0xdd8] sm:$0xff]
    %v3242 = vld [vmem:[#allocation12 + $0xde0] sm:$0xf]
    %v3243 = vld [vmem:[#allocation12 + $0xde4] sm:$0xff]
    %v3244 = vld [vmem:[#allocation12 + $0xdec] sm:$0xff]
    %v3245 = vld [vmem:[#allocation12 + $0xdf4] sm:$0xff]
    %v3246 = vld [vmem:[#allocation12 + $0xdfc] sm:$0xf]
    %v3247 = vld [vmem:[#allocation13] sm:$0xff]
    %v3249 = vlaneseq
    %v3250 = vshrl.u32 %v3249, 7
    %v3251 = vsub.s32 0, %v3250
    %v3252 = vrot.slane %v3247, %v3251
    %v3253 = vlaneseq
    %v3254 = vshrl.u32 %v3253, 7
    %v3255 = vsub.s32 1, %v3254
    %v3256 = vrot.slane %v3247, %v3255
    %v3257 = vlaneseq
    %v3258 = vshrl.u32 %v3257, 7
    %v3259 = vsub.s32 2, %v3258
    %v3260 = vrot.slane %v3247, %v3259
    %v3261 = vlaneseq
    %v3262 = vshrl.u32 %v3261, 7
    %v3263 = vsub.s32 3, %v3262
    %v3264 = vrot.slane %v3247, %v3263
    %v3265 = vlaneseq
    %v3266 = vshrl.u32 %v3265, 7
    %v3267 = vsub.s32 4, %v3266
    %v3268 = vrot.slane %v3247, %v3267
    %v3269 = vlaneseq
    %v3270 = vshrl.u32 %v3269, 7
    %v3271 = vsub.s32 5, %v3270
    %v3272 = vrot.slane %v3247, %v3271
    %v3273 = vlaneseq
    %v3274 = vshrl.u32 %v3273, 7
    %v3275 = vsub.s32 6, %v3274
    %v3276 = vrot.slane %v3247, %v3275
    %v3796 = vunpack.c.l.b16 %v2735
    %v3797 = vunpack.c.h.b16 %v2735
    %v3798 = vunpack.c.l.b16 %v2736
    %v3799 = vunpack.c.h.b16 %v2736
    %v3800 = vunpack.c.l.b16 %v2737
    %v3801 = vunpack.c.h.b16 %v2737
    %v3802 = vunpack.c.l.b16 %v2738
    %v3803 = vunpack.c.l.b16 %v2739
    %v3804 = vunpack.c.h.b16 %v2739
    %v3805 = vunpack.c.l.b16 %v2740
    %v3806 = vunpack.c.h.b16 %v2740
    %v3807 = vunpack.c.l.b16 %v2741
    %v3808 = vunpack.c.h.b16 %v2741
    %v3809 = vunpack.c.l.b16 %v2742
    %v3810 = vunpack.c.l.b16 %v2743
    %v3811 = vunpack.c.h.b16 %v2743
    %v3812 = vunpack.c.l.b16 %v2744
    %v3813 = vunpack.c.h.b16 %v2744
    %v3814 = vunpack.c.l.b16 %v2745
    %v3815 = vunpack.c.h.b16 %v2745
    %v3816 = vunpack.c.l.b16 %v2746
    %v3817 = vunpack.c.l.b16 %v2747
    %v3818 = vunpack.c.h.b16 %v2747
    %v3819 = vunpack.c.l.b16 %v2748
    %v3820 = vunpack.c.h.b16 %v2748
    %v3821 = vunpack.c.l.b16 %v2749
    %v3822 = vunpack.c.h.b16 %v2749
    %v3823 = vunpack.c.l.b16 %v2750
    %v3824 = vunpack.c.l.b16 %v2751
    %v3825 = vunpack.c.h.b16 %v2751
    %v3826 = vunpack.c.l.b16 %v2752
    %v3827 = vunpack.c.h.b16 %v2752
    %v3828 = vunpack.c.l.b16 %v2753
    %v3829 = vunpack.c.h.b16 %v2753
    %v3830 = vunpack.c.l.b16 %v2754
    %v3831 = vunpack.c.l.b16 %v2755
    %v3832 = vunpack.c.h.b16 %v2755
    %v3833 = vunpack.c.l.b16 %v2756
    %v3834 = vunpack.c.h.b16 %v2756
    %v3835 = vunpack.c.l.b16 %v2757
    %v3836 = vunpack.c.h.b16 %v2757
    %v3837 = vunpack.c.l.b16 %v2758
    %v3838 = vunpack.c.l.b16 %v2759
    %v3839 = vunpack.c.h.b16 %v2759
    %v3840 = vunpack.c.l.b16 %v2760
    %v3841 = vunpack.c.h.b16 %v2760
    %v3842 = vunpack.c.l.b16 %v2761
    %v3843 = vunpack.c.h.b16 %v2761
    %v3844 = vunpack.c.l.b16 %v2762
    %v3845 = vunpack.c.l.b16 %v2763
    %v3846 = vunpack.c.h.b16 %v2763
    %v3847 = vunpack.c.l.b16 %v2764
    %v3848 = vunpack.c.h.b16 %v2764
    %v3849 = vunpack.c.l.b16 %v2765
    %v3850 = vunpack.c.h.b16 %v2765
    %v3851 = vunpack.c.l.b16 %v2766
    %v3852 = vunpack.c.l.b16 %v2767
    %v3853 = vunpack.c.h.b16 %v2767
    %v3854 = vunpack.c.l.b16 %v2768
    %v3855 = vunpack.c.h.b16 %v2768
    %v3856 = vunpack.c.l.b16 %v2769
    %v3857 = vunpack.c.h.b16 %v2769
    %v3858 = vunpack.c.l.b16 %v2770
    %v3859 = vunpack.c.l.b16 %v2771
    %v3860 = vunpack.c.h.b16 %v2771
    %v3861 = vunpack.c.l.b16 %v2772
    %v3862 = vunpack.c.h.b16 %v2772
    %v3863 = vunpack.c.l.b16 %v2773
    %v3864 = vunpack.c.h.b16 %v2773
    %v3865 = vunpack.c.l.b16 %v2774
    %v3866 = vunpack.c.l.b16 %v2775
    %v3867 = vunpack.c.h.b16 %v2775
    %v3868 = vunpack.c.l.b16 %v2776
    %v3869 = vunpack.c.h.b16 %v2776
    %v3870 = vunpack.c.l.b16 %v2777
    %v3871 = vunpack.c.h.b16 %v2777
    %v3872 = vunpack.c.l.b16 %v2778
    %v3873 = vunpack.c.l.b16 %v2779
    %v3874 = vunpack.c.h.b16 %v2779
    %v3875 = vunpack.c.l.b16 %v2780
    %v3876 = vunpack.c.h.b16 %v2780
    %v3877 = vunpack.c.l.b16 %v2781
    %v3878 = vunpack.c.h.b16 %v2781
    %v3879 = vunpack.c.l.b16 %v2782
    %v3880 = vunpack.c.l.b16 %v2783
    %v3881 = vunpack.c.h.b16 %v2783
    %v3882 = vunpack.c.l.b16 %v2784
    %v3883 = vunpack.c.h.b16 %v2784
    %v3884 = vunpack.c.l.b16 %v2785
    %v3885 = vunpack.c.h.b16 %v2785
    %v3886 = vunpack.c.l.b16 %v2786
    %v3887 = vunpack.c.l.b16 %v2787
    %v3888 = vunpack.c.h.b16 %v2787
    %v3889 = vunpack.c.l.b16 %v2788
    %v3890 = vunpack.c.h.b16 %v2788
    %v3891 = vunpack.c.l.b16 %v2789
    %v3892 = vunpack.c.h.b16 %v2789
    %v3893 = vunpack.c.l.b16 %v2790
    %v3894 = vunpack.c.l.b16 %v2791
    %v3895 = vunpack.c.h.b16 %v2791
    %v3896 = vunpack.c.l.b16 %v2792
    %v3897 = vunpack.c.h.b16 %v2792
    %v3898 = vunpack.c.l.b16 %v2793
    %v3899 = vunpack.c.h.b16 %v2793
    %v3900 = vunpack.c.l.b16 %v2794
    %v3901 = vunpack.c.l.b16 %v2795
    %v3902 = vunpack.c.h.b16 %v2795
    %v3903 = vunpack.c.l.b16 %v2796
    %v3904 = vunpack.c.h.b16 %v2796
    %v3905 = vunpack.c.l.b16 %v2797
    %v3906 = vunpack.c.h.b16 %v2797
    %v3907 = vunpack.c.l.b16 %v2798
    %v3908 = vunpack.c.l.b16 %v2799
    %v3909 = vunpack.c.h.b16 %v2799
    %v3910 = vunpack.c.l.b16 %v2800
    %v3911 = vunpack.c.h.b16 %v2800
    %v3912 = vunpack.c.l.b16 %v2801
    %v3913 = vunpack.c.h.b16 %v2801
    %v3914 = vunpack.c.l.b16 %v2802
    %v3915 = vunpack.c.l.b16 %v2803
    %v3916 = vunpack.c.h.b16 %v2803
    %v3917 = vunpack.c.l.b16 %v2804
    %v3918 = vunpack.c.h.b16 %v2804
    %v3919 = vunpack.c.l.b16 %v2805
    %v3920 = vunpack.c.h.b16 %v2805
    %v3921 = vunpack.c.l.b16 %v2806
    %v3922 = vunpack.c.l.b16 %v2807
    %v3923 = vunpack.c.h.b16 %v2807
    %v3924 = vunpack.c.l.b16 %v2808
    %v3925 = vunpack.c.h.b16 %v2808
    %v3926 = vunpack.c.l.b16 %v2809
    %v3927 = vunpack.c.h.b16 %v2809
    %v3928 = vunpack.c.l.b16 %v2810
    %v3929 = vunpack.c.l.b16 %v2811
    %v3930 = vunpack.c.h.b16 %v2811
    %v3931 = vunpack.c.l.b16 %v2812
    %v3932 = vunpack.c.h.b16 %v2812
    %v3933 = vunpack.c.l.b16 %v2813
    %v3934 = vunpack.c.h.b16 %v2813
    %v3935 = vunpack.c.l.b16 %v2814
    %v3936 = vunpack.c.l.b16 %v2815
    %v3937 = vunpack.c.h.b16 %v2815
    %v3938 = vunpack.c.l.b16 %v2816
    %v3939 = vunpack.c.h.b16 %v2816
    %v3940 = vunpack.c.l.b16 %v2817
    %v3941 = vunpack.c.h.b16 %v2817
    %v3942 = vunpack.c.l.b16 %v2818
    %v3943 = vunpack.c.l.b16 %v2819
    %v3944 = vunpack.c.h.b16 %v2819
    %v3945 = vunpack.c.l.b16 %v2820
    %v3946 = vunpack.c.h.b16 %v2820
    %v3947 = vunpack.c.l.b16 %v2821
    %v3948 = vunpack.c.h.b16 %v2821
    %v3949 = vunpack.c.l.b16 %v2822
    %v3950 = vunpack.c.l.b16 %v2823
    %v3951 = vunpack.c.h.b16 %v2823
    %v3952 = vunpack.c.l.b16 %v2824
    %v3953 = vunpack.c.h.b16 %v2824
    %v3954 = vunpack.c.l.b16 %v2825
    %v3955 = vunpack.c.h.b16 %v2825
    %v3956 = vunpack.c.l.b16 %v2826
    %v3957 = vunpack.c.l.b16 %v2827
    %v3958 = vunpack.c.h.b16 %v2827
    %v3959 = vunpack.c.l.b16 %v2828
    %v3960 = vunpack.c.h.b16 %v2828
    %v3961 = vunpack.c.l.b16 %v2829
    %v3962 = vunpack.c.h.b16 %v2829
    %v3963 = vunpack.c.l.b16 %v2830
    %v3964 = vunpack.c.l.b16 %v2831
    %v3965 = vunpack.c.h.b16 %v2831
    %v3966 = vunpack.c.l.b16 %v2832
    %v3967 = vunpack.c.h.b16 %v2832
    %v3968 = vunpack.c.l.b16 %v2833
    %v3969 = vunpack.c.h.b16 %v2833
    %v3970 = vunpack.c.l.b16 %v2834
    %v3971 = vunpack.c.l.b16 %v2835
    %v3972 = vunpack.c.h.b16 %v2835
    %v3973 = vunpack.c.l.b16 %v2836
    %v3974 = vunpack.c.h.b16 %v2836
    %v3975 = vunpack.c.l.b16 %v2837
    %v3976 = vunpack.c.h.b16 %v2837
    %v3977 = vunpack.c.l.b16 %v2838
    %v3978 = vunpack.c.l.b16 %v2839
    %v3979 = vunpack.c.h.b16 %v2839
    %v3980 = vunpack.c.l.b16 %v2840
    %v3981 = vunpack.c.h.b16 %v2840
    %v3982 = vunpack.c.l.b16 %v2841
    %v3983 = vunpack.c.h.b16 %v2841
    %v3984 = vunpack.c.l.b16 %v2842
    %v3985 = vunpack.c.l.b16 %v2843
    %v3986 = vunpack.c.h.b16 %v2843
    %v3987 = vunpack.c.l.b16 %v2844
    %v3988 = vunpack.c.h.b16 %v2844
    %v3989 = vunpack.c.l.b16 %v2845
    %v3990 = vunpack.c.h.b16 %v2845
    %v3991 = vunpack.c.l.b16 %v2846
    %v3992 = vunpack.c.l.b16 %v2847
    %v3993 = vunpack.c.h.b16 %v2847
    %v3994 = vunpack.c.l.b16 %v2848
    %v3995 = vunpack.c.h.b16 %v2848
    %v3996 = vunpack.c.l.b16 %v2849
    %v3997 = vunpack.c.h.b16 %v2849
    %v3998 = vunpack.c.l.b16 %v2850
    %v3999 = vunpack.c.l.b16 %v2851
    %v4000 = vunpack.c.h.b16 %v2851
    %v4001 = vunpack.c.l.b16 %v2852
    %v4002 = vunpack.c.h.b16 %v2852
    %v4003 = vunpack.c.l.b16 %v2853
    %v4004 = vunpack.c.h.b16 %v2853
    %v4005 = vunpack.c.l.b16 %v2854
    %v4006 = vunpack.c.l.b16 %v2855
    %v4007 = vunpack.c.h.b16 %v2855
    %v4008 = vunpack.c.l.b16 %v2856
    %v4009 = vunpack.c.h.b16 %v2856
    %v4010 = vunpack.c.l.b16 %v2857
    %v4011 = vunpack.c.h.b16 %v2857
    %v4012 = vunpack.c.l.b16 %v2858
    %v4013 = vunpack.c.l.b16 %v2859
    %v4014 = vunpack.c.h.b16 %v2859
    %v4015 = vunpack.c.l.b16 %v2860
    %v4016 = vunpack.c.h.b16 %v2860
    %v4017 = vunpack.c.l.b16 %v2861
    %v4018 = vunpack.c.h.b16 %v2861
    %v4019 = vunpack.c.l.b16 %v2862
    %v4020 = vunpack.c.l.b16 %v2863
    %v4021 = vunpack.c.h.b16 %v2863
    %v4022 = vunpack.c.l.b16 %v2864
    %v4023 = vunpack.c.h.b16 %v2864
    %v4024 = vunpack.c.l.b16 %v2865
    %v4025 = vunpack.c.h.b16 %v2865
    %v4026 = vunpack.c.l.b16 %v2866
    %v4027 = vunpack.c.l.b16 %v2867
    %v4028 = vunpack.c.h.b16 %v2867
    %v4029 = vunpack.c.l.b16 %v2868
    %v4030 = vunpack.c.h.b16 %v2868
    %v4031 = vunpack.c.l.b16 %v2869
    %v4032 = vunpack.c.h.b16 %v2869
    %v4033 = vunpack.c.l.b16 %v2870
    %v4034 = vunpack.c.l.b16 %v2871
    %v4035 = vunpack.c.h.b16 %v2871
    %v4036 = vunpack.c.l.b16 %v2872
    %v4037 = vunpack.c.h.b16 %v2872
    %v4038 = vunpack.c.l.b16 %v2873
    %v4039 = vunpack.c.h.b16 %v2873
    %v4040 = vunpack.c.l.b16 %v2874
    %v4041 = vunpack.c.l.b16 %v2875
    %v4042 = vunpack.c.h.b16 %v2875
    %v4043 = vunpack.c.l.b16 %v2876
    %v4044 = vunpack.c.h.b16 %v2876
    %v4045 = vunpack.c.l.b16 %v2877
    %v4046 = vunpack.c.h.b16 %v2877
    %v4047 = vunpack.c.l.b16 %v2878
    %v4048 = vunpack.c.l.b16 %v2879
    %v4049 = vunpack.c.h.b16 %v2879
    %v4050 = vunpack.c.l.b16 %v2880
    %v4051 = vunpack.c.h.b16 %v2880
    %v4052 = vunpack.c.l.b16 %v2881
    %v4053 = vunpack.c.h.b16 %v2881
    %v4054 = vunpack.c.l.b16 %v2882
    %v4055 = vunpack.c.l.b16 %v2883
    %v4056 = vunpack.c.h.b16 %v2883
    %v4057 = vunpack.c.l.b16 %v2884
    %v4058 = vunpack.c.h.b16 %v2884
    %v4059 = vunpack.c.l.b16 %v2885
    %v4060 = vunpack.c.h.b16 %v2885
    %v4061 = vunpack.c.l.b16 %v2886
    %v4062 = vunpack.c.l.b16 %v2887
    %v4063 = vunpack.c.h.b16 %v2887
    %v4064 = vunpack.c.l.b16 %v2888
    %v4065 = vunpack.c.h.b16 %v2888
    %v4066 = vunpack.c.l.b16 %v2889
    %v4067 = vunpack.c.h.b16 %v2889
    %v4068 = vunpack.c.l.b16 %v2890
    %v4069 = vunpack.c.l.b16 %v2891
    %v4070 = vunpack.c.h.b16 %v2891
    %v4071 = vunpack.c.l.b16 %v2892
    %v4072 = vunpack.c.h.b16 %v2892
    %v4073 = vunpack.c.l.b16 %v2893
    %v4074 = vunpack.c.h.b16 %v2893
    %v4075 = vunpack.c.l.b16 %v2894
    %v4076 = vunpack.c.l.b16 %v2895
    %v4077 = vunpack.c.h.b16 %v2895
    %v4078 = vunpack.c.l.b16 %v2896
    %v4079 = vunpack.c.h.b16 %v2896
    %v4080 = vunpack.c.l.b16 %v2897
    %v4081 = vunpack.c.h.b16 %v2897
    %v4082 = vunpack.c.l.b16 %v2898
    %v4083 = vunpack.c.l.b16 %v2899
    %v4084 = vunpack.c.h.b16 %v2899
    %v4085 = vunpack.c.l.b16 %v2900
    %v4086 = vunpack.c.h.b16 %v2900
    %v4087 = vunpack.c.l.b16 %v2901
    %v4088 = vunpack.c.h.b16 %v2901
    %v4089 = vunpack.c.l.b16 %v2902
    %v4090 = vunpack.c.l.b16 %v2903
    %v4091 = vunpack.c.h.b16 %v2903
    %v4092 = vunpack.c.l.b16 %v2904
    %v4093 = vunpack.c.h.b16 %v2904
    %v4094 = vunpack.c.l.b16 %v2905
    %v4095 = vunpack.c.h.b16 %v2905
    %v4096 = vunpack.c.l.b16 %v2906
    %v4097 = vunpack.c.l.b16 %v2907
    %v4098 = vunpack.c.h.b16 %v2907
    %v4099 = vunpack.c.l.b16 %v2908
    %v4100 = vunpack.c.h.b16 %v2908
    %v4101 = vunpack.c.l.b16 %v2909
    %v4102 = vunpack.c.h.b16 %v2909
    %v4103 = vunpack.c.l.b16 %v2910
    %v4104 = vunpack.c.l.b16 %v2911
    %v4105 = vunpack.c.h.b16 %v2911
    %v4106 = vunpack.c.l.b16 %v2912
    %v4107 = vunpack.c.h.b16 %v2912
    %v4108 = vunpack.c.l.b16 %v2913
    %v4109 = vunpack.c.h.b16 %v2913
    %v4110 = vunpack.c.l.b16 %v2914
    %v4111 = vunpack.c.l.b16 %v2915
    %v4112 = vunpack.c.h.b16 %v2915
    %v4113 = vunpack.c.l.b16 %v2916
    %v4114 = vunpack.c.h.b16 %v2916
    %v4115 = vunpack.c.l.b16 %v2917
    %v4116 = vunpack.c.h.b16 %v2917
    %v4117 = vunpack.c.l.b16 %v2918
    %v4118 = vunpack.c.l.b16 %v2919
    %v4119 = vunpack.c.h.b16 %v2919
    %v4120 = vunpack.c.l.b16 %v2920
    %v4121 = vunpack.c.h.b16 %v2920
    %v4122 = vunpack.c.l.b16 %v2921
    %v4123 = vunpack.c.h.b16 %v2921
    %v4124 = vunpack.c.l.b16 %v2922
    %v4125 = vunpack.c.l.b16 %v2923
    %v4126 = vunpack.c.h.b16 %v2923
    %v4127 = vunpack.c.l.b16 %v2924
    %v4128 = vunpack.c.h.b16 %v2924
    %v4129 = vunpack.c.l.b16 %v2925
    %v4130 = vunpack.c.h.b16 %v2925
    %v4131 = vunpack.c.l.b16 %v2926
    %v4132 = vunpack.c.l.b16 %v2927
    %v4133 = vunpack.c.h.b16 %v2927
    %v4134 = vunpack.c.l.b16 %v2928
    %v4135 = vunpack.c.h.b16 %v2928
    %v4136 = vunpack.c.l.b16 %v2929
    %v4137 = vunpack.c.h.b16 %v2929
    %v4138 = vunpack.c.l.b16 %v2930
    %v4139 = vunpack.c.l.b16 %v2931
    %v4140 = vunpack.c.h.b16 %v2931
    %v4141 = vunpack.c.l.b16 %v2932
    %v4142 = vunpack.c.h.b16 %v2932
    %v4143 = vunpack.c.l.b16 %v2933
    %v4144 = vunpack.c.h.b16 %v2933
    %v4145 = vunpack.c.l.b16 %v2934
    %v4146 = vunpack.c.l.b16 %v2935
    %v4147 = vunpack.c.h.b16 %v2935
    %v4148 = vunpack.c.l.b16 %v2936
    %v4149 = vunpack.c.h.b16 %v2936
    %v4150 = vunpack.c.l.b16 %v2937
    %v4151 = vunpack.c.h.b16 %v2937
    %v4152 = vunpack.c.l.b16 %v2938
    %v4153 = vunpack.c.l.b16 %v2939
    %v4154 = vunpack.c.h.b16 %v2939
    %v4155 = vunpack.c.l.b16 %v2940
    %v4156 = vunpack.c.h.b16 %v2940
    %v4157 = vunpack.c.l.b16 %v2941
    %v4158 = vunpack.c.h.b16 %v2941
    %v4159 = vunpack.c.l.b16 %v2942
    %v4160 = vunpack.c.l.b16 %v2943
    %v4161 = vunpack.c.h.b16 %v2943
    %v4162 = vunpack.c.l.b16 %v2944
    %v4163 = vunpack.c.h.b16 %v2944
    %v4164 = vunpack.c.l.b16 %v2945
    %v4165 = vunpack.c.h.b16 %v2945
    %v4166 = vunpack.c.l.b16 %v2946
    %v4167 = vunpack.c.l.b16 %v2947
    %v4168 = vunpack.c.h.b16 %v2947
    %v4169 = vunpack.c.l.b16 %v2948
    %v4170 = vunpack.c.h.b16 %v2948
    %v4171 = vunpack.c.l.b16 %v2949
    %v4172 = vunpack.c.h.b16 %v2949
    %v4173 = vunpack.c.l.b16 %v2950
    %v4174 = vunpack.c.l.b16 %v2951
    %v4175 = vunpack.c.h.b16 %v2951
    %v4176 = vunpack.c.l.b16 %v2952
    %v4177 = vunpack.c.h.b16 %v2952
    %v4178 = vunpack.c.l.b16 %v2953
    %v4179 = vunpack.c.h.b16 %v2953
    %v4180 = vunpack.c.l.b16 %v2954
    %v4181 = vunpack.c.l.b16 %v2955
    %v4182 = vunpack.c.h.b16 %v2955
    %v4183 = vunpack.c.l.b16 %v2956
    %v4184 = vunpack.c.h.b16 %v2956
    %v4185 = vunpack.c.l.b16 %v2957
    %v4186 = vunpack.c.h.b16 %v2957
    %v4187 = vunpack.c.l.b16 %v2958
    %v4188 = vunpack.c.l.b16 %v2959
    %v4189 = vunpack.c.h.b16 %v2959
    %v4190 = vunpack.c.l.b16 %v2960
    %v4191 = vunpack.c.h.b16 %v2960
    %v4192 = vunpack.c.l.b16 %v2961
    %v4193 = vunpack.c.h.b16 %v2961
    %v4194 = vunpack.c.l.b16 %v2962
    %v4195 = vunpack.c.l.b16 %v2963
    %v4196 = vunpack.c.h.b16 %v2963
    %v4197 = vunpack.c.l.b16 %v2964
    %v4198 = vunpack.c.h.b16 %v2964
    %v4199 = vunpack.c.l.b16 %v2965
    %v4200 = vunpack.c.h.b16 %v2965
    %v4201 = vunpack.c.l.b16 %v2966
    %v4202 = vunpack.c.l.b16 %v2967
    %v4203 = vunpack.c.h.b16 %v2967
    %v4204 = vunpack.c.l.b16 %v2968
    %v4205 = vunpack.c.h.b16 %v2968
    %v4206 = vunpack.c.l.b16 %v2969
    %v4207 = vunpack.c.h.b16 %v2969
    %v4208 = vunpack.c.l.b16 %v2970
    %v4209 = vunpack.c.l.b16 %v2971
    %v4210 = vunpack.c.h.b16 %v2971
    %v4211 = vunpack.c.l.b16 %v2972
    %v4212 = vunpack.c.h.b16 %v2972
    %v4213 = vunpack.c.l.b16 %v2973
    %v4214 = vunpack.c.h.b16 %v2973
    %v4215 = vunpack.c.l.b16 %v2974
    %v4216 = vunpack.c.l.b16 %v2975
    %v4217 = vunpack.c.h.b16 %v2975
    %v4218 = vunpack.c.l.b16 %v2976
    %v4219 = vunpack.c.h.b16 %v2976
    %v4220 = vunpack.c.l.b16 %v2977
    %v4221 = vunpack.c.h.b16 %v2977
    %v4222 = vunpack.c.l.b16 %v2978
    %v4223 = vunpack.c.l.b16 %v2979
    %v4224 = vunpack.c.h.b16 %v2979
    %v4225 = vunpack.c.l.b16 %v2980
    %v4226 = vunpack.c.h.b16 %v2980
    %v4227 = vunpack.c.l.b16 %v2981
    %v4228 = vunpack.c.h.b16 %v2981
    %v4229 = vunpack.c.l.b16 %v2982
    %v4230 = vunpack.c.l.b16 %v2983
    %v4231 = vunpack.c.h.b16 %v2983
    %v4232 = vunpack.c.l.b16 %v2984
    %v4233 = vunpack.c.h.b16 %v2984
    %v4234 = vunpack.c.l.b16 %v2985
    %v4235 = vunpack.c.h.b16 %v2985
    %v4236 = vunpack.c.l.b16 %v2986
    %v4237 = vunpack.c.l.b16 %v2987
    %v4238 = vunpack.c.h.b16 %v2987
    %v4239 = vunpack.c.l.b16 %v2988
    %v4240 = vunpack.c.h.b16 %v2988
    %v4241 = vunpack.c.l.b16 %v2989
    %v4242 = vunpack.c.h.b16 %v2989
    %v4243 = vunpack.c.l.b16 %v2990
    %v4244 = vunpack.c.l.b16 %v2991
    %v4245 = vunpack.c.h.b16 %v2991
    %v4246 = vunpack.c.l.b16 %v2992
    %v4247 = vunpack.c.h.b16 %v2992
    %v4248 = vunpack.c.l.b16 %v2993
    %v4249 = vunpack.c.h.b16 %v2993
    %v4250 = vunpack.c.l.b16 %v2994
    %v4251 = vunpack.c.l.b16 %v2995
    %v4252 = vunpack.c.h.b16 %v2995
    %v4253 = vunpack.c.l.b16 %v2996
    %v4254 = vunpack.c.h.b16 %v2996
    %v4255 = vunpack.c.l.b16 %v2997
    %v4256 = vunpack.c.h.b16 %v2997
    %v4257 = vunpack.c.l.b16 %v2998
    %v4258 = vunpack.c.l.b16 %v2999
    %v4259 = vunpack.c.h.b16 %v2999
    %v4260 = vunpack.c.l.b16 %v3000
    %v4261 = vunpack.c.h.b16 %v3000
    %v4262 = vunpack.c.l.b16 %v3001
    %v4263 = vunpack.c.h.b16 %v3001
    %v4264 = vunpack.c.l.b16 %v3002
    %v4265 = vunpack.c.l.b16 %v3003
    %v4266 = vunpack.c.h.b16 %v3003
    %v4267 = vunpack.c.l.b16 %v3004
    %v4268 = vunpack.c.h.b16 %v3004
    %v4269 = vunpack.c.l.b16 %v3005
    %v4270 = vunpack.c.h.b16 %v3005
    %v4271 = vunpack.c.l.b16 %v3006
    %v4272 = vunpack.c.l.b16 %v3007
    %v4273 = vunpack.c.h.b16 %v3007
    %v4274 = vunpack.c.l.b16 %v3008
    %v4275 = vunpack.c.h.b16 %v3008
    %v4276 = vunpack.c.l.b16 %v3009
    %v4277 = vunpack.c.h.b16 %v3009
    %v4278 = vunpack.c.l.b16 %v3010
    %v4279 = vunpack.c.l.b16 %v3011
    %v4280 = vunpack.c.h.b16 %v3011
    %v4281 = vunpack.c.l.b16 %v3012
    %v4282 = vunpack.c.h.b16 %v3012
    %v4283 = vunpack.c.l.b16 %v3013
    %v4284 = vunpack.c.h.b16 %v3013
    %v4285 = vunpack.c.l.b16 %v3014
    %v4286 = vunpack.c.l.b16 %v3015
    %v4287 = vunpack.c.h.b16 %v3015
    %v4288 = vunpack.c.l.b16 %v3016
    %v4289 = vunpack.c.h.b16 %v3016
    %v4290 = vunpack.c.l.b16 %v3017
    %v4291 = vunpack.c.h.b16 %v3017
    %v4292 = vunpack.c.l.b16 %v3018
    %v4293 = vunpack.c.l.b16 %v3019
    %v4294 = vunpack.c.h.b16 %v3019
    %v4295 = vunpack.c.l.b16 %v3020
    %v4296 = vunpack.c.h.b16 %v3020
    %v4297 = vunpack.c.l.b16 %v3021
    %v4298 = vunpack.c.h.b16 %v3021
    %v4299 = vunpack.c.l.b16 %v3022
    %v4300 = vunpack.c.l.b16 %v3023
    %v4301 = vunpack.c.h.b16 %v3023
    %v4302 = vunpack.c.l.b16 %v3024
    %v4303 = vunpack.c.h.b16 %v3024
    %v4304 = vunpack.c.l.b16 %v3025
    %v4305 = vunpack.c.h.b16 %v3025
    %v4306 = vunpack.c.l.b16 %v3026
    %v4307 = vunpack.c.l.b16 %v3027
    %v4308 = vunpack.c.h.b16 %v3027
    %v4309 = vunpack.c.l.b16 %v3028
    %v4310 = vunpack.c.h.b16 %v3028
    %v4311 = vunpack.c.l.b16 %v3029
    %v4312 = vunpack.c.h.b16 %v3029
    %v4313 = vunpack.c.l.b16 %v3030
    %v4314 = vunpack.c.l.b16 %v3031
    %v4315 = vunpack.c.h.b16 %v3031
    %v4316 = vunpack.c.l.b16 %v3032
    %v4317 = vunpack.c.h.b16 %v3032
    %v4318 = vunpack.c.l.b16 %v3033
    %v4319 = vunpack.c.h.b16 %v3033
    %v4320 = vunpack.c.l.b16 %v3034
    %v4321 = vunpack.c.l.b16 %v3035
    %v4322 = vunpack.c.h.b16 %v3035
    %v4323 = vunpack.c.l.b16 %v3036
    %v4324 = vunpack.c.h.b16 %v3036
    %v4325 = vunpack.c.l.b16 %v3037
    %v4326 = vunpack.c.h.b16 %v3037
    %v4327 = vunpack.c.l.b16 %v3038
    %v4328 = vunpack.c.l.b16 %v3039
    %v4329 = vunpack.c.h.b16 %v3039
    %v4330 = vunpack.c.l.b16 %v3040
    %v4331 = vunpack.c.h.b16 %v3040
    %v4332 = vunpack.c.l.b16 %v3041
    %v4333 = vunpack.c.h.b16 %v3041
    %v4334 = vunpack.c.l.b16 %v3042
    %v4335 = vunpack.c.l.b16 %v3043
    %v4336 = vunpack.c.h.b16 %v3043
    %v4337 = vunpack.c.l.b16 %v3044
    %v4338 = vunpack.c.h.b16 %v3044
    %v4339 = vunpack.c.l.b16 %v3045
    %v4340 = vunpack.c.h.b16 %v3045
    %v4341 = vunpack.c.l.b16 %v3046
    %v4342 = vunpack.c.l.b16 %v3047
    %v4343 = vunpack.c.h.b16 %v3047
    %v4344 = vunpack.c.l.b16 %v3048
    %v4345 = vunpack.c.h.b16 %v3048
    %v4346 = vunpack.c.l.b16 %v3049
    %v4347 = vunpack.c.h.b16 %v3049
    %v4348 = vunpack.c.l.b16 %v3050
    %v4349 = vunpack.c.l.b16 %v3051
    %v4350 = vunpack.c.h.b16 %v3051
    %v4351 = vunpack.c.l.b16 %v3052
    %v4352 = vunpack.c.h.b16 %v3052
    %v4353 = vunpack.c.l.b16 %v3053
    %v4354 = vunpack.c.h.b16 %v3053
    %v4355 = vunpack.c.l.b16 %v3054
    %v4356 = vunpack.c.l.b16 %v3055
    %v4357 = vunpack.c.h.b16 %v3055
    %v4358 = vunpack.c.l.b16 %v3056
    %v4359 = vunpack.c.h.b16 %v3056
    %v4360 = vunpack.c.l.b16 %v3057
    %v4361 = vunpack.c.h.b16 %v3057
    %v4362 = vunpack.c.l.b16 %v3058
    %v4363 = vunpack.c.l.b16 %v3059
    %v4364 = vunpack.c.h.b16 %v3059
    %v4365 = vunpack.c.l.b16 %v3060
    %v4366 = vunpack.c.h.b16 %v3060
    %v4367 = vunpack.c.l.b16 %v3061
    %v4368 = vunpack.c.h.b16 %v3061
    %v4369 = vunpack.c.l.b16 %v3062
    %v4370 = vunpack.c.l.b16 %v3063
    %v4371 = vunpack.c.h.b16 %v3063
    %v4372 = vunpack.c.l.b16 %v3064
    %v4373 = vunpack.c.h.b16 %v3064
    %v4374 = vunpack.c.l.b16 %v3065
    %v4375 = vunpack.c.h.b16 %v3065
    %v4376 = vunpack.c.l.b16 %v3066
    %v4377 = vunpack.c.l.b16 %v3067
    %v4378 = vunpack.c.h.b16 %v3067
    %v4379 = vunpack.c.l.b16 %v3068
    %v4380 = vunpack.c.h.b16 %v3068
    %v4381 = vunpack.c.l.b16 %v3069
    %v4382 = vunpack.c.h.b16 %v3069
    %v4383 = vunpack.c.l.b16 %v3070
    %v4384 = vunpack.c.l.b16 %v3071
    %v4385 = vunpack.c.h.b16 %v3071
    %v4386 = vunpack.c.l.b16 %v3072
    %v4387 = vunpack.c.h.b16 %v3072
    %v4388 = vunpack.c.l.b16 %v3073
    %v4389 = vunpack.c.h.b16 %v3073
    %v4390 = vunpack.c.l.b16 %v3074
    %v4391 = vunpack.c.l.b16 %v3075
    %v4392 = vunpack.c.h.b16 %v3075
    %v4393 = vunpack.c.l.b16 %v3076
    %v4394 = vunpack.c.h.b16 %v3076
    %v4395 = vunpack.c.l.b16 %v3077
    %v4396 = vunpack.c.h.b16 %v3077
    %v4397 = vunpack.c.l.b16 %v3078
    %v4398 = vunpack.c.l.b16 %v3079
    %v4399 = vunpack.c.h.b16 %v3079
    %v4400 = vunpack.c.l.b16 %v3080
    %v4401 = vunpack.c.h.b16 %v3080
    %v4402 = vunpack.c.l.b16 %v3081
    %v4403 = vunpack.c.h.b16 %v3081
    %v4404 = vunpack.c.l.b16 %v3082
    %v4405 = vunpack.c.l.b16 %v3083
    %v4406 = vunpack.c.h.b16 %v3083
    %v4407 = vunpack.c.l.b16 %v3084
    %v4408 = vunpack.c.h.b16 %v3084
    %v4409 = vunpack.c.l.b16 %v3085
    %v4410 = vunpack.c.h.b16 %v3085
    %v4411 = vunpack.c.l.b16 %v3086
    %v4412 = vunpack.c.l.b16 %v3087
    %v4413 = vunpack.c.h.b16 %v3087
    %v4414 = vunpack.c.l.b16 %v3088
    %v4415 = vunpack.c.h.b16 %v3088
    %v4416 = vunpack.c.l.b16 %v3089
    %v4417 = vunpack.c.h.b16 %v3089
    %v4418 = vunpack.c.l.b16 %v3090
    %v4419 = vunpack.c.l.b16 %v3091
    %v4420 = vunpack.c.h.b16 %v3091
    %v4421 = vunpack.c.l.b16 %v3092
    %v4422 = vunpack.c.h.b16 %v3092
    %v4423 = vunpack.c.l.b16 %v3093
    %v4424 = vunpack.c.h.b16 %v3093
    %v4425 = vunpack.c.l.b16 %v3094
    %v4426 = vunpack.c.l.b16 %v3095
    %v4427 = vunpack.c.h.b16 %v3095
    %v4428 = vunpack.c.l.b16 %v3096
    %v4429 = vunpack.c.h.b16 %v3096
    %v4430 = vunpack.c.l.b16 %v3097
    %v4431 = vunpack.c.h.b16 %v3097
    %v4432 = vunpack.c.l.b16 %v3098
    %v4433 = vunpack.c.l.b16 %v3099
    %v4434 = vunpack.c.h.b16 %v3099
    %v4435 = vunpack.c.l.b16 %v3100
    %v4436 = vunpack.c.h.b16 %v3100
    %v4437 = vunpack.c.l.b16 %v3101
    %v4438 = vunpack.c.h.b16 %v3101
    %v4439 = vunpack.c.l.b16 %v3102
    %v4440 = vunpack.c.l.b16 %v3103
    %v4441 = vunpack.c.h.b16 %v3103
    %v4442 = vunpack.c.l.b16 %v3104
    %v4443 = vunpack.c.h.b16 %v3104
    %v4444 = vunpack.c.l.b16 %v3105
    %v4445 = vunpack.c.h.b16 %v3105
    %v4446 = vunpack.c.l.b16 %v3106
    %v4447 = vunpack.c.l.b16 %v3107
    %v4448 = vunpack.c.h.b16 %v3107
    %v4449 = vunpack.c.l.b16 %v3108
    %v4450 = vunpack.c.h.b16 %v3108
    %v4451 = vunpack.c.l.b16 %v3109
    %v4452 = vunpack.c.h.b16 %v3109
    %v4453 = vunpack.c.l.b16 %v3110
    %v4454 = vunpack.c.l.b16 %v3111
    %v4455 = vunpack.c.h.b16 %v3111
    %v4456 = vunpack.c.l.b16 %v3112
    %v4457 = vunpack.c.h.b16 %v3112
    %v4458 = vunpack.c.l.b16 %v3113
    %v4459 = vunpack.c.h.b16 %v3113
    %v4460 = vunpack.c.l.b16 %v3114
    %v4461 = vunpack.c.l.b16 %v3115
    %v4462 = vunpack.c.h.b16 %v3115
    %v4463 = vunpack.c.l.b16 %v3116
    %v4464 = vunpack.c.h.b16 %v3116
    %v4465 = vunpack.c.l.b16 %v3117
    %v4466 = vunpack.c.h.b16 %v3117
    %v4467 = vunpack.c.l.b16 %v3118
    %v4468 = vunpack.c.l.b16 %v3119
    %v4469 = vunpack.c.h.b16 %v3119
    %v4470 = vunpack.c.l.b16 %v3120
    %v4471 = vunpack.c.h.b16 %v3120
    %v4472 = vunpack.c.l.b16 %v3121
    %v4473 = vunpack.c.h.b16 %v3121
    %v4474 = vunpack.c.l.b16 %v3122
    %v4475 = vunpack.c.l.b16 %v3123
    %v4476 = vunpack.c.h.b16 %v3123
    %v4477 = vunpack.c.l.b16 %v3124
    %v4478 = vunpack.c.h.b16 %v3124
    %v4479 = vunpack.c.l.b16 %v3125
    %v4480 = vunpack.c.h.b16 %v3125
    %v4481 = vunpack.c.l.b16 %v3126
    %v4482 = vunpack.c.l.b16 %v3127
    %v4483 = vunpack.c.h.b16 %v3127
    %v4484 = vunpack.c.l.b16 %v3128
    %v4485 = vunpack.c.h.b16 %v3128
    %v4486 = vunpack.c.l.b16 %v3129
    %v4487 = vunpack.c.h.b16 %v3129
    %v4488 = vunpack.c.l.b16 %v3130
    %v4489 = vunpack.c.l.b16 %v3131
    %v4490 = vunpack.c.h.b16 %v3131
    %v4491 = vunpack.c.l.b16 %v3132
    %v4492 = vunpack.c.h.b16 %v3132
    %v4493 = vunpack.c.l.b16 %v3133
    %v4494 = vunpack.c.h.b16 %v3133
    %v4495 = vunpack.c.l.b16 %v3134
    %v4496 = vunpack.c.l.b16 %v3135
    %v4497 = vunpack.c.h.b16 %v3135
    %v4498 = vunpack.c.l.b16 %v3136
    %v4499 = vunpack.c.h.b16 %v3136
    %v4500 = vunpack.c.l.b16 %v3137
    %v4501 = vunpack.c.h.b16 %v3137
    %v4502 = vunpack.c.l.b16 %v3138
    %v4503 = vunpack.c.l.b16 %v3139
    %v4504 = vunpack.c.h.b16 %v3139
    %v4505 = vunpack.c.l.b16 %v3140
    %v4506 = vunpack.c.h.b16 %v3140
    %v4507 = vunpack.c.l.b16 %v3141
    %v4508 = vunpack.c.h.b16 %v3141
    %v4509 = vunpack.c.l.b16 %v3142
    %v4510 = vunpack.c.l.b16 %v3143
    %v4511 = vunpack.c.h.b16 %v3143
    %v4512 = vunpack.c.l.b16 %v3144
    %v4513 = vunpack.c.h.b16 %v3144
    %v4514 = vunpack.c.l.b16 %v3145
    %v4515 = vunpack.c.h.b16 %v3145
    %v4516 = vunpack.c.l.b16 %v3146
    %v4517 = vunpack.c.l.b16 %v3147
    %v4518 = vunpack.c.h.b16 %v3147
    %v4519 = vunpack.c.l.b16 %v3148
    %v4520 = vunpack.c.h.b16 %v3148
    %v4521 = vunpack.c.l.b16 %v3149
    %v4522 = vunpack.c.h.b16 %v3149
    %v4523 = vunpack.c.l.b16 %v3150
    %v4524 = vunpack.c.l.b16 %v3151
    %v4525 = vunpack.c.h.b16 %v3151
    %v4526 = vunpack.c.l.b16 %v3152
    %v4527 = vunpack.c.h.b16 %v3152
    %v4528 = vunpack.c.l.b16 %v3153
    %v4529 = vunpack.c.h.b16 %v3153
    %v4530 = vunpack.c.l.b16 %v3154
    %v4531 = vunpack.c.l.b16 %v3155
    %v4532 = vunpack.c.h.b16 %v3155
    %v4533 = vunpack.c.l.b16 %v3156
    %v4534 = vunpack.c.h.b16 %v3156
    %v4535 = vunpack.c.l.b16 %v3157
    %v4536 = vunpack.c.h.b16 %v3157
    %v4537 = vunpack.c.l.b16 %v3158
    %v4538 = vunpack.c.l.b16 %v3159
    %v4539 = vunpack.c.h.b16 %v3159
    %v4540 = vunpack.c.l.b16 %v3160
    %v4541 = vunpack.c.h.b16 %v3160
    %v4542 = vunpack.c.l.b16 %v3161
    %v4543 = vunpack.c.h.b16 %v3161
    %v4544 = vunpack.c.l.b16 %v3162
    %v4545 = vunpack.c.l.b16 %v3163
    %v4546 = vunpack.c.h.b16 %v3163
    %v4547 = vunpack.c.l.b16 %v3164
    %v4548 = vunpack.c.h.b16 %v3164
    %v4549 = vunpack.c.l.b16 %v3165
    %v4550 = vunpack.c.h.b16 %v3165
    %v4551 = vunpack.c.l.b16 %v3166
    %v4552 = vunpack.c.l.b16 %v3167
    %v4553 = vunpack.c.h.b16 %v3167
    %v4554 = vunpack.c.l.b16 %v3168
    %v4555 = vunpack.c.h.b16 %v3168
    %v4556 = vunpack.c.l.b16 %v3169
    %v4557 = vunpack.c.h.b16 %v3169
    %v4558 = vunpack.c.l.b16 %v3170
    %v4559 = vunpack.c.l.b16 %v3171
    %v4560 = vunpack.c.h.b16 %v3171
    %v4561 = vunpack.c.l.b16 %v3172
    %v4562 = vunpack.c.h.b16 %v3172
    %v4563 = vunpack.c.l.b16 %v3173
    %v4564 = vunpack.c.h.b16 %v3173
    %v4565 = vunpack.c.l.b16 %v3174
    %v4566 = vunpack.c.l.b16 %v3175
    %v4567 = vunpack.c.h.b16 %v3175
    %v4568 = vunpack.c.l.b16 %v3176
    %v4569 = vunpack.c.h.b16 %v3176
    %v4570 = vunpack.c.l.b16 %v3177
    %v4571 = vunpack.c.h.b16 %v3177
    %v4572 = vunpack.c.l.b16 %v3178
    %v4573 = vunpack.c.l.b16 %v3179
    %v4574 = vunpack.c.h.b16 %v3179
    %v4575 = vunpack.c.l.b16 %v3180
    %v4576 = vunpack.c.h.b16 %v3180
    %v4577 = vunpack.c.l.b16 %v3181
    %v4578 = vunpack.c.h.b16 %v3181
    %v4579 = vunpack.c.l.b16 %v3182
    %v4580 = vunpack.c.l.b16 %v3183
    %v4581 = vunpack.c.h.b16 %v3183
    %v4582 = vunpack.c.l.b16 %v3184
    %v4583 = vunpack.c.h.b16 %v3184
    %v4584 = vunpack.c.l.b16 %v3185
    %v4585 = vunpack.c.h.b16 %v3185
    %v4586 = vunpack.c.l.b16 %v3186
    %v4587 = vunpack.c.l.b16 %v3187
    %v4588 = vunpack.c.h.b16 %v3187
    %v4589 = vunpack.c.l.b16 %v3188
    %v4590 = vunpack.c.h.b16 %v3188
    %v4591 = vunpack.c.l.b16 %v3189
    %v4592 = vunpack.c.h.b16 %v3189
    %v4593 = vunpack.c.l.b16 %v3190
    %v4594 = vunpack.c.l.b16 %v3191
    %v4595 = vunpack.c.h.b16 %v3191
    %v4596 = vunpack.c.l.b16 %v3192
    %v4597 = vunpack.c.h.b16 %v3192
    %v4598 = vunpack.c.l.b16 %v3193
    %v4599 = vunpack.c.h.b16 %v3193
    %v4600 = vunpack.c.l.b16 %v3194
    %v4601 = vunpack.c.l.b16 %v3195
    %v4602 = vunpack.c.h.b16 %v3195
    %v4603 = vunpack.c.l.b16 %v3196
    %v4604 = vunpack.c.h.b16 %v3196
    %v4605 = vunpack.c.l.b16 %v3197
    %v4606 = vunpack.c.h.b16 %v3197
    %v4607 = vunpack.c.l.b16 %v3198
    %v4608 = vunpack.c.l.b16 %v3199
    %v4609 = vunpack.c.h.b16 %v3199
    %v4610 = vunpack.c.l.b16 %v3200
    %v4611 = vunpack.c.h.b16 %v3200
    %v4612 = vunpack.c.l.b16 %v3201
    %v4613 = vunpack.c.h.b16 %v3201
    %v4614 = vunpack.c.l.b16 %v3202
    %v4615 = vunpack.c.l.b16 %v3203
    %v4616 = vunpack.c.h.b16 %v3203
    %v4617 = vunpack.c.l.b16 %v3204
    %v4618 = vunpack.c.h.b16 %v3204
    %v4619 = vunpack.c.l.b16 %v3205
    %v4620 = vunpack.c.h.b16 %v3205
    %v4621 = vunpack.c.l.b16 %v3206
    %v4622 = vunpack.c.l.b16 %v3207
    %v4623 = vunpack.c.h.b16 %v3207
    %v4624 = vunpack.c.l.b16 %v3208
    %v4625 = vunpack.c.h.b16 %v3208
    %v4626 = vunpack.c.l.b16 %v3209
    %v4627 = vunpack.c.h.b16 %v3209
    %v4628 = vunpack.c.l.b16 %v3210
    %v4629 = vunpack.c.l.b16 %v3211
    %v4630 = vunpack.c.h.b16 %v3211
    %v4631 = vunpack.c.l.b16 %v3212
    %v4632 = vunpack.c.h.b16 %v3212
    %v4633 = vunpack.c.l.b16 %v3213
    %v4634 = vunpack.c.h.b16 %v3213
    %v4635 = vunpack.c.l.b16 %v3214
    %v4636 = vunpack.c.l.b16 %v3215
    %v4637 = vunpack.c.h.b16 %v3215
    %v4638 = vunpack.c.l.b16 %v3216
    %v4639 = vunpack.c.h.b16 %v3216
    %v4640 = vunpack.c.l.b16 %v3217
    %v4641 = vunpack.c.h.b16 %v3217
    %v4642 = vunpack.c.l.b16 %v3218
    %v4643 = vunpack.c.l.b16 %v3219
    %v4644 = vunpack.c.h.b16 %v3219
    %v4645 = vunpack.c.l.b16 %v3220
    %v4646 = vunpack.c.h.b16 %v3220
    %v4647 = vunpack.c.l.b16 %v3221
    %v4648 = vunpack.c.h.b16 %v3221
    %v4649 = vunpack.c.l.b16 %v3222
    %v4650 = vunpack.c.l.b16 %v3223
    %v4651 = vunpack.c.h.b16 %v3223
    %v4652 = vunpack.c.l.b16 %v3224
    %v4653 = vunpack.c.h.b16 %v3224
    %v4654 = vunpack.c.l.b16 %v3225
    %v4655 = vunpack.c.h.b16 %v3225
    %v4656 = vunpack.c.l.b16 %v3226
    %v4657 = vunpack.c.l.b16 %v3227
    %v4658 = vunpack.c.h.b16 %v3227
    %v4659 = vunpack.c.l.b16 %v3228
    %v4660 = vunpack.c.h.b16 %v3228
    %v4661 = vunpack.c.l.b16 %v3229
    %v4662 = vunpack.c.h.b16 %v3229
    %v4663 = vunpack.c.l.b16 %v3230
    %v4664 = vunpack.c.l.b16 %v3231
    %v4665 = vunpack.c.h.b16 %v3231
    %v4666 = vunpack.c.l.b16 %v3232
    %v4667 = vunpack.c.h.b16 %v3232
    %v4668 = vunpack.c.l.b16 %v3233
    %v4669 = vunpack.c.h.b16 %v3233
    %v4670 = vunpack.c.l.b16 %v3234
    %v4671 = vunpack.c.l.b16 %v3235
    %v4672 = vunpack.c.h.b16 %v3235
    %v4673 = vunpack.c.l.b16 %v3236
    %v4674 = vunpack.c.h.b16 %v3236
    %v4675 = vunpack.c.l.b16 %v3237
    %v4676 = vunpack.c.h.b16 %v3237
    %v4677 = vunpack.c.l.b16 %v3238
    %v4678 = vunpack.c.l.b16 %v3239
    %v4679 = vunpack.c.h.b16 %v3239
    %v4680 = vunpack.c.l.b16 %v3240
    %v4681 = vunpack.c.h.b16 %v3240
    %v4682 = vunpack.c.l.b16 %v3241
    %v4683 = vunpack.c.h.b16 %v3241
    %v4684 = vunpack.c.l.b16 %v3242
    %v4685 = vunpack.c.l.b16 %v3243
    %v4686 = vunpack.c.h.b16 %v3243
    %v4687 = vunpack.c.l.b16 %v3244
    %v4688 = vunpack.c.h.b16 %v3244
    %v4689 = vunpack.c.l.b16 %v3245
    %v4690 = vunpack.c.h.b16 %v3245
    %v4691 = vunpack.c.l.b16 %v3246
    %v4692 = vpack.c.b16 %v3803, %v3796
    %v4693 = vpack.c.b16 %v3804, %v3797
    %v4694 = vpack.c.b16 %v3805, %v3798
    %v4695 = vpack.c.b16 %v3806, %v3799
    %v4696 = vpack.c.b16 %v3807, %v3800
    %v4697 = vpack.c.b16 %v3808, %v3801
    %v4698 = vpack.c.b16 %v3809, %v3802
    %v4699 = vpack.c.b16 %v3817, %v3810
    %v4700 = vpack.c.b16 %v3818, %v3811
    %v4701 = vpack.c.b16 %v3819, %v3812
    %v4702 = vpack.c.b16 %v3820, %v3813
    %v4703 = vpack.c.b16 %v3821, %v3814
    %v4704 = vpack.c.b16 %v3822, %v3815
    %v4705 = vpack.c.b16 %v3823, %v3816
    %v4706 = vpack.c.b16 %v3831, %v3824
    %v4707 = vpack.c.b16 %v3832, %v3825
    %v4708 = vpack.c.b16 %v3833, %v3826
    %v4709 = vpack.c.b16 %v3834, %v3827
    %v4710 = vpack.c.b16 %v3835, %v3828
    %v4711 = vpack.c.b16 %v3836, %v3829
    %v4712 = vpack.c.b16 %v3837, %v3830
    %v4713 = vpack.c.b16 %v3845, %v3838
    %v4714 = vpack.c.b16 %v3846, %v3839
    %v4715 = vpack.c.b16 %v3847, %v3840
    %v4716 = vpack.c.b16 %v3848, %v3841
    %v4717 = vpack.c.b16 %v3849, %v3842
    %v4718 = vpack.c.b16 %v3850, %v3843
    %v4719 = vpack.c.b16 %v3851, %v3844
    %v4720 = vpack.c.b16 %v3859, %v3852
    %v4721 = vpack.c.b16 %v3860, %v3853
    %v4722 = vpack.c.b16 %v3861, %v3854
    %v4723 = vpack.c.b16 %v3862, %v3855
    %v4724 = vpack.c.b16 %v3863, %v3856
    %v4725 = vpack.c.b16 %v3864, %v3857
    %v4726 = vpack.c.b16 %v3865, %v3858
    %v4727 = vpack.c.b16 %v3873, %v3866
    %v4728 = vpack.c.b16 %v3874, %v3867
    %v4729 = vpack.c.b16 %v3875, %v3868
    %v4730 = vpack.c.b16 %v3876, %v3869
    %v4731 = vpack.c.b16 %v3877, %v3870
    %v4732 = vpack.c.b16 %v3878, %v3871
    %v4733 = vpack.c.b16 %v3879, %v3872
    %v4734 = vpack.c.b16 %v3887, %v3880
    %v4735 = vpack.c.b16 %v3888, %v3881
    %v4736 = vpack.c.b16 %v3889, %v3882
    %v4737 = vpack.c.b16 %v3890, %v3883
    %v4738 = vpack.c.b16 %v3891, %v3884
    %v4739 = vpack.c.b16 %v3892, %v3885
    %v4740 = vpack.c.b16 %v3893, %v3886
    %v4741 = vpack.c.b16 %v3901, %v3894
    %v4742 = vpack.c.b16 %v3902, %v3895
    %v4743 = vpack.c.b16 %v3903, %v3896
    %v4744 = vpack.c.b16 %v3904, %v3897
    %v4745 = vpack.c.b16 %v3905, %v3898
    %v4746 = vpack.c.b16 %v3906, %v3899
    %v4747 = vpack.c.b16 %v3907, %v3900
    %v4748 = vpack.c.b16 %v3915, %v3908
    %v4749 = vpack.c.b16 %v3916, %v3909
    %v4750 = vpack.c.b16 %v3917, %v3910
    %v4751 = vpack.c.b16 %v3918, %v3911
    %v4752 = vpack.c.b16 %v3919, %v3912
    %v4753 = vpack.c.b16 %v3920, %v3913
    %v4754 = vpack.c.b16 %v3921, %v3914
    %v4755 = vpack.c.b16 %v3929, %v3922
    %v4756 = vpack.c.b16 %v3930, %v3923
    %v4757 = vpack.c.b16 %v3931, %v3924
    %v4758 = vpack.c.b16 %v3932, %v3925
    %v4759 = vpack.c.b16 %v3933, %v3926
    %v4760 = vpack.c.b16 %v3934, %v3927
    %v4761 = vpack.c.b16 %v3935, %v3928
    %v4762 = vpack.c.b16 %v3943, %v3936
    %v4763 = vpack.c.b16 %v3944, %v3937
    %v4764 = vpack.c.b16 %v3945, %v3938
    %v4765 = vpack.c.b16 %v3946, %v3939
    %v4766 = vpack.c.b16 %v3947, %v3940
    %v4767 = vpack.c.b16 %v3948, %v3941
    %v4768 = vpack.c.b16 %v3949, %v3942
    %v4769 = vpack.c.b16 %v3957, %v3950
    %v4770 = vpack.c.b16 %v3958, %v3951
    %v4771 = vpack.c.b16 %v3959, %v3952
    %v4772 = vpack.c.b16 %v3960, %v3953
    %v4773 = vpack.c.b16 %v3961, %v3954
    %v4774 = vpack.c.b16 %v3962, %v3955
    %v4775 = vpack.c.b16 %v3963, %v3956
    %v4776 = vpack.c.b16 %v3971, %v3964
    %v4777 = vpack.c.b16 %v3972, %v3965
    %v4778 = vpack.c.b16 %v3973, %v3966
    %v4779 = vpack.c.b16 %v3974, %v3967
    %v4780 = vpack.c.b16 %v3975, %v3968
    %v4781 = vpack.c.b16 %v3976, %v3969
    %v4782 = vpack.c.b16 %v3977, %v3970
    %v4783 = vpack.c.b16 %v3985, %v3978
    %v4784 = vpack.c.b16 %v3986, %v3979
    %v4785 = vpack.c.b16 %v3987, %v3980
    %v4786 = vpack.c.b16 %v3988, %v3981
    %v4787 = vpack.c.b16 %v3989, %v3982
    %v4788 = vpack.c.b16 %v3990, %v3983
    %v4789 = vpack.c.b16 %v3991, %v3984
    %v4790 = vpack.c.b16 %v3999, %v3992
    %v4791 = vpack.c.b16 %v4000, %v3993
    %v4792 = vpack.c.b16 %v4001, %v3994
    %v4793 = vpack.c.b16 %v4002, %v3995
    %v4794 = vpack.c.b16 %v4003, %v3996
    %v4795 = vpack.c.b16 %v4004, %v3997
    %v4796 = vpack.c.b16 %v4005, %v3998
    %v4797 = vpack.c.b16 %v4013, %v4006
    %v4798 = vpack.c.b16 %v4014, %v4007
    %v4799 = vpack.c.b16 %v4015, %v4008
    %v4800 = vpack.c.b16 %v4016, %v4009
    %v4801 = vpack.c.b16 %v4017, %v4010
    %v4802 = vpack.c.b16 %v4018, %v4011
    %v4803 = vpack.c.b16 %v4019, %v4012
    %v4804 = vpack.c.b16 %v4027, %v4020
    %v4805 = vpack.c.b16 %v4028, %v4021
    %v4806 = vpack.c.b16 %v4029, %v4022
    %v4807 = vpack.c.b16 %v4030, %v4023
    %v4808 = vpack.c.b16 %v4031, %v4024
    %v4809 = vpack.c.b16 %v4032, %v4025
    %v4810 = vpack.c.b16 %v4033, %v4026
    %v4811 = vpack.c.b16 %v4041, %v4034
    %v4812 = vpack.c.b16 %v4042, %v4035
    %v4813 = vpack.c.b16 %v4043, %v4036
    %v4814 = vpack.c.b16 %v4044, %v4037
    %v4815 = vpack.c.b16 %v4045, %v4038
    %v4816 = vpack.c.b16 %v4046, %v4039
    %v4817 = vpack.c.b16 %v4047, %v4040
    %v4818 = vpack.c.b16 %v4055, %v4048
    %v4819 = vpack.c.b16 %v4056, %v4049
    %v4820 = vpack.c.b16 %v4057, %v4050
    %v4821 = vpack.c.b16 %v4058, %v4051
    %v4822 = vpack.c.b16 %v4059, %v4052
    %v4823 = vpack.c.b16 %v4060, %v4053
    %v4824 = vpack.c.b16 %v4061, %v4054
    %v4825 = vpack.c.b16 %v4069, %v4062
    %v4826 = vpack.c.b16 %v4070, %v4063
    %v4827 = vpack.c.b16 %v4071, %v4064
    %v4828 = vpack.c.b16 %v4072, %v4065
    %v4829 = vpack.c.b16 %v4073, %v4066
    %v4830 = vpack.c.b16 %v4074, %v4067
    %v4831 = vpack.c.b16 %v4075, %v4068
    %v4832 = vpack.c.b16 %v4083, %v4076
    %v4833 = vpack.c.b16 %v4084, %v4077
    %v4834 = vpack.c.b16 %v4085, %v4078
    %v4835 = vpack.c.b16 %v4086, %v4079
    %v4836 = vpack.c.b16 %v4087, %v4080
    %v4837 = vpack.c.b16 %v4088, %v4081
    %v4838 = vpack.c.b16 %v4089, %v4082
    %v4839 = vpack.c.b16 %v4097, %v4090
    %v4840 = vpack.c.b16 %v4098, %v4091
    %v4841 = vpack.c.b16 %v4099, %v4092
    %v4842 = vpack.c.b16 %v4100, %v4093
    %v4843 = vpack.c.b16 %v4101, %v4094
    %v4844 = vpack.c.b16 %v4102, %v4095
    %v4845 = vpack.c.b16 %v4103, %v4096
    %v4846 = vpack.c.b16 %v4111, %v4104
    %v4847 = vpack.c.b16 %v4112, %v4105
    %v4848 = vpack.c.b16 %v4113, %v4106
    %v4849 = vpack.c.b16 %v4114, %v4107
    %v4850 = vpack.c.b16 %v4115, %v4108
    %v4851 = vpack.c.b16 %v4116, %v4109
    %v4852 = vpack.c.b16 %v4117, %v4110
    %v4853 = vpack.c.b16 %v4125, %v4118
    %v4854 = vpack.c.b16 %v4126, %v4119
    %v4855 = vpack.c.b16 %v4127, %v4120
    %v4856 = vpack.c.b16 %v4128, %v4121
    %v4857 = vpack.c.b16 %v4129, %v4122
    %v4858 = vpack.c.b16 %v4130, %v4123
    %v4859 = vpack.c.b16 %v4131, %v4124
    %v4860 = vpack.c.b16 %v4139, %v4132
    %v4861 = vpack.c.b16 %v4140, %v4133
    %v4862 = vpack.c.b16 %v4141, %v4134
    %v4863 = vpack.c.b16 %v4142, %v4135
    %v4864 = vpack.c.b16 %v4143, %v4136
    %v4865 = vpack.c.b16 %v4144, %v4137
    %v4866 = vpack.c.b16 %v4145, %v4138
    %v4867 = vpack.c.b16 %v4153, %v4146
    %v4868 = vpack.c.b16 %v4154, %v4147
    %v4869 = vpack.c.b16 %v4155, %v4148
    %v4870 = vpack.c.b16 %v4156, %v4149
    %v4871 = vpack.c.b16 %v4157, %v4150
    %v4872 = vpack.c.b16 %v4158, %v4151
    %v4873 = vpack.c.b16 %v4159, %v4152
    %v4874 = vpack.c.b16 %v4167, %v4160
    %v4875 = vpack.c.b16 %v4168, %v4161
    %v4876 = vpack.c.b16 %v4169, %v4162
    %v4877 = vpack.c.b16 %v4170, %v4163
    %v4878 = vpack.c.b16 %v4171, %v4164
    %v4879 = vpack.c.b16 %v4172, %v4165
    %v4880 = vpack.c.b16 %v4173, %v4166
    %v4881 = vpack.c.b16 %v4181, %v4174
    %v4882 = vpack.c.b16 %v4182, %v4175
    %v4883 = vpack.c.b16 %v4183, %v4176
    %v4884 = vpack.c.b16 %v4184, %v4177
    %v4885 = vpack.c.b16 %v4185, %v4178
    %v4886 = vpack.c.b16 %v4186, %v4179
    %v4887 = vpack.c.b16 %v4187, %v4180
    %v4888 = vpack.c.b16 %v4195, %v4188
    %v4889 = vpack.c.b16 %v4196, %v4189
    %v4890 = vpack.c.b16 %v4197, %v4190
    %v4891 = vpack.c.b16 %v4198, %v4191
    %v4892 = vpack.c.b16 %v4199, %v4192
    %v4893 = vpack.c.b16 %v4200, %v4193
    %v4894 = vpack.c.b16 %v4201, %v4194
    %v4895 = vpack.c.b16 %v4209, %v4202
    %v4896 = vpack.c.b16 %v4210, %v4203
    %v4897 = vpack.c.b16 %v4211, %v4204
    %v4898 = vpack.c.b16 %v4212, %v4205
    %v4899 = vpack.c.b16 %v4213, %v4206
    %v4900 = vpack.c.b16 %v4214, %v4207
    %v4901 = vpack.c.b16 %v4215, %v4208
    %v4902 = vpack.c.b16 %v4223, %v4216
    %v4903 = vpack.c.b16 %v4224, %v4217
    %v4904 = vpack.c.b16 %v4225, %v4218
    %v4905 = vpack.c.b16 %v4226, %v4219
    %v4906 = vpack.c.b16 %v4227, %v4220
    %v4907 = vpack.c.b16 %v4228, %v4221
    %v4908 = vpack.c.b16 %v4229, %v4222
    %v4909 = vpack.c.b16 %v4237, %v4230
    %v4910 = vpack.c.b16 %v4238, %v4231
    %v4911 = vpack.c.b16 %v4239, %v4232
    %v4912 = vpack.c.b16 %v4240, %v4233
    %v4913 = vpack.c.b16 %v4241, %v4234
    %v4914 = vpack.c.b16 %v4242, %v4235
    %v4915 = vpack.c.b16 %v4243, %v4236
    %v4916 = vpack.c.b16 %v4251, %v4244
    %v4917 = vpack.c.b16 %v4252, %v4245
    %v4918 = vpack.c.b16 %v4253, %v4246
    %v4919 = vpack.c.b16 %v4254, %v4247
    %v4920 = vpack.c.b16 %v4255, %v4248
    %v4921 = vpack.c.b16 %v4256, %v4249
    %v4922 = vpack.c.b16 %v4257, %v4250
    %v4923 = vpack.c.b16 %v4265, %v4258
    %v4924 = vpack.c.b16 %v4266, %v4259
    %v4925 = vpack.c.b16 %v4267, %v4260
    %v4926 = vpack.c.b16 %v4268, %v4261
    %v4927 = vpack.c.b16 %v4269, %v4262
    %v4928 = vpack.c.b16 %v4270, %v4263
    %v4929 = vpack.c.b16 %v4271, %v4264
    %v4930 = vpack.c.b16 %v4279, %v4272
    %v4931 = vpack.c.b16 %v4280, %v4273
    %v4932 = vpack.c.b16 %v4281, %v4274
    %v4933 = vpack.c.b16 %v4282, %v4275
    %v4934 = vpack.c.b16 %v4283, %v4276
    %v4935 = vpack.c.b16 %v4284, %v4277
    %v4936 = vpack.c.b16 %v4285, %v4278
    %v4937 = vpack.c.b16 %v4293, %v4286
    %v4938 = vpack.c.b16 %v4294, %v4287
    %v4939 = vpack.c.b16 %v4295, %v4288
    %v4940 = vpack.c.b16 %v4296, %v4289
    %v4941 = vpack.c.b16 %v4297, %v4290
    %v4942 = vpack.c.b16 %v4298, %v4291
    %v4943 = vpack.c.b16 %v4299, %v4292
    %v4944 = vpack.c.b16 %v4307, %v4300
    %v4945 = vpack.c.b16 %v4308, %v4301
    %v4946 = vpack.c.b16 %v4309, %v4302
    %v4947 = vpack.c.b16 %v4310, %v4303
    %v4948 = vpack.c.b16 %v4311, %v4304
    %v4949 = vpack.c.b16 %v4312, %v4305
    %v4950 = vpack.c.b16 %v4313, %v4306
    %v4951 = vpack.c.b16 %v4321, %v4314
    %v4952 = vpack.c.b16 %v4322, %v4315
    %v4953 = vpack.c.b16 %v4323, %v4316
    %v4954 = vpack.c.b16 %v4324, %v4317
    %v4955 = vpack.c.b16 %v4325, %v4318
    %v4956 = vpack.c.b16 %v4326, %v4319
    %v4957 = vpack.c.b16 %v4327, %v4320
    %v4958 = vpack.c.b16 %v4335, %v4328
    %v4959 = vpack.c.b16 %v4336, %v4329
    %v4960 = vpack.c.b16 %v4337, %v4330
    %v4961 = vpack.c.b16 %v4338, %v4331
    %v4962 = vpack.c.b16 %v4339, %v4332
    %v4963 = vpack.c.b16 %v4340, %v4333
    %v4964 = vpack.c.b16 %v4341, %v4334
    %v4965 = vpack.c.b16 %v4349, %v4342
    %v4966 = vpack.c.b16 %v4350, %v4343
    %v4967 = vpack.c.b16 %v4351, %v4344
    %v4968 = vpack.c.b16 %v4352, %v4345
    %v4969 = vpack.c.b16 %v4353, %v4346
    %v4970 = vpack.c.b16 %v4354, %v4347
    %v4971 = vpack.c.b16 %v4355, %v4348
    %v4972 = vpack.c.b16 %v4363, %v4356
    %v4973 = vpack.c.b16 %v4364, %v4357
    %v4974 = vpack.c.b16 %v4365, %v4358
    %v4975 = vpack.c.b16 %v4366, %v4359
    %v4976 = vpack.c.b16 %v4367, %v4360
    %v4977 = vpack.c.b16 %v4368, %v4361
    %v4978 = vpack.c.b16 %v4369, %v4362
    %v4979 = vpack.c.b16 %v4377, %v4370
    %v4980 = vpack.c.b16 %v4378, %v4371
    %v4981 = vpack.c.b16 %v4379, %v4372
    %v4982 = vpack.c.b16 %v4380, %v4373
    %v4983 = vpack.c.b16 %v4381, %v4374
    %v4984 = vpack.c.b16 %v4382, %v4375
    %v4985 = vpack.c.b16 %v4383, %v4376
    %v4986 = vpack.c.b16 %v4391, %v4384
    %v4987 = vpack.c.b16 %v4392, %v4385
    %v4988 = vpack.c.b16 %v4393, %v4386
    %v4989 = vpack.c.b16 %v4394, %v4387
    %v4990 = vpack.c.b16 %v4395, %v4388
    %v4991 = vpack.c.b16 %v4396, %v4389
    %v4992 = vpack.c.b16 %v4397, %v4390
    %v4993 = vpack.c.b16 %v4405, %v4398
    %v4994 = vpack.c.b16 %v4406, %v4399
    %v4995 = vpack.c.b16 %v4407, %v4400
    %v4996 = vpack.c.b16 %v4408, %v4401
    %v4997 = vpack.c.b16 %v4409, %v4402
    %v4998 = vpack.c.b16 %v4410, %v4403
    %v4999 = vpack.c.b16 %v4411, %v4404
    %v5000 = vpack.c.b16 %v4419, %v4412
    %v5001 = vpack.c.b16 %v4420, %v4413
    %v5002 = vpack.c.b16 %v4421, %v4414
    %v5003 = vpack.c.b16 %v4422, %v4415
    %v5004 = vpack.c.b16 %v4423, %v4416
    %v5005 = vpack.c.b16 %v4424, %v4417
    %v5006 = vpack.c.b16 %v4425, %v4418
    %v5007 = vpack.c.b16 %v4433, %v4426
    %v5008 = vpack.c.b16 %v4434, %v4427
    %v5009 = vpack.c.b16 %v4435, %v4428
    %v5010 = vpack.c.b16 %v4436, %v4429
    %v5011 = vpack.c.b16 %v4437, %v4430
    %v5012 = vpack.c.b16 %v4438, %v4431
    %v5013 = vpack.c.b16 %v4439, %v4432
    %v5014 = vpack.c.b16 %v4447, %v4440
    %v5015 = vpack.c.b16 %v4448, %v4441
    %v5016 = vpack.c.b16 %v4449, %v4442
    %v5017 = vpack.c.b16 %v4450, %v4443
    %v5018 = vpack.c.b16 %v4451, %v4444
    %v5019 = vpack.c.b16 %v4452, %v4445
    %v5020 = vpack.c.b16 %v4453, %v4446
    %v5021 = vpack.c.b16 %v4461, %v4454
    %v5022 = vpack.c.b16 %v4462, %v4455
    %v5023 = vpack.c.b16 %v4463, %v4456
    %v5024 = vpack.c.b16 %v4464, %v4457
    %v5025 = vpack.c.b16 %v4465, %v4458
    %v5026 = vpack.c.b16 %v4466, %v4459
    %v5027 = vpack.c.b16 %v4467, %v4460
    %v5028 = vpack.c.b16 %v4475, %v4468
    %v5029 = vpack.c.b16 %v4476, %v4469
    %v5030 = vpack.c.b16 %v4477, %v4470
    %v5031 = vpack.c.b16 %v4478, %v4471
    %v5032 = vpack.c.b16 %v4479, %v4472
    %v5033 = vpack.c.b16 %v4480, %v4473
    %v5034 = vpack.c.b16 %v4481, %v4474
    %v5035 = vpack.c.b16 %v4489, %v4482
    %v5036 = vpack.c.b16 %v4490, %v4483
    %v5037 = vpack.c.b16 %v4491, %v4484
    %v5038 = vpack.c.b16 %v4492, %v4485
    %v5039 = vpack.c.b16 %v4493, %v4486
    %v5040 = vpack.c.b16 %v4494, %v4487
    %v5041 = vpack.c.b16 %v4495, %v4488
    %v5042 = vpack.c.b16 %v4503, %v4496
    %v5043 = vpack.c.b16 %v4504, %v4497
    %v5044 = vpack.c.b16 %v4505, %v4498
    %v5045 = vpack.c.b16 %v4506, %v4499
    %v5046 = vpack.c.b16 %v4507, %v4500
    %v5047 = vpack.c.b16 %v4508, %v4501
    %v5048 = vpack.c.b16 %v4509, %v4502
    %v5049 = vpack.c.b16 %v4517, %v4510
    %v5050 = vpack.c.b16 %v4518, %v4511
    %v5051 = vpack.c.b16 %v4519, %v4512
    %v5052 = vpack.c.b16 %v4520, %v4513
    %v5053 = vpack.c.b16 %v4521, %v4514
    %v5054 = vpack.c.b16 %v4522, %v4515
    %v5055 = vpack.c.b16 %v4523, %v4516
    %v5056 = vpack.c.b16 %v4531, %v4524
    %v5057 = vpack.c.b16 %v4532, %v4525
    %v5058 = vpack.c.b16 %v4533, %v4526
    %v5059 = vpack.c.b16 %v4534, %v4527
    %v5060 = vpack.c.b16 %v4535, %v4528
    %v5061 = vpack.c.b16 %v4536, %v4529
    %v5062 = vpack.c.b16 %v4537, %v4530
    %v5063 = vpack.c.b16 %v4545, %v4538
    %v5064 = vpack.c.b16 %v4546, %v4539
    %v5065 = vpack.c.b16 %v4547, %v4540
    %v5066 = vpack.c.b16 %v4548, %v4541
    %v5067 = vpack.c.b16 %v4549, %v4542
    %v5068 = vpack.c.b16 %v4550, %v4543
    %v5069 = vpack.c.b16 %v4551, %v4544
    %v5070 = vpack.c.b16 %v4559, %v4552
    %v5071 = vpack.c.b16 %v4560, %v4553
    %v5072 = vpack.c.b16 %v4561, %v4554
    %v5073 = vpack.c.b16 %v4562, %v4555
    %v5074 = vpack.c.b16 %v4563, %v4556
    %v5075 = vpack.c.b16 %v4564, %v4557
    %v5076 = vpack.c.b16 %v4565, %v4558
    %v5077 = vpack.c.b16 %v4573, %v4566
    %v5078 = vpack.c.b16 %v4574, %v4567
    %v5079 = vpack.c.b16 %v4575, %v4568
    %v5080 = vpack.c.b16 %v4576, %v4569
    %v5081 = vpack.c.b16 %v4577, %v4570
    %v5082 = vpack.c.b16 %v4578, %v4571
    %v5083 = vpack.c.b16 %v4579, %v4572
    %v5084 = vpack.c.b16 %v4587, %v4580
    %v5085 = vpack.c.b16 %v4588, %v4581
    %v5086 = vpack.c.b16 %v4589, %v4582
    %v5087 = vpack.c.b16 %v4590, %v4583
    %v5088 = vpack.c.b16 %v4591, %v4584
    %v5089 = vpack.c.b16 %v4592, %v4585
    %v5090 = vpack.c.b16 %v4593, %v4586
    %v5091 = vpack.c.b16 %v4601, %v4594
    %v5092 = vpack.c.b16 %v4602, %v4595
    %v5093 = vpack.c.b16 %v4603, %v4596
    %v5094 = vpack.c.b16 %v4604, %v4597
    %v5095 = vpack.c.b16 %v4605, %v4598
    %v5096 = vpack.c.b16 %v4606, %v4599
    %v5097 = vpack.c.b16 %v4607, %v4600
    %v5098 = vpack.c.b16 %v4615, %v4608
    %v5099 = vpack.c.b16 %v4616, %v4609
    %v5100 = vpack.c.b16 %v4617, %v4610
    %v5101 = vpack.c.b16 %v4618, %v4611
    %v5102 = vpack.c.b16 %v4619, %v4612
    %v5103 = vpack.c.b16 %v4620, %v4613
    %v5104 = vpack.c.b16 %v4621, %v4614
    %v5105 = vpack.c.b16 %v4629, %v4622
    %v5106 = vpack.c.b16 %v4630, %v4623
    %v5107 = vpack.c.b16 %v4631, %v4624
    %v5108 = vpack.c.b16 %v4632, %v4625
    %v5109 = vpack.c.b16 %v4633, %v4626
    %v5110 = vpack.c.b16 %v4634, %v4627
    %v5111 = vpack.c.b16 %v4635, %v4628
    %v5112 = vpack.c.b16 %v4643, %v4636
    %v5113 = vpack.c.b16 %v4644, %v4637
    %v5114 = vpack.c.b16 %v4645, %v4638
    %v5115 = vpack.c.b16 %v4646, %v4639
    %v5116 = vpack.c.b16 %v4647, %v4640
    %v5117 = vpack.c.b16 %v4648, %v4641
    %v5118 = vpack.c.b16 %v4649, %v4642
    %v5119 = vpack.c.b16 %v4657, %v4650
    %v5120 = vpack.c.b16 %v4658, %v4651
    %v5121 = vpack.c.b16 %v4659, %v4652
    %v5122 = vpack.c.b16 %v4660, %v4653
    %v5123 = vpack.c.b16 %v4661, %v4654
    %v5124 = vpack.c.b16 %v4662, %v4655
    %v5125 = vpack.c.b16 %v4663, %v4656
    %v5126 = vpack.c.b16 %v4671, %v4664
    %v5127 = vpack.c.b16 %v4672, %v4665
    %v5128 = vpack.c.b16 %v4673, %v4666
    %v5129 = vpack.c.b16 %v4674, %v4667
    %v5130 = vpack.c.b16 %v4675, %v4668
    %v5131 = vpack.c.b16 %v4676, %v4669
    %v5132 = vpack.c.b16 %v4677, %v4670
    %v5133 = vpack.c.b16 %v4685, %v4678
    %v5134 = vpack.c.b16 %v4686, %v4679
    %v5135 = vpack.c.b16 %v4687, %v4680
    %v5136 = vpack.c.b16 %v4688, %v4681
    %v5137 = vpack.c.b16 %v4689, %v4682
    %v5138 = vpack.c.b16 %v4690, %v4683
    %v5139 = vpack.c.b16 %v4691, %v4684
    %5588 = vmatprep.subr.bf16.mxu0 %v4742
    %5589 = vmatpush1.bf16.msra.mxu0 %v4741
    %5590 = vmatprep.subr.bf16.mxu0 %v4735
    %5591 = vmatpush1.bf16.msra.mxu0 %v4734
    %5592 = vmatprep.subr.bf16.mxu0 %v4728
    %5593 = vmatpush1.bf16.msra.mxu0 %v4727
    %5594 = vmatprep.subr.bf16.mxu0 %v4721
    %5595 = vmatpush1.bf16.msra.mxu0 %v4720
    %5596 = vmatprep.subr.bf16.mxu0 %v4714
    %5597 = vmatpush1.bf16.msra.mxu0 %v4713
    %5598 = vmatprep.subr.bf16.mxu0 %v4707
    %5599 = vmatpush1.bf16.msra.mxu0 %v4706
    %5600 = vmatprep.subr.bf16.mxu0 %v4700
    %5601 = vmatpush1.bf16.msra.mxu0 %v4699
    %5602 = vmatprep.subr.bf16.mxu0 %v4693
    %5603 = vmatpush1.bf16.msra.mxu0 %v4692
    %5604 = vmatprep.subr.bf16.mxu0 %v4798
    %5605 = vmatpush2.bf16.msra.mxu0 %v4797
    %5606 = vmatprep.subr.bf16.mxu0 %v4791
    %5607 = vmatpush2.bf16.msra.mxu0 %v4790
    %5608 = vmatprep.subr.bf16.mxu0 %v4784
    %5609 = vmatpush2.bf16.msra.mxu0 %v4783
    %5610 = vmatprep.subr.bf16.mxu0 %v4777
    %5611 = vmatpush2.bf16.msra.mxu0 %v4776
    %5612 = vmatprep.subr.bf16.mxu0 %v4770
    %5613 = vmatpush2.bf16.msra.mxu0 %v4769
    %5614 = vmatprep.subr.bf16.mxu0 %v4763
    %5615 = vmatpush2.bf16.msra.mxu0 %v4762
    %5616 = vmatprep.subr.bf16.mxu0 %v4756
    %5617 = vmatpush2.bf16.msra.mxu0 %v4755
    %5618 = vmatprep.subr.bf16.mxu0 %v4749
    %5619 = vmatpush2.bf16.msra.mxu0 %v4748
    %5620 = vmatprep.mubr.bf16.mxu0 %v2728
    %5621 = vmatmul.mubr.bf16.gmra.mxu0 %v2727
    %v5622 = vpop.f32.mrf.mxu0
    %v5623 = vadd.f32 %v3252, %v5622
    %v5624 = vpop.f32.mrf.mxu0
    %v5625 = vadd.f32 %v3256, %v5624
    %v5626 = vpop.f32.mrf.mxu0
    %v5627 = vpop.f32.mrf.mxu0
    %5628 = vdwg.mxu0
    %5629 = vmatprep.subr.bf16.mxu0 %v4854
    %5630 = vmatpush1.bf16.msra.mxu0 %v4853
    %5631 = vmatprep.subr.bf16.mxu0 %v4847
    %5632 = vmatpush1.bf16.msra.mxu0 %v4846
    %5633 = vmatprep.subr.bf16.mxu0 %v4840
    %5634 = vmatpush1.bf16.msra.mxu0 %v4839
    %5635 = vmatprep.subr.bf16.mxu0 %v4833
    %5636 = vmatpush1.bf16.msra.mxu0 %v4832
    %5637 = vmatprep.subr.bf16.mxu0 %v4826
    %5638 = vmatpush1.bf16.msra.mxu0 %v4825
    %5639 = vmatprep.subr.bf16.mxu0 %v4819
    %5640 = vmatpush1.bf16.msra.mxu0 %v4818
    %5641 = vmatprep.subr.bf16.mxu0 %v4812
    %5642 = vmatpush1.bf16.msra.mxu0 %v4811
    %5643 = vmatprep.subr.bf16.mxu0 %v4805
    %5644 = vmatpush1.bf16.msra.mxu0 %v4804
    %5645 = vmatprep.subr.bf16.mxu0 %v4910
    %5646 = vmatpush2.bf16.msra.mxu0 %v4909
    %5647 = vmatprep.subr.bf16.mxu0 %v4903
    %5648 = vmatpush2.bf16.msra.mxu0 %v4902
    %5649 = vmatprep.subr.bf16.mxu0 %v4896
    %5650 = vmatpush2.bf16.msra.mxu0 %v4895
    %5651 = vmatprep.subr.bf16.mxu0 %v4889
    %5652 = vmatpush2.bf16.msra.mxu0 %v4888
    %5653 = vmatprep.subr.bf16.mxu0 %v4882
    %5654 = vmatpush2.bf16.msra.mxu0 %v4881
    %5655 = vmatprep.subr.bf16.mxu0 %v4875
    %5656 = vmatpush2.bf16.msra.mxu0 %v4874
    %5657 = vmatprep.subr.bf16.mxu0 %v4868
    %5658 = vmatpush2.bf16.msra.mxu0 %v4867
    %5659 = vmatprep.subr.bf16.mxu0 %v4861
    %5660 = vmatpush2.bf16.msra.mxu0 %v4860
    %5661 = vmatprep.mubr.bf16.mxu0 %v2730
    %5662 = vmatmul.mubr.bf16.gmra.mxu0 %v2729
    %v5663 = vpop.f32.mrf.mxu0
    %v5664 = vadd.f32 %v5623, %v5663
    %v5665 = vpop.f32.mrf.mxu0
    %v5666 = vadd.f32 %v5625, %v5665
    %v5667 = vpop.f32.mrf.mxu0
    %v5668 = vpop.f32.mrf.mxu0
    %5669 = vdwg.mxu0
    %5670 = vmatprep.subr.bf16.mxu0 %v4966
    %5671 = vmatpush1.bf16.msra.mxu0 %v4965
    %5672 = vmatprep.subr.bf16.mxu0 %v4959
    %5673 = vmatpush1.bf16.msra.mxu0 %v4958
    %5674 = vmatprep.subr.bf16.mxu0 %v4952
    %5675 = vmatpush1.bf16.msra.mxu0 %v4951
    %5676 = vmatprep.subr.bf16.mxu0 %v4945
    %5677 = vmatpush1.bf16.msra.mxu0 %v4944
    %5678 = vmatprep.subr.bf16.mxu0 %v4938
    %5679 = vmatpush1.bf16.msra.mxu0 %v4937
    %5680 = vmatprep.subr.bf16.mxu0 %v4931
    %5681 = vmatpush1.bf16.msra.mxu0 %v4930
    %5682 = vmatprep.subr.bf16.mxu0 %v4924
    %5683 = vmatpush1.bf16.msra.mxu0 %v4923
    %5684 = vmatprep.subr.bf16.mxu0 %v4917
    %5685 = vmatpush1.bf16.msra.mxu0 %v4916
    %5686 = vmatprep.subr.bf16.mxu0 %v5022
    %5687 = vmatpush2.bf16.msra.mxu0 %v5021
    %5688 = vmatprep.subr.bf16.mxu0 %v5015
    %5689 = vmatpush2.bf16.msra.mxu0 %v5014
    %5690 = vmatprep.subr.bf16.mxu0 %v5008
    %5691 = vmatpush2.bf16.msra.mxu0 %v5007
    %5692 = vmatprep.subr.bf16.mxu0 %v5001
    %5693 = vmatpush2.bf16.msra.mxu0 %v5000
    %5694 = vmatprep.subr.bf16.mxu0 %v4994
    %5695 = vmatpush2.bf16.msra.mxu0 %v4993
    %5696 = vmatprep.subr.bf16.mxu0 %v4987
    %5697 = vmatpush2.bf16.msra.mxu0 %v4986
    %5698 = vmatprep.subr.bf16.mxu0 %v4980
    %5699 = vmatpush2.bf16.msra.mxu0 %v4979
    %5700 = vmatprep.subr.bf16.mxu0 %v4973
    %5701 = vmatpush2.bf16.msra.mxu0 %v4972
    %5702 = vmatprep.mubr.bf16.mxu0 %v2732
    %5703 = vmatmul.mubr.bf16.gmra.mxu0 %v2731
    %v5704 = vpop.f32.mrf.mxu0
    %v5705 = vadd.f32 %v5664, %v5704
    %v5706 = vpop.f32.mrf.mxu0
    %v5707 = vadd.f32 %v5666, %v5706
    %v5708 = vpop.f32.mrf.mxu0
    %v5709 = vpop.f32.mrf.mxu0
    %5710 = vdwg.mxu0
    %5711 = vmatprep.subr.bf16.mxu0 %v5078
    %5712 = vmatpush1.bf16.msra.mxu0 %v5077
    %5713 = vmatprep.subr.bf16.mxu0 %v5071
    %5714 = vmatpush1.bf16.msra.mxu0 %v5070
    %5715 = vmatprep.subr.bf16.mxu0 %v5064
    %5716 = vmatpush1.bf16.msra.mxu0 %v5063
    %5717 = vmatprep.subr.bf16.mxu0 %v5057
    %5718 = vmatpush1.bf16.msra.mxu0 %v5056
    %5719 = vmatprep.subr.bf16.mxu0 %v5050
    %5720 = vmatpush1.bf16.msra.mxu0 %v5049
    %5721 = vmatprep.subr.bf16.mxu0 %v5043
    %5722 = vmatpush1.bf16.msra.mxu0 %v5042
    %5723 = vmatprep.subr.bf16.mxu0 %v5036
    %5724 = vmatpush1.bf16.msra.mxu0 %v5035
    %5725 = vmatprep.subr.bf16.mxu0 %v5029
    %5726 = vmatpush1.bf16.msra.mxu0 %v5028
    %5727 = vmatprep.subr.bf16.mxu0 %v5134
    %5728 = vmatpush2.bf16.msra.mxu0 %v5133
    %5729 = vmatprep.subr.bf16.mxu0 %v5127
    %5730 = vmatpush2.bf16.msra.mxu0 %v5126
    %5731 = vmatprep.subr.bf16.mxu0 %v5120
    %5732 = vmatpush2.bf16.msra.mxu0 %v5119
    %5733 = vmatprep.subr.bf16.mxu0 %v5113
    %5734 = vmatpush2.bf16.msra.mxu0 %v5112
    %5735 = vmatprep.subr.bf16.mxu0 %v5106
    %5736 = vmatpush2.bf16.msra.mxu0 %v5105
    %5737 = vmatprep.subr.bf16.mxu0 %v5099
    %5738 = vmatpush2.bf16.msra.mxu0 %v5098
    %5739 = vmatprep.subr.bf16.mxu0 %v5092
    %5740 = vmatpush2.bf16.msra.mxu0 %v5091
    %5741 = vmatprep.subr.bf16.mxu0 %v5085
    %5742 = vmatpush2.bf16.msra.mxu0 %v5084
    %5743 = vmatprep.mubr.bf16.mxu0 %v2734
    %5744 = vmatmul.mubr.bf16.gmra.mxu0 %v2733
    %v5745 = vpop.f32.mrf.mxu0
    %v5746 = vadd.f32 %v5705, %v5745
    %v5747 = vpop.f32.mrf.mxu0
    %v5748 = vadd.f32 %v5707, %v5747
    %v5749 = vpop.f32.mrf.mxu0
    %v5750 = vpop.f32.mrf.mxu0
    %5751 = vdwg.mxu0
    %5752 = vmatprep.subr.bf16.mxu0 %v4744
    %5753 = vmatpush1.bf16.msra.mxu0 %v4743
    %5754 = vmatprep.subr.bf16.mxu0 %v4737
    %5755 = vmatpush1.bf16.msra.mxu0 %v4736
    %5756 = vmatprep.subr.bf16.mxu0 %v4730
    %5757 = vmatpush1.bf16.msra.mxu0 %v4729
    %5758 = vmatprep.subr.bf16.mxu0 %v4723
    %5759 = vmatpush1.bf16.msra.mxu0 %v4722
    %5760 = vmatprep.subr.bf16.mxu0 %v4716
    %5761 = vmatpush1.bf16.msra.mxu0 %v4715
    %5762 = vmatprep.subr.bf16.mxu0 %v4709
    %5763 = vmatpush1.bf16.msra.mxu0 %v4708
    %5764 = vmatprep.subr.bf16.mxu0 %v4702
    %5765 = vmatpush1.bf16.msra.mxu0 %v4701
    %5766 = vmatprep.subr.bf16.mxu0 %v4695
    %5767 = vmatpush1.bf16.msra.mxu0 %v4694
    %5768 = vmatprep.subr.bf16.mxu0 %v4800
    %5769 = vmatpush2.bf16.msra.mxu0 %v4799
    %5770 = vmatprep.subr.bf16.mxu0 %v4793
    %5771 = vmatpush2.bf16.msra.mxu0 %v4792
    %5772 = vmatprep.subr.bf16.mxu0 %v4786
    %5773 = vmatpush2.bf16.msra.mxu0 %v4785
    %5774 = vmatprep.subr.bf16.mxu0 %v4779
    %5775 = vmatpush2.bf16.msra.mxu0 %v4778
    %5776 = vmatprep.subr.bf16.mxu0 %v4772
    %5777 = vmatpush2.bf16.msra.mxu0 %v4771
    %5778 = vmatprep.subr.bf16.mxu0 %v4765
    %5779 = vmatpush2.bf16.msra.mxu0 %v4764
    %5780 = vmatprep.subr.bf16.mxu0 %v4758
    %5781 = vmatpush2.bf16.msra.mxu0 %v4757
    %5782 = vmatprep.subr.bf16.mxu0 %v4751
    %5783 = vmatpush2.bf16.msra.mxu0 %v4750
    %5784 = vmatprep.mubr.bf16.mxu0 %v2728
    %5785 = vmatmul.mubr.bf16.gmra.mxu0 %v2727
    %v5786 = vpop.f32.mrf.mxu0
    %v5787 = vadd.f32 %v3260, %v5786
    %v5788 = vpop.f32.mrf.mxu0
    %v5789 = vadd.f32 %v3264, %v5788
    %v5790 = vpop.f32.mrf.mxu0
    %v5791 = vpop.f32.mrf.mxu0
    %5792 = vdwg.mxu0
    %5793 = vmatprep.subr.bf16.mxu0 %v4856
    %5794 = vmatpush1.bf16.msra.mxu0 %v4855
    %5795 = vmatprep.subr.bf16.mxu0 %v4849
    %5796 = vmatpush1.bf16.msra.mxu0 %v4848
    %5797 = vmatprep.subr.bf16.mxu0 %v4842
    %5798 = vmatpush1.bf16.msra.mxu0 %v4841
    %5799 = vmatprep.subr.bf16.mxu0 %v4835
    %5800 = vmatpush1.bf16.msra.mxu0 %v4834
    %5801 = vmatprep.subr.bf16.mxu0 %v4828
    %5802 = vmatpush1.bf16.msra.mxu0 %v4827
    %5803 = vmatprep.subr.bf16.mxu0 %v4821
    %5804 = vmatpush1.bf16.msra.mxu0 %v4820
    %5805 = vmatprep.subr.bf16.mxu0 %v4814
    %5806 = vmatpush1.bf16.msra.mxu0 %v4813
    %5807 = vmatprep.subr.bf16.mxu0 %v4807
    %5808 = vmatpush1.bf16.msra.mxu0 %v4806
    %5809 = vmatprep.subr.bf16.mxu0 %v4912
    %5810 = vmatpush2.bf16.msra.mxu0 %v4911
    %5811 = vmatprep.subr.bf16.mxu0 %v4905
    %5812 = vmatpush2.bf16.msra.mxu0 %v4904
    %5813 = vmatprep.subr.bf16.mxu0 %v4898
    %5814 = vmatpush2.bf16.msra.mxu0 %v4897
    %5815 = vmatprep.subr.bf16.mxu0 %v4891
    %5816 = vmatpush2.bf16.msra.mxu0 %v4890
    %5817 = vmatprep.subr.bf16.mxu0 %v4884
    %5818 = vmatpush2.bf16.msra.mxu0 %v4883
    %5819 = vmatprep.subr.bf16.mxu0 %v4877
    %5820 = vmatpush2.bf16.msra.mxu0 %v4876
    %5821 = vmatprep.subr.bf16.mxu0 %v4870
    %5822 = vmatpush2.bf16.msra.mxu0 %v4869
    %5823 = vmatprep.subr.bf16.mxu0 %v4863
    %5824 = vmatpush2.bf16.msra.mxu0 %v4862
    %5825 = vmatprep.mubr.bf16.mxu0 %v2730
    %5826 = vmatmul.mubr.bf16.gmra.mxu0 %v2729
    %v5827 = vpop.f32.mrf.mxu0
    %v5828 = vadd.f32 %v5787, %v5827
    %v5829 = vpop.f32.mrf.mxu0
    %v5830 = vadd.f32 %v5789, %v5829
    %v5831 = vpop.f32.mrf.mxu0
    %v5832 = vpop.f32.mrf.mxu0
    %5833 = vdwg.mxu0
    %5834 = vmatprep.subr.bf16.mxu0 %v4968
    %5835 = vmatpush1.bf16.msra.mxu0 %v4967
    %5836 = vmatprep.subr.bf16.mxu0 %v4961
    %5837 = vmatpush1.bf16.msra.mxu0 %v4960
    %5838 = vmatprep.subr.bf16.mxu0 %v4954
    %5839 = vmatpush1.bf16.msra.mxu0 %v4953
    %5840 = vmatprep.subr.bf16.mxu0 %v4947
    %5841 = vmatpush1.bf16.msra.mxu0 %v4946
    %5842 = vmatprep.subr.bf16.mxu0 %v4940
    %5843 = vmatpush1.bf16.msra.mxu0 %v4939
    %5844 = vmatprep.subr.bf16.mxu0 %v4933
    %5845 = vmatpush1.bf16.msra.mxu0 %v4932
    %5846 = vmatprep.subr.bf16.mxu0 %v4926
    %5847 = vmatpush1.bf16.msra.mxu0 %v4925
    %5848 = vmatprep.subr.bf16.mxu0 %v4919
    %5849 = vmatpush1.bf16.msra.mxu0 %v4918
    %5850 = vmatprep.subr.bf16.mxu0 %v5024
    %5851 = vmatpush2.bf16.msra.mxu0 %v5023
    %5852 = vmatprep.subr.bf16.mxu0 %v5017
    %5853 = vmatpush2.bf16.msra.mxu0 %v5016
    %5854 = vmatprep.subr.bf16.mxu0 %v5010
    %5855 = vmatpush2.bf16.msra.mxu0 %v5009
    %5856 = vmatprep.subr.bf16.mxu0 %v5003
    %5857 = vmatpush2.bf16.msra.mxu0 %v5002
    %5858 = vmatprep.subr.bf16.mxu0 %v4996
    %5859 = vmatpush2.bf16.msra.mxu0 %v4995
    %5860 = vmatprep.subr.bf16.mxu0 %v4989
    %5861 = vmatpush2.bf16.msra.mxu0 %v4988
    %5862 = vmatprep.subr.bf16.mxu0 %v4982
    %5863 = vmatpush2.bf16.msra.mxu0 %v4981
    %5864 = vmatprep.subr.bf16.mxu0 %v4975
    %5865 = vmatpush2.bf16.msra.mxu0 %v4974
    %5866 = vmatprep.mubr.bf16.mxu0 %v2732
    %5867 = vmatmul.mubr.bf16.gmra.mxu0 %v2731
    %v5868 = vpop.f32.mrf.mxu0
    %v5869 = vadd.f32 %v5828, %v5868
    %v5870 = vpop.f32.mrf.mxu0
    %v5871 = vadd.f32 %v5830, %v5870
    %v5872 = vpop.f32.mrf.mxu0
    %v5873 = vpop.f32.mrf.mxu0
    %5874 = vdwg.mxu0
    %5875 = vmatprep.subr.bf16.mxu0 %v5080
    %5876 = vmatpush1.bf16.msra.mxu0 %v5079
    %5877 = vmatprep.subr.bf16.mxu0 %v5073
    %5878 = vmatpush1.bf16.msra.mxu0 %v5072
    %5879 = vmatprep.subr.bf16.mxu0 %v5066
    %5880 = vmatpush1.bf16.msra.mxu0 %v5065
    %5881 = vmatprep.subr.bf16.mxu0 %v5059
    %5882 = vmatpush1.bf16.msra.mxu0 %v5058
    %5883 = vmatprep.subr.bf16.mxu0 %v5052
    %5884 = vmatpush1.bf16.msra.mxu0 %v5051
    %5885 = vmatprep.subr.bf16.mxu0 %v5045
    %5886 = vmatpush1.bf16.msra.mxu0 %v5044
    %5887 = vmatprep.subr.bf16.mxu0 %v5038
    %5888 = vmatpush1.bf16.msra.mxu0 %v5037
    %5889 = vmatprep.subr.bf16.mxu0 %v5031
    %5890 = vmatpush1.bf16.msra.mxu0 %v5030
    %5891 = vmatprep.subr.bf16.mxu0 %v5136
    %5892 = vmatpush2.bf16.msra.mxu0 %v5135
    %5893 = vmatprep.subr.bf16.mxu0 %v5129
    %5894 = vmatpush2.bf16.msra.mxu0 %v5128
    %5895 = vmatprep.subr.bf16.mxu0 %v5122
    %5896 = vmatpush2.bf16.msra.mxu0 %v5121
    %5897 = vmatprep.subr.bf16.mxu0 %v5115
    %5898 = vmatpush2.bf16.msra.mxu0 %v5114
    %5899 = vmatprep.subr.bf16.mxu0 %v5108
    %5900 = vmatpush2.bf16.msra.mxu0 %v5107
    %5901 = vmatprep.subr.bf16.mxu0 %v5101
    %5902 = vmatpush2.bf16.msra.mxu0 %v5100
    %5903 = vmatprep.subr.bf16.mxu0 %v5094
    %5904 = vmatpush2.bf16.msra.mxu0 %v5093
    %5905 = vmatprep.subr.bf16.mxu0 %v5087
    %5906 = vmatpush2.bf16.msra.mxu0 %v5086
    %5907 = vmatprep.mubr.bf16.mxu0 %v2734
    %5908 = vmatmul.mubr.bf16.gmra.mxu0 %v2733
    %v5909 = vpop.f32.mrf.mxu0
    %v5910 = vadd.f32 %v5869, %v5909
    %v5911 = vpop.f32.mrf.mxu0
    %v5912 = vadd.f32 %v5871, %v5911
    %v5913 = vpop.f32.mrf.mxu0
    %v5914 = vpop.f32.mrf.mxu0
    %5915 = vdwg.mxu0
    %5916 = vmatprep.subr.bf16.mxu0 %v4746
    %5917 = vmatpush1.bf16.msra.mxu0 %v4745
    %5918 = vmatprep.subr.bf16.mxu0 %v4739
    %5919 = vmatpush1.bf16.msra.mxu0 %v4738
    %5920 = vmatprep.subr.bf16.mxu0 %v4732
    %5921 = vmatpush1.bf16.msra.mxu0 %v4731
    %5922 = vmatprep.subr.bf16.mxu0 %v4725
    %5923 = vmatpush1.bf16.msra.mxu0 %v4724
    %5924 = vmatprep.subr.bf16.mxu0 %v4718
    %5925 = vmatpush1.bf16.msra.mxu0 %v4717
    %5926 = vmatprep.subr.bf16.mxu0 %v4711
    %5927 = vmatpush1.bf16.msra.mxu0 %v4710
    %5928 = vmatprep.subr.bf16.mxu0 %v4704
    %5929 = vmatpush1.bf16.msra.mxu0 %v4703
    %5930 = vmatprep.subr.bf16.mxu0 %v4697
    %5931 = vmatpush1.bf16.msra.mxu0 %v4696
    %5932 = vmatprep.subr.bf16.mxu0 %v4802
    %5933 = vmatpush2.bf16.msra.mxu0 %v4801
    %5934 = vmatprep.subr.bf16.mxu0 %v4795
    %5935 = vmatpush2.bf16.msra.mxu0 %v4794
    %5936 = vmatprep.subr.bf16.mxu0 %v4788
    %5937 = vmatpush2.bf16.msra.mxu0 %v4787
    %5938 = vmatprep.subr.bf16.mxu0 %v4781
    %5939 = vmatpush2.bf16.msra.mxu0 %v4780
    %5940 = vmatprep.subr.bf16.mxu0 %v4774
    %5941 = vmatpush2.bf16.msra.mxu0 %v4773
    %5942 = vmatprep.subr.bf16.mxu0 %v4767
    %5943 = vmatpush2.bf16.msra.mxu0 %v4766
    %5944 = vmatprep.subr.bf16.mxu0 %v4760
    %5945 = vmatpush2.bf16.msra.mxu0 %v4759
    %5946 = vmatprep.subr.bf16.mxu0 %v4753
    %5947 = vmatpush2.bf16.msra.mxu0 %v4752
    %5948 = vmatprep.mubr.bf16.mxu0 %v2728
    %5949 = vmatmul.mubr.bf16.gmra.mxu0 %v2727
    %v5950 = vpop.f32.mrf.mxu0
    %v5951 = vadd.f32 %v3268, %v5950
    %v5952 = vpop.f32.mrf.mxu0
    %v5953 = vadd.f32 %v3272, %v5952
    %v5954 = vpop.f32.mrf.mxu0
    %v5955 = vpop.f32.mrf.mxu0
    %5956 = vdwg.mxu0
    %5957 = vmatprep.subr.bf16.mxu0 %v4858
    %5958 = vmatpush1.bf16.msra.mxu0 %v4857
    %5959 = vmatprep.subr.bf16.mxu0 %v4851
    %5960 = vmatpush1.bf16.msra.mxu0 %v4850
    %5961 = vmatprep.subr.bf16.mxu0 %v4844
    %5962 = vmatpush1.bf16.msra.mxu0 %v4843
    %5963 = vmatprep.subr.bf16.mxu0 %v4837
    %5964 = vmatpush1.bf16.msra.mxu0 %v4836
    %5965 = vmatprep.subr.bf16.mxu0 %v4830
    %5966 = vmatpush1.bf16.msra.mxu0 %v4829
    %5967 = vmatprep.subr.bf16.mxu0 %v4823
    %5968 = vmatpush1.bf16.msra.mxu0 %v4822
    %5969 = vmatprep.subr.bf16.mxu0 %v4816
    %5970 = vmatpush1.bf16.msra.mxu0 %v4815
    %5971 = vmatprep.subr.bf16.mxu0 %v4809
    %5972 = vmatpush1.bf16.msra.mxu0 %v4808
    %5973 = vmatprep.subr.bf16.mxu0 %v4914
    %5974 = vmatpush2.bf16.msra.mxu0 %v4913
    %5975 = vmatprep.subr.bf16.mxu0 %v4907
    %5976 = vmatpush2.bf16.msra.mxu0 %v4906
    %5977 = vmatprep.subr.bf16.mxu0 %v4900
    %5978 = vmatpush2.bf16.msra.mxu0 %v4899
    %5979 = vmatprep.subr.bf16.mxu0 %v4893
    %5980 = vmatpush2.bf16.msra.mxu0 %v4892
    %5981 = vmatprep.subr.bf16.mxu0 %v4886
    %5982 = vmatpush2.bf16.msra.mxu0 %v4885
    %5983 = vmatprep.subr.bf16.mxu0 %v4879
    %5984 = vmatpush2.bf16.msra.mxu0 %v4878
    %5985 = vmatprep.subr.bf16.mxu0 %v4872
    %5986 = vmatpush2.bf16.msra.mxu0 %v4871
    %5987 = vmatprep.subr.bf16.mxu0 %v4865
    %5988 = vmatpush2.bf16.msra.mxu0 %v4864
    %5989 = vmatprep.mubr.bf16.mxu0 %v2730
    %5990 = vmatmul.mubr.bf16.gmra.mxu0 %v2729
    %v5991 = vpop.f32.mrf.mxu0
    %v5992 = vadd.f32 %v5951, %v5991
    %v5993 = vpop.f32.mrf.mxu0
    %v5994 = vadd.f32 %v5953, %v5993
    %v5995 = vpop.f32.mrf.mxu0
    %v5996 = vpop.f32.mrf.mxu0
    %5997 = vdwg.mxu0
    %5998 = vmatprep.subr.bf16.mxu0 %v4970
    %5999 = vmatpush1.bf16.msra.mxu0 %v4969
    %6000 = vmatprep.subr.bf16.mxu0 %v4963
    %6001 = vmatpush1.bf16.msra.mxu0 %v4962
    %6002 = vmatprep.subr.bf16.mxu0 %v4956
    %6003 = vmatpush1.bf16.msra.mxu0 %v4955
    %6004 = vmatprep.subr.bf16.mxu0 %v4949
    %6005 = vmatpush1.bf16.msra.mxu0 %v4948
    %6006 = vmatprep.subr.bf16.mxu0 %v4942
    %6007 = vmatpush1.bf16.msra.mxu0 %v4941
    %6008 = vmatprep.subr.bf16.mxu0 %v4935
    %6009 = vmatpush1.bf16.msra.mxu0 %v4934
    %6010 = vmatprep.subr.bf16.mxu0 %v4928
    %6011 = vmatpush1.bf16.msra.mxu0 %v4927
    %6012 = vmatprep.subr.bf16.mxu0 %v4921
    %6013 = vmatpush1.bf16.msra.mxu0 %v4920
    %6014 = vmatprep.subr.bf16.mxu0 %v5026
    %6015 = vmatpush2.bf16.msra.mxu0 %v5025
    %6016 = vmatprep.subr.bf16.mxu0 %v5019
    %6017 = vmatpush2.bf16.msra.mxu0 %v5018
    %6018 = vmatprep.subr.bf16.mxu0 %v5012
    %6019 = vmatpush2.bf16.msra.mxu0 %v5011
    %6020 = vmatprep.subr.bf16.mxu0 %v5005
    %6021 = vmatpush2.bf16.msra.mxu0 %v5004
    %6022 = vmatprep.subr.bf16.mxu0 %v4998
    %6023 = vmatpush2.bf16.msra.mxu0 %v4997
    %6024 = vmatprep.subr.bf16.mxu0 %v4991
    %6025 = vmatpush2.bf16.msra.mxu0 %v4990
    %6026 = vmatprep.subr.bf16.mxu0 %v4984
    %6027 = vmatpush2.bf16.msra.mxu0 %v4983
    %6028 = vmatprep.subr.bf16.mxu0 %v4977
    %6029 = vmatpush2.bf16.msra.mxu0 %v4976
    %6030 = vmatprep.mubr.bf16.mxu0 %v2732
    %6031 = vmatmul.mubr.bf16.gmra.mxu0 %v2731
    %v6032 = vpop.f32.mrf.mxu0
    %v6033 = vadd.f32 %v5992, %v6032
    %v6034 = vpop.f32.mrf.mxu0
    %v6035 = vadd.f32 %v5994, %v6034
    %v6036 = vpop.f32.mrf.mxu0
    %v6037 = vpop.f32.mrf.mxu0
    %6038 = vdwg.mxu0
    %6039 = vmatprep.subr.bf16.mxu0 %v5082
    %6040 = vmatpush1.bf16.msra.mxu0 %v5081
    %6041 = vmatprep.subr.bf16.mxu0 %v5075
    %6042 = vmatpush1.bf16.msra.mxu0 %v5074
    %6043 = vmatprep.subr.bf16.mxu0 %v5068
    %6044 = vmatpush1.bf16.msra.mxu0 %v5067
    %6045 = vmatprep.subr.bf16.mxu0 %v5061
    %6046 = vmatpush1.bf16.msra.mxu0 %v5060
    %6047 = vmatprep.subr.bf16.mxu0 %v5054
    %6048 = vmatpush1.bf16.msra.mxu0 %v5053
    %6049 = vmatprep.subr.bf16.mxu0 %v5047
    %6050 = vmatpush1.bf16.msra.mxu0 %v5046
    %6051 = vmatprep.subr.bf16.mxu0 %v5040
    %6052 = vmatpush1.bf16.msra.mxu0 %v5039
    %6053 = vmatprep.subr.bf16.mxu0 %v5033
    %6054 = vmatpush1.bf16.msra.mxu0 %v5032
    %6055 = vmatprep.subr.bf16.mxu0 %v5138
    %6056 = vmatpush2.bf16.msra.mxu0 %v5137
    %6057 = vmatprep.subr.bf16.mxu0 %v5131
    %6058 = vmatpush2.bf16.msra.mxu0 %v5130
    %6059 = vmatprep.subr.bf16.mxu0 %v5124
    %6060 = vmatpush2.bf16.msra.mxu0 %v5123
    %6061 = vmatprep.subr.bf16.mxu0 %v5117
    %6062 = vmatpush2.bf16.msra.mxu0 %v5116
    %6063 = vmatprep.subr.bf16.mxu0 %v5110
    %6064 = vmatpush2.bf16.msra.mxu0 %v5109
    %6065 = vmatprep.subr.bf16.mxu0 %v5103
    %6066 = vmatpush2.bf16.msra.mxu0 %v5102
    %6067 = vmatprep.subr.bf16.mxu0 %v5096
    %6068 = vmatpush2.bf16.msra.mxu0 %v5095
    %6069 = vmatprep.subr.bf16.mxu0 %v5089
    %6070 = vmatpush2.bf16.msra.mxu0 %v5088
    %6071 = vmatprep.mubr.bf16.mxu0 %v2734
    %6072 = vmatmul.mubr.bf16.gmra.mxu0 %v2733
    %v6073 = vpop.f32.mrf.mxu0
    %v6074 = vadd.f32 %v6033, %v6073
    %v6075 = vpop.f32.mrf.mxu0
    %v6076 = vadd.f32 %v6035, %v6075
    %v6077 = vpop.f32.mrf.mxu0
    %v6078 = vpop.f32.mrf.mxu0
    %6079 = vdwg.mxu0
    %6080 = vmatprep.subr.bf16.mxu0 0
    %6081 = vmatpush1.bf16.msra.mxu0 %v4747
    %6082 = vmatprep.subr.bf16.mxu0 0
    %6083 = vmatpush1.bf16.msra.mxu0 %v4740
    %6084 = vmatprep.subr.bf16.mxu0 0
    %6085 = vmatpush1.bf16.msra.mxu0 %v4733
    %6086 = vmatprep.subr.bf16.mxu0 0
    %6087 = vmatpush1.bf16.msra.mxu0 %v4726
    %6088 = vmatprep.subr.bf16.mxu0 0
    %6089 = vmatpush1.bf16.msra.mxu0 %v4719
    %6090 = vmatprep.subr.bf16.mxu0 0
    %6091 = vmatpush1.bf16.msra.mxu0 %v4712
    %6092 = vmatprep.subr.bf16.mxu0 0
    %6093 = vmatpush1.bf16.msra.mxu0 %v4705
    %6094 = vmatprep.subr.bf16.mxu0 0
    %6095 = vmatpush1.bf16.msra.mxu0 %v4698
    %6096 = vmatprep.subr.bf16.mxu0 0
    %6097 = vmatpush2.bf16.msra.mxu0 %v4803
    %6098 = vmatprep.subr.bf16.mxu0 0
    %6099 = vmatpush2.bf16.msra.mxu0 %v4796
    %6100 = vmatprep.subr.bf16.mxu0 0
    %6101 = vmatpush2.bf16.msra.mxu0 %v4789
    %6102 = vmatprep.subr.bf16.mxu0 0
    %6103 = vmatpush2.bf16.msra.mxu0 %v4782
    %6104 = vmatprep.subr.bf16.mxu0 0
    %6105 = vmatpush2.bf16.msra.mxu0 %v4775
    %6106 = vmatprep.subr.bf16.mxu0 0
    %6107 = vmatpush2.bf16.msra.mxu0 %v4768
    %6108 = vmatprep.subr.bf16.mxu0 0
    %6109 = vmatpush2.bf16.msra.mxu0 %v4761
    %6110 = vmatprep.subr.bf16.mxu0 0
    %6111 = vmatpush2.bf16.msra.mxu0 %v4754
    %6112 = vmatprep.mubr.bf16.mxu0 %v2728
    %6113 = vmatmul.mubr.bf16.gmra.mxu0 %v2727
    %v6114 = vpop.f32.mrf.mxu0
    %v6115 = vadd.f32 %v3276, %v6114
    %v6116 = vpop.f32.mrf.mxu0
    %v6117 = vpop.f32.mrf.mxu0
    %v6118 = vpop.f32.mrf.mxu0
    %6119 = vdwg.mxu0
    %6120 = vmatprep.subr.bf16.mxu0 0
    %6121 = vmatpush1.bf16.msra.mxu0 %v4859
    %6122 = vmatprep.subr.bf16.mxu0 0
    %6123 = vmatpush1.bf16.msra.mxu0 %v4852
    %6124 = vmatprep.subr.bf16.mxu0 0
    %6125 = vmatpush1.bf16.msra.mxu0 %v4845
    %6126 = vmatprep.subr.bf16.mxu0 0
    %6127 = vmatpush1.bf16.msra.mxu0 %v4838
    %6128 = vmatprep.subr.bf16.mxu0 0
    %6129 = vmatpush1.bf16.msra.mxu0 %v4831
    %6130 = vmatprep.subr.bf16.mxu0 0
    %6131 = vmatpush1.bf16.msra.mxu0 %v4824
    %6132 = vmatprep.subr.bf16.mxu0 0
    %6133 = vmatpush1.bf16.msra.mxu0 %v4817
    %6134 = vmatprep.subr.bf16.mxu0 0
    %6135 = vmatpush1.bf16.msra.mxu0 %v4810
    %6136 = vmatprep.subr.bf16.mxu0 0
    %6137 = vmatpush2.bf16.msra.mxu0 %v4915
    %6138 = vmatprep.subr.bf16.mxu0 0
    %6139 = vmatpush2.bf16.msra.mxu0 %v4908
    %6140 = vmatprep.subr.bf16.mxu0 0
    %6141 = vmatpush2.bf16.msra.mxu0 %v4901
    %6142 = vmatprep.subr.bf16.mxu0 0
    %6143 = vmatpush2.bf16.msra.mxu0 %v4894
    %6144 = vmatprep.subr.bf16.mxu0 0
    %6145 = vmatpush2.bf16.msra.mxu0 %v4887
    %6146 = vmatprep.subr.bf16.mxu0 0
    %6147 = vmatpush2.bf16.msra.mxu0 %v4880
    %6148 = vmatprep.subr.bf16.mxu0 0
    %6149 = vmatpush2.bf16.msra.mxu0 %v4873
    %6150 = vmatprep.subr.bf16.mxu0 0
    %6151 = vmatpush2.bf16.msra.mxu0 %v4866
    %6152 = vmatprep.mubr.bf16.mxu0 %v2730
    %6153 = vmatmul.mubr.bf16.gmra.mxu0 %v2729
    %v6154 = vpop.f32.mrf.mxu0
    %v6155 = vadd.f32 %v6115, %v6154
    %v6156 = vpop.f32.mrf.mxu0
    %v6157 = vpop.f32.mrf.mxu0
    %v6158 = vpop.f32.mrf.mxu0
    %6159 = vdwg.mxu0
    %6160 = vmatprep.subr.bf16.mxu0 0
    %6161 = vmatpush1.bf16.msra.mxu0 %v4971
    %6162 = vmatprep.subr.bf16.mxu0 0
    %6163 = vmatpush1.bf16.msra.mxu0 %v4964
    %6164 = vmatprep.subr.bf16.mxu0 0
    %6165 = vmatpush1.bf16.msra.mxu0 %v4957
    %6166 = vmatprep.subr.bf16.mxu0 0
    %6167 = vmatpush1.bf16.msra.mxu0 %v4950
    %6168 = vmatprep.subr.bf16.mxu0 0
    %6169 = vmatpush1.bf16.msra.mxu0 %v4943
    %6170 = vmatprep.subr.bf16.mxu0 0
    %6171 = vmatpush1.bf16.msra.mxu0 %v4936
    %6172 = vmatprep.subr.bf16.mxu0 0
    %6173 = vmatpush1.bf16.msra.mxu0 %v4929
    %6174 = vmatprep.subr.bf16.mxu0 0
    %6175 = vmatpush1.bf16.msra.mxu0 %v4922
    %6176 = vmatprep.subr.bf16.mxu0 0
    %6177 = vmatpush2.bf16.msra.mxu0 %v5027
    %6178 = vmatprep.subr.bf16.mxu0 0
    %6179 = vmatpush2.bf16.msra.mxu0 %v5020
    %6180 = vmatprep.subr.bf16.mxu0 0
    %6181 = vmatpush2.bf16.msra.mxu0 %v5013
    %6182 = vmatprep.subr.bf16.mxu0 0
    %6183 = vmatpush2.bf16.msra.mxu0 %v5006
    %6184 = vmatprep.subr.bf16.mxu0 0
    %6185 = vmatpush2.bf16.msra.mxu0 %v4999
    %6186 = vmatprep.subr.bf16.mxu0 0
    %6187 = vmatpush2.bf16.msra.mxu0 %v4992
    %6188 = vmatprep.subr.bf16.mxu0 0
    %6189 = vmatpush2.bf16.msra.mxu0 %v4985
    %6190 = vmatprep.subr.bf16.mxu0 0
    %6191 = vmatpush2.bf16.msra.mxu0 %v4978
    %6192 = vmatprep.mubr.bf16.mxu0 %v2732
    %6193 = vmatmul.mubr.bf16.gmra.mxu0 %v2731
    %v6194 = vpop.f32.mrf.mxu0
    %v6195 = vadd.f32 %v6155, %v6194
    %v6196 = vpop.f32.mrf.mxu0
    %v6197 = vpop.f32.mrf.mxu0
    %v6198 = vpop.f32.mrf.mxu0
    %6199 = vdwg.mxu0
    %6200 = vmatprep.subr.bf16.mxu0 0
    %6201 = vmatpush1.bf16.msra.mxu0 %v5083
    %6202 = vmatprep.subr.bf16.mxu0 0
    %6203 = vmatpush1.bf16.msra.mxu0 %v5076
    %6204 = vmatprep.subr.bf16.mxu0 0
    %6205 = vmatpush1.bf16.msra.mxu0 %v5069
    %6206 = vmatprep.subr.bf16.mxu0 0
    %6207 = vmatpush1.bf16.msra.mxu0 %v5062
    %6208 = vmatprep.subr.bf16.mxu0 0
    %6209 = vmatpush1.bf16.msra.mxu0 %v5055
    %6210 = vmatprep.subr.bf16.mxu0 0
    %6211 = vmatpush1.bf16.msra.mxu0 %v5048
    %6212 = vmatprep.subr.bf16.mxu0 0
    %6213 = vmatpush1.bf16.msra.mxu0 %v5041
    %6214 = vmatprep.subr.bf16.mxu0 0
    %6215 = vmatpush1.bf16.msra.mxu0 %v5034
    %6216 = vmatprep.subr.bf16.mxu0 0
    %6217 = vmatpush2.bf16.msra.mxu0 %v5139
    %6218 = vmatprep.subr.bf16.mxu0 0
    %6219 = vmatpush2.bf16.msra.mxu0 %v5132
    %6220 = vmatprep.subr.bf16.mxu0 0
    %6221 = vmatpush2.bf16.msra.mxu0 %v5125
    %6222 = vmatprep.subr.bf16.mxu0 0
    %6223 = vmatpush2.bf16.msra.mxu0 %v5118
    %6224 = vmatprep.subr.bf16.mxu0 0
    %6225 = vmatpush2.bf16.msra.mxu0 %v5111
    %6226 = vmatprep.subr.bf16.mxu0 0
    %6227 = vmatpush2.bf16.msra.mxu0 %v5104
    %6228 = vmatprep.subr.bf16.mxu0 0
    %6229 = vmatpush2.bf16.msra.mxu0 %v5097
    %6230 = vmatprep.subr.bf16.mxu0 0
    %6231 = vmatpush2.bf16.msra.mxu0 %v5090
    %6232 = vmatprep.mubr.bf16.mxu0 %v2734
    %6233 = vmatmul.mubr.bf16.gmra.mxu0 %v2733
    %v6234 = vpop.f32.mrf.mxu0
    %v6235 = vadd.f32 %v6195, %v6234
    %v6236 = vpop.f32.mrf.mxu0
    %v6237 = vpop.f32.mrf.mxu0
    %v6238 = vpop.f32.mrf.mxu0
    %6239 = vdwg.mxu0
    %v6240 = vtanh.pop %v5746
    %v6241 = vtanh.pop %v5748
    %v6242 = vtanh.pop %v5910
    %v6243 = vtanh.pop %v5912
    %v6244 = vtanh.pop %v6074
    %v6245 = vtanh.pop %v6076
    %v6246 = vtanh.pop %v6235
    %6247 = vst [vmem:[%s9] sm:$0xff] %v6240
    %6248 = vst [vmem:[%s9 + $0x8] sm:$0xff] %v6241
    %6249 = vst [vmem:[%s9 + $0x10] sm:$0xff] %v6242
    %6250 = vst [vmem:[%s9 + $0x18] sm:$0xff] %v6243
    %6251 = vst [vmem:[%s9 + $0x20] sm:$0xff] %v6244
    %6252 = vst [vmem:[%s9 + $0x28] sm:$0xff] %v6245
    %6253 = vst [vmem:[%s9 + $0x30] sm:$0xff] %v6246
    // Predicated region
    $region70: #{generator_forward.1} parent=1 // pred_check
      _
    $region71: #{generator_forward.1} parent=1 // pred_check_branch
      %6255 = sbr.rel (0) target = $region73
    $region72: #{generator_forward.1} parent=1 // pred_region
      _
    $region73: #{generator_forward.1} parent=1 // pred_fallthru
      _
    // Predicated region
    $region74: #{generator_forward.1} parent=1 // pred_check
      _
    $region75: #{generator_forward.1} parent=1 // pred_check_branch
      %6257 = sbr.rel (0) target = $region77
    $region76: #{generator_forward.1} parent=1 // pred_region
      _
    $region77: #{generator_forward.1} parent=1 // pred_fallthru
      _
    %6258 = vsyncpa [#allocation3], 1
    %6259 = vsyncpa [#allocation5], 1
    %6260 = vsyncpa [#allocation8], 1
    %6261 = vsyncpa [#allocation11], 1
    %6262 = vsyncpa [#allocation14], 1

</llo_original>
